<compile_context>
chip_gen: v7x
topology: tpu7x:2x2x1
jax: 0.10.0
libtpu: 0.0.40
codegen_flags: <defaults>
</compile_context>

<pallas_src>
import functools

import jax
import jax.numpy as jnp
from jax import lax
from jax.experimental import pallas as pl
from jax.experimental.pallas import tpu as pltpu


# 48 MiB scoped VMEM: > v5e (16 MiB) / v6e (32 MiB) defaults so ViT-B weights
# + a (rt, 4W) f32 intermediate fit, and safely < v7x's 64 MiB physical VMEM.
VMEM_LIMIT_BYTES = 48 * 1024 * 1024


def _default_row_tile():
    # 512-row tiles reach ~85% of HBM roofline on v5e/v6e (128 MiB VMEM);
    # keep 256 on v7x (64 MiB VMEM) or when the query fails.
    try:
        if pltpu.get_tpu_info().vmem_capacity_bytes >= 100 * 1024 * 1024:
            return 512
    except Exception:
        pass
    return 256


DEFAULT_ROW_TILE = _default_row_tile()


def _row_tile(m, target=None):
    target = DEFAULT_ROW_TILE if target is None else target
    # Full block for small inputs (always legal); fixed row tile otherwise
    # (multiple of 8; partial last block handled by Pallas).
    return m if m <= target else target


def _probe_buffered_support():
    # Single-buffering constant-index weight blocks halves resident-weight
    # VMEM (they never change, so double-buffering only burns memory).
    # Probe once so older JAX versions fall back to default buffering.
    try:
        spec = pl.BlockSpec((8, 128), lambda i: (0, 0),
                            pipeline_mode=pl.Buffered(1))

        def _probe_kernel(x_ref, o_ref):
            o_ref[...] = x_ref[...] * 2.0

        out = pl.pallas_call(
            _probe_kernel,
            grid=(2,),
            out_shape=jax.ShapeDtypeStruct((16, 128), jnp.float32),
            in_specs=[spec],
            out_specs=pl.BlockSpec((8, 128), lambda i: (i, 0)),
        )(jnp.ones((8, 128), jnp.float32))
        return bool(jnp.all(jax.block_until_ready(out) == 2.0))
    except Exception:
        return False


_SINGLE_BUFFER_WEIGHTS = _probe_buffered_support()


def _full_spec(shape):
    # Full-array block with constant index_map (activations / outputs).
    return pl.BlockSpec(shape, lambda *_: (0,) * len(shape))


def _const_spec(shape):
    # Weights / frozen tensors: fetched once, resident in VMEM for the whole
    # grid; single-buffered when the installed JAX supports pipeline_mode.
    if _SINGLE_BUFFER_WEIGHTS:
        return pl.BlockSpec(shape, lambda *_: (0,) * len(shape),
                            pipeline_mode=pl.Buffered(1))
    return pl.BlockSpec(shape, lambda *_: (0,) * len(shape))


def _ln_f32(x, g, b, eps=1e-5):
    mean = jnp.mean(x, axis=-1, keepdims=True)
    var = jnp.mean(jnp.square(x - mean), axis=-1, keepdims=True)
    return (x - mean) * lax.rsqrt(var + eps) * g + b


# ------------------------------ Pallas kernels ------------------------------

def _patch_embed_kernel(x_ref, w_ref, o_ref):
    # bias-free patch-embed matmul; both operands arrive bf16, f32 accumulate.
    o_ref[...] = jnp.dot(x_ref[...], w_ref[...],
                         preferred_element_type=jnp.float32)


def patch_embed(patches_bf16, w_bf16):
    M, K = patches_bf16.shape
    _, N = w_bf16.shape
    rt = _row_tile(M)
    return pl.pallas_call(
        _patch_embed_kernel,
        grid=(pl.cdiv(M, rt),),
        out_shape=jax.ShapeDtypeStruct((M, N), jnp.float32),
        in_specs=[pl.BlockSpec((rt, K), lambda i: (i, 0)),
                  _const_spec((K, N))],
        out_specs=pl.BlockSpec((rt, N), lambda i: (i, 0)),
        compiler_params=pltpu.CompilerParams(
            dimension_semantics=("parallel",),
            vmem_limit_bytes=VMEM_LIMIT_BYTES),
    )(patches_bf16, w_bf16)


def _pos_ln_kernel(x_ref, pos_ref, g_ref, b_ref, o_ref):
    x = x_ref[...] + pos_ref[...][None, :, :]
    o_ref[...] = _ln_f32(x, g_ref[...], b_ref[...])


def add_pos_ln_pre(x, pos, g, b):
    B, S, W = x.shape
    bt = min(B, 8)  # batch tile (>1) amortizes per-grid-step overhead
    return pl.pallas_call(
        _pos_ln_kernel,
        grid=(pl.cdiv(B, bt),),
        out_shape=jax.ShapeDtypeStruct((B, S, W), jnp.float32),
        in_specs=[pl.BlockSpec((bt, S, W), lambda i: (i, 0, 0)),
                  _const_spec((S, W)),
                  _const_spec((1, W)),
                  _const_spec((1, W))],
        out_specs=pl.BlockSpec((bt, S, W), lambda i: (i, 0, 0)),
        compiler_params=pltpu.CompilerParams(
            dimension_semantics=("parallel",),
            vmem_limit_bytes=VMEM_LIMIT_BYTES),
    )(x, pos, g.reshape(1, W), b.reshape(1, W))


def _layer_kernel(x_ref, ln1_g_ref, ln1_b_ref, in_w_ref, in_b_ref,
                  out_w_ref, out_b_ref, ln2_g_ref, ln2_b_ref,
                  fc_w_ref, fc_b_ref, pj_w_ref, pj_b_ref, o_ref, *, heads):
    # Whole residual-attention block fused in one kernel invocation so the
    # (S, W) residual stream never leaves VMEM between the two halves.
    x = x_ref[...]                                        # (S, W) f32
    W = x.shape[-1]
    dh = W // heads

    # ---- attention branch: ln1 -> QKV -> per-head softmax -> out_proj ----
    h = _ln_f32(x, ln1_g_ref[...], ln1_b_ref[...])
    qkv = jnp.dot(h.astype(jnp.bfloat16), in_w_ref[...],
                  preferred_element_type=jnp.float32) + in_b_ref[...]
    # 1/sqrt(dh) is pre-folded into the Q columns of in_proj_w / in_proj_b.
    # NOTE: for CLIP ViT (S <= ~260) the (S, S) per-head scores fit easily in
    # VMEM, so a flash/online-softmax loop is not needed here.
    # NOTE: with dh < 128 the per-head column slices are lane-misaligned; a
    # head-grouped or pre-permuted in_proj layout would remove the resulting
    # relayout copies at real ViT sizes.
    ctxs = []
    for hh in range(heads):                               # static unroll
        q = qkv[:, hh * dh:(hh + 1) * dh].astype(jnp.bfloat16)
        k = qkv[:, W + hh * dh:W + (hh + 1) * dh].astype(jnp.bfloat16)
        v = qkv[:, 2 * W + hh * dh:2 * W + (hh + 1) * dh].astype(jnp.bfloat16)
        s = lax.dot_general(q, k, (((1,), (1,)), ((), ())),
                            preferred_element_type=jnp.float32)  # (S, S)
        m = jnp.max(s, axis=-1, keepdims=True)
        p = jnp.exp(s - m)
        p = p * pl.reciprocal(jnp.sum(p, axis=-1, keepdims=True), approx=True)
        ctxs.append(jnp.dot(p.astype(jnp.bfloat16), v,
                            preferred_element_type=jnp.float32))  # (S, dh)
    # Merge heads and run ONE full-depth (S,W)@(W,W) output projection.
    ctx = jnp.concatenate(ctxs, axis=-1).astype(jnp.bfloat16)      # (S, W)
    x = x + jnp.dot(ctx, out_w_ref[...],
                    preferred_element_type=jnp.float32) + out_b_ref[...]

    # ---- MLP branch: ln2 -> fc -> QuickGELU -> c_proj ----
    h = _ln_f32(x, ln2_g_ref[...], ln2_b_ref[...])
    h = jnp.dot(h.astype(jnp.bfloat16), fc_w_ref[...],
                preferred_element_type=jnp.float32) + fc_b_ref[...]
    h = h * jax.nn.sigmoid(1.702 * h)                     # QuickGELU (f32)
    h = jnp.dot(h.astype(jnp.bfloat16), pj_w_ref[...],
                preferred_element_type=jnp.float32) + pj_b_ref[...]
    o_ref[...] = x + h


def fused_layer(x, p, heads):
    """One CLIP ResidualAttentionBlock on x: (B, S, W), a single kernel."""
    B, S, W = x.shape
    # NOTE: for very small B an extra head-group / query-tile grid axis would
    # give more pipeline steps to hide the per-layer weight DMA.
    return pl.pallas_call(
        functools.partial(_layer_kernel, heads=heads),
        grid=(B,),
        out_shape=jax.ShapeDtypeStruct((B, S, W), jnp.float32),
        in_specs=[pl.BlockSpec((None, S, W), lambda i: (i, 0, 0)),
                  _const_spec((1, W)), _const_spec((1, W)),
                  _const_spec((W, 3 * W)), _const_spec((1, 3 * W)),
                  _const_spec((W, W)), _const_spec((1, W)),
                  _const_spec((1, W)), _const_spec((1, W)),
                  _const_spec((W, 4 * W)), _const_spec((1, 4 * W)),
                  _const_spec((4 * W, W)), _const_spec((1, W))],
        out_specs=pl.BlockSpec((None, S, W), lambda i: (i, 0, 0)),
        compiler_params=pltpu.CompilerParams(
            dimension_semantics=("parallel",),
            vmem_limit_bytes=VMEM_LIMIT_BYTES),
    )(x,
      p["ln1_g"].reshape(1, W), p["ln1_b"].reshape(1, W),
      p["in_proj_w"], p["in_proj_b"].reshape(1, 3 * W),
      p["out_proj_w"], p["out_proj_b"].reshape(1, W),
      p["ln2_g"].reshape(1, W), p["ln2_b"].reshape(1, W),
      p["fc_w"], p["fc_b"].reshape(1, 4 * W),
      p["cproj_w"], p["cproj_b"].reshape(1, W))


def _head_kernel(x_ref, g_ref, b_ref, proj_ref, txt_ref, o_ref, *,
                 logit_scale, num_classes):
    # Fused: ln_post -> proj -> L2-normalize -> 100 * img @ text^T -> softmax
    # -> * logit_scale  (matches reference: scale applied AFTER softmax).
    x = x_ref[...]                                        # (B, W) f32
    h = _ln_f32(x, g_ref[...], b_ref[...])
    img = jnp.dot(h.astype(jnp.bfloat16), proj_ref[...],
                  preferred_element_type=jnp.float32)     # (B, E)
    # eps-guarded L2 normalize (PyTorch F.normalize clamps norm at 1e-12)
    img = img * lax.rsqrt(jnp.maximum(
        jnp.sum(img * img, axis=-1, keepdims=True), 1e-24))
    logits = 100.0 * lax.dot_general(
        img.astype(jnp.bfloat16), txt_ref[...],
        (((1,), (1,)), ((), ())), preferred_element_type=jnp.float32)
    # mask lane-padding classes so the softmax ignores them
    col = lax.broadcasted_iota(jnp.int32, logits.shape, 1)
    logits = jnp.where(col < num_classes, logits, -jnp.inf)
    m = jnp.max(logits, axis=-1, keepdims=True)
    e = jnp.exp(logits - m)
    probs = e * pl.reciprocal(jnp.sum(e, axis=-1, keepdims=True), approx=False)
    o_ref[...] = probs * logit_scale


def clip_head(cls_tok, g, b, proj_bf16, text_bf16, logit_scale):
    B, W = cls_tok.shape
    E = proj_bf16.shape[1]
    C = text_bf16.shape[0]
    c_pad = 128 * pl.cdiv(C, 128)           # lane-dense output / MXU N dim
    txt = jnp.zeros((c_pad, E), jnp.bfloat16).at[:C, :].set(text_bf16)
    probs = pl.pallas_call(
        functools.partial(_head_kernel, logit_scale=logit_scale,
                          num_classes=C),
        grid=(1,),
        out_shape=jax.ShapeDtypeStruct((B, c_pad), jnp.float32),
        in_specs=[_full_spec((B, W)), _const_spec((1, W)), _const_spec((1, W)),
                  _const_spec((W, E)), _const_spec((c_pad, E))],
        out_specs=_full_spec((B, c_pad)),
        compiler_params=pltpu.CompilerParams(
            vmem_limit_bytes=VMEM_LIMIT_BYTES),
    )(cls_tok, g.reshape(1, W), b.reshape(1, W), proj_bf16, txt)
    return probs[:, :C]


# -------------------------------- model glue ---------------------------------

def custom_encode_image(params, image, cfg):
    B = image.shape[0]
    P, W, heads = cfg["patch"], cfg["width"], cfg["heads"]
    gh, gw = image.shape[2] // P, image.shape[3] // P

    # patch extraction (glue); patches fed to the MXU as bf16 (halves DMA)
    x = image.reshape(B, 3, gh, P, gw, P)
    x = x.transpose(0, 2, 4, 1, 3, 5).reshape(B * gh * gw, 3 * P * P)
    x = patch_embed(x.astype(jnp.bfloat16), params["conv1_w"])
    x = x.reshape(B, gh * gw, W)

    cls = jnp.broadcast_to(params["class_embedding"][None, None, :], (B, 1, W))
    x = jnp.concatenate([cls, x], axis=1)                 # (B, S0, W)

    # fused positional-embedding add + ln_pre (batch-tiled)
    x = add_pos_ln_pre(x, params["positional_embedding"],
                       params["ln_pre_g"], params["ln_pre_b"])

    for idx, blk in enumerate(params["blocks"]):
        if idx == cfg["injection_layer"]:
            prompt = jnp.broadcast_to(
                params["deep_prompt"].transpose(1, 0, 2),
                (B, cfg["prompt_num"], W)).astype(jnp.float32)
            x = jnp.concatenate([x, prompt], axis=1)      # append deep prompts
        x = fused_layer(x, blk, heads)                    # ONE kernel / layer

    return x[:, 0, :]                                     # cls token (B, W)


def deep_prompt_clip_forward(params, image, cfg):
    cls_tok = custom_encode_image(params, image, cfg)
    return clip_head(cls_tok, params["ln_post_g"], params["ln_post_b"],
                     params["proj"], params["text_features"],
                     cfg["logit_scale"])


# ------------------------------ parameter init --------------------------------

def init_params(key, cfg):
    P, W, E, C = cfg["patch"], cfg["width"], cfg["embed_dim"], cfg["num_classes"]
    heads = cfg["heads"]
    S0 = cfg["num_patches"] + 1
    ks = iter(jax.random.split(key, 16 + 12 * cfg["layers"]))
    bf16 = jnp.bfloat16
    q_scale = 1.0 / float(W // heads) ** 0.5   # folded into Q in_proj columns

    def nrm(shape, scale=0.02, dtype=jnp.float32):
        return (scale * jax.random.normal(next(ks), shape, jnp.float32)).astype(dtype)

    params = {
        "conv1_w": nrm((3 * P * P, W), dtype=bf16),       # matmul weights: bf16
        "class_embedding": nrm((W,)),
        "positional_embedding": nrm((S0, W)),
        "ln_pre_g": jnp.ones((W,), jnp.float32),
        "ln_pre_b": jnp.zeros((W,), jnp.float32),
        "ln_post_g": jnp.ones((W,), jnp.float32),
        "ln_post_b": jnp.zeros((W,), jnp.float32),
        "proj": nrm((W, E), dtype=bf16),
        "deep_prompt": jax.random.normal(next(ks), (cfg["prompt_num"], 1, W),
                                         jnp.float32),
        "blocks": [],
    }
    for _ in range(cfg["layers"]):
        in_w = 0.02 * jax.random.normal(next(ks), (W, 3 * W), jnp.float32)
        in_b = jnp.zeros((3 * W,), jnp.float32)
        # fold 1/sqrt(dh) softmax scale into the Q slice (free at setup time)
        in_w = in_w.at[:, :W].multiply(q_scale)
        in_b = in_b.at[:W].multiply(q_scale)
        params["blocks"].append({
            "ln1_g": jnp.ones((W,), jnp.float32),
            "ln1_b": jnp.zeros((W,), jnp.float32),
            "in_proj_w": in_w.astype(bf16),
            "in_proj_b": in_b,
            "out_proj_w": nrm((W, W), dtype=bf16),
            "out_proj_b": jnp.zeros((W,), jnp.float32),
            "ln2_g": jnp.ones((W,), jnp.float32),
            "ln2_b": jnp.zeros((W,), jnp.float32),
            "fc_w": nrm((W, 4 * W), dtype=bf16),
            "fc_b": jnp.zeros((4 * W,), jnp.float32),
            "cproj_w": nrm((4 * W, W), dtype=bf16),
            "cproj_b": jnp.zeros((W,), jnp.float32),
        })
    # synthetic (already L2-normalized) frozen text features, stored bf16
    tf = jax.random.normal(next(ks), (C, E), jnp.float32)
    tf = tf / jnp.linalg.norm(tf, axis=-1, keepdims=True)
    params["text_features"] = tf.astype(bf16)
    return params
    # TODO(synk): real CLIP checkpoint loading / tokenizer / text encoder have
    # no Pallas equivalent; replaced by synthetic frozen text_features.


# ----------------------------------- main -------------------------------------

if __name__ == "__main__":
    cfg = dict(
        patch=8, width=32, heads=4, layers=2, embed_dim=16, num_classes=8,
        injection_layer=1, prompt_num=2,
        logit_scale=float(1.0 / 0.07),       # exp(log(1/0.07)), detached
    )
    B, H_img, W_img = 2, 16, 16
    cfg["num_patches"] = (H_img // cfg["patch"]) * (W_img // cfg["patch"])

    key = jax.random.PRNGKey(0)
    pkey, xkey = jax.random.split(key)
    params = init_params(pkey, cfg)
    image = jax.random.normal(xkey, (B, 3, H_img, W_img), jnp.float32)

    fwd = jax.jit(functools.partial(deep_prompt_clip_forward, cfg=cfg))
    out = jax.block_until_ready(fwd(params, image))

    assert out.shape == (B, cfg["num_classes"])
    assert bool(jnp.all(jnp.isfinite(out)))
    # softmax rows sum to 1 -> scaled rows sum to logit_scale
    assert bool(jnp.allclose(jnp.sum(out, axis=-1),
                             cfg["logit_scale"], rtol=1e-4))
    print("KERNEL_OK")
</pallas_src>

<mosaic_0001>
module attributes {stable_mosaic.version = 11 : i64} {
  func.func @_probe_kernel(%arg0: i32, %arg1: memref<8x128xf32, #tpu.memory_space<vmem>>, %arg2: memref<8x128xf32, #tpu.memory_space<vmem>>) attributes {dimension_semantics = [#tpu.dimension_semantics<arbitrary>], iteration_bounds = array<i64: 2>, scalar_prefetch = 0 : i64, scratch_operands = 0 : i64, tpu.core_type = #tpu.core_type<tc>, window_params = [{pipeline_mode = #tpu.pipeline_mode<synchronous>, transform_indices = @transform_0, window_bounds = array<i64: 8, 128>}, {transform_indices = @transform_1, window_bounds = array<i64: 8, 128>}]} {
    %c0 = arith.constant 0 : index
    %c0_0 = arith.constant 0 : index
    %0 = vector.load %arg1[%c0, %c0_0] : memref<8x128xf32, #tpu.memory_space<vmem>>, vector<8x128xf32>
    %cst = arith.constant 2.000000e+00 : f32
    %1 = vector.broadcast %cst : f32 to vector<8x128xf32>
    %2 = arith.mulf %0, %1 : vector<8x128xf32>
    %c0_1 = arith.constant 0 : index
    %c0_2 = arith.constant 0 : index
    %3 = vector.load %arg2[%c0_1, %c0_2] : memref<8x128xf32, #tpu.memory_space<vmem>>, vector<8x128xf32>
    tpu.vector_store %arg2[%c0_1, %c0_2], %2 {strides = array<i32>} : memref<8x128xf32, #tpu.memory_space<vmem>>, vector<8x128xf32>,
    return
  }
  func.func @transform_0(%arg0: i32) -> (i32, i32) {
    %c0_i32 = arith.constant 0 : i32
    %c0_i32_0 = arith.constant 0 : i32
    %c0_i32_1 = arith.constant 0 : i32
    return %c0_i32, %c0_i32_0 : i32, i32
  }
  func.func @transform_1(%arg0: i32) -> (i32, i32) {
    %c0_i32 = arith.constant 0 : i32
    %c0_i32_0 = arith.constant 0 : i32
    return %arg0, %c0_i32 : i32, i32
  }
}

module attributes {stable_mosaic.version = 11 : i64} {
  func.func @_patch_embed_kernel(%arg0: i32, %arg1: memref<8x192xbf16, #tpu.memory_space<vmem>>, %arg2: memref<192x32xbf16, #tpu.memory_space<vmem>>, %arg3: memref<8x32xf32, #tpu.memory_space<vmem>>) attributes {dimension_semantics = [#tpu.dimension_semantics<parallel>], iteration_bounds = array<i64: 1>, scalar_prefetch = 0 : i64, scratch_operands = 0 : i64, tpu.core_type = #tpu.core_type<tc>, window_params = [{transform_indices = @transform_0, window_bounds = array<i64: 8, 192>}, {pipeline_mode = #tpu.pipeline_mode<synchronous>, transform_indices = @transform_1, window_bounds = array<i64: 192, 32>}, {transform_indices = @transform_2, window_bounds = array<i64: 8, 32>}]} {
    %c0 = arith.constant 0 : index
    %c0_0 = arith.constant 0 : index
    %0 = vector.load %arg1[%c0, %c0_0] : memref<8x192xbf16, #tpu.memory_space<vmem>>, vector<8x192xbf16>
    %c0_1 = arith.constant 0 : index
    %c0_2 = arith.constant 0 : index
    %1 = vector.load %arg2[%c0_1, %c0_2] : memref<192x32xbf16, #tpu.memory_space<vmem>>, vector<192x32xbf16>
    %cst = arith.constant dense<0.000000e+00> : vector<8x32xf32>
    %2 = tpu.matmul %0, %1, %cst {dimension_numbers = #tpu.dot_dimension_numbers<[1], [0], [0], [1], [0, 0, 1, 1], [], []>} : vector<8x192xbf16>, vector<192x32xbf16>, vector<8x32xf32> -> vector<8x32xf32>
    %c0_3 = arith.constant 0 : index
    %c0_4 = arith.constant 0 : index
    %3 = vector.load %arg3[%c0_3, %c0_4] : memref<8x32xf32, #tpu.memory_space<vmem>>, vector<8x32xf32>
    tpu.vector_store %arg3[%c0_3, %c0_4], %2 {strides = array<i32>} : memref<8x32xf32, #tpu.memory_space<vmem>>, vector<8x32xf32>,
    return
  }
  func.func @transform_0(%arg0: i32) -> (i32, i32) {
    %c0_i32 = arith.constant 0 : i32
    %c0_i32_0 = arith.constant 0 : i32
    return %arg0, %c0_i32 : i32, i32
  }
  func.func @transform_1(%arg0: i32) -> (i32, i32) {
    %c0_i32 = arith.constant 0 : i32
    %c0_i32_0 = arith.constant 0 : i32
    %c0_i32_1 = arith.constant 0 : i32
    return %c0_i32, %c0_i32_0 : i32, i32
  }
  func.func @transform_2(%arg0: i32) -> (i32, i32) {
    %c0_i32 = arith.constant 0 : i32
    %c0_i32_0 = arith.constant 0 : i32
    return %arg0, %c0_i32 : i32, i32
  }
}

module attributes {stable_mosaic.version = 11 : i64} {
  func.func @_layer_kernel(%arg0: i32, %arg1: memref<1x5x32xf32, #tpu.memory_space<vmem>>, %arg2: memref<1x32xf32, #tpu.memory_space<vmem>>, %arg3: memref<1x32xf32, #tpu.memory_space<vmem>>, %arg4: memref<32x96xbf16, #tpu.memory_space<vmem>>, %arg5: memref<1x96xf32, #tpu.memory_space<vmem>>, %arg6: memref<32x32xbf16, #tpu.memory_space<vmem>>, %arg7: memref<1x32xf32, #tpu.memory_space<vmem>>, %arg8: memref<1x32xf32, #tpu.memory_space<vmem>>, %arg9: memref<1x32xf32, #tpu.memory_space<vmem>>, %arg10: memref<32x128xbf16, #tpu.memory_space<vmem>>, %arg11: memref<1x128xf32, #tpu.memory_space<vmem>>, %arg12: memref<128x32xbf16, #tpu.memory_space<vmem>>, %arg13: memref<1x32xf32, #tpu.memory_space<vmem>>, %arg14: memref<1x5x32xf32, #tpu.memory_space<vmem>>) attributes {dimension_semantics = [#tpu.dimension_semantics<parallel>], iteration_bounds = array<i64: 2>, scalar_prefetch = 0 : i64, scratch_operands = 0 : i64, tpu.core_type = #tpu.core_type<tc>, window_params = [{transform_indices = @transform_0, window_bounds = array<i64: 1, 5, 32>}, {pipeline_mode = #tpu.pipeline_mode<synchronous>, transform_indices = @transform_1, window_bounds = array<i64: 1, 32>}, {pipeline_mode = #tpu.pipeline_mode<synchronous>, transform_indices = @transform_2, window_bounds = array<i64: 1, 32>}, {pipeline_mode = #tpu.pipeline_mode<synchronous>, transform_indices = @transform_3, window_bounds = array<i64: 32, 96>}, {pipeline_mode = #tpu.pipeline_mode<synchronous>, transform_indices = @transform_4, window_bounds = array<i64: 1, 96>}, {pipeline_mode = #tpu.pipeline_mode<synchronous>, transform_indices = @transform_5, window_bounds = array<i64: 32, 32>}, {pipeline_mode = #tpu.pipeline_mode<synchronous>, transform_indices = @transform_6, window_bounds = array<i64: 1, 32>}, {pipeline_mode = #tpu.pipeline_mode<synchronous>, transform_indices = @transform_7, window_bounds = array<i64: 1, 32>}, {pipeline_mode = #tpu.pipeline_mode<synchronous>, transform_indices = @transform_8, window_bounds = array<i64: 1, 32>}, {pipeline_mode = #tpu.pipeline_mode<synchronous>, transform_indices = @transform_9, window_bounds = array<i64: 32, 128>}, {pipeline_mode = #tpu.pipeline_mode<synchronous>, transform_indices = @transform_10, window_bounds = array<i64: 1, 128>}, {pipeline_mode = #tpu.pipeline_mode<synchronous>, transform_indices = @transform_11, window_bounds = array<i64: 128, 32>}, {pipeline_mode = #tpu.pipeline_mode<synchronous>, transform_indices = @transform_12, window_bounds = array<i64: 1, 32>}, {transform_indices = @transform_13, window_bounds = array<i64: 1, 5, 32>}]} {
    %c0 = arith.constant 0 : index
    %c0_0 = arith.constant 0 : index
    %c0_1 = arith.constant 0 : index
    %0 = vector.load %arg1[%c0, %c0_0, %c0_1] : memref<1x5x32xf32, #tpu.memory_space<vmem>>, vector<1x5x32xf32>
    %1 = vector.shape_cast %0 : vector<1x5x32xf32> to vector<5x32xf32>
    %c0_2 = arith.constant 0 : index
    %c0_3 = arith.constant 0 : index
    %2 = vector.load %arg2[%c0_2, %c0_3] : memref<1x32xf32, #tpu.memory_space<vmem>>, vector<1x32xf32>
    %c0_4 = arith.constant 0 : index
    %c0_5 = arith.constant 0 : index
    %3 = vector.load %arg3[%c0_4, %c0_5] : memref<1x32xf32, #tpu.memory_space<vmem>>, vector<1x32xf32>
    %cst = arith.constant dense<0.000000e+00> : vector<5xf32>
    %4 = vector.multi_reduction <add>, %1, %cst [1] : vector<5x32xf32> to vector<5xf32>
    %5 = vector.shape_cast %4 : vector<5xf32> to vector<5x1xf32>
    %cst_6 = arith.constant 3.200000e+01 : f32
    %6 = vector.broadcast %cst_6 : f32 to vector<5x1xf32>
    %7 = arith.divf %5, %6 : vector<5x1xf32>
    %8 = vector.broadcast %7 : vector<5x1xf32> to vector<5x32xf32>
    %9 = arith.subf %1, %8 : vector<5x32xf32>
    %10 = arith.mulf %9, %9 : vector<5x32xf32>
    %cst_7 = arith.constant dense<0.000000e+00> : vector<5xf32>
    %11 = vector.multi_reduction <add>, %10, %cst_7 [1] : vector<5x32xf32> to vector<5xf32>
    %12 = vector.shape_cast %11 : vector<5xf32> to vector<5x1xf32>
    %cst_8 = arith.constant 3.200000e+01 : f32
    %13 = vector.broadcast %cst_8 : f32 to vector<5x1xf32>
    %14 = arith.divf %12, %13 : vector<5x1xf32>
    %15 = vector.broadcast %7 : vector<5x1xf32> to vector<5x32xf32>
    %16 = arith.subf %1, %15 : vector<5x32xf32>
    %cst_9 = arith.constant 9.99999974E-6 : f32
    %17 = vector.broadcast %cst_9 : f32 to vector<5x1xf32>
    %18 = arith.addf %14, %17 : vector<5x1xf32>
    %19 = math.rsqrt %18 : vector<5x1xf32>
    %20 = vector.broadcast %19 : vector<5x1xf32> to vector<5x32xf32>
    %21 = arith.mulf %16, %20 : vector<5x32xf32>
    %22 = vector.broadcast %2 : vector<1x32xf32> to vector<5x32xf32>
    %23 = arith.mulf %21, %22 : vector<5x32xf32>
    %24 = vector.broadcast %3 : vector<1x32xf32> to vector<5x32xf32>
    %25 = arith.addf %23, %24 : vector<5x32xf32>
    %26 = arith.truncf %25 : vector<5x32xf32> to vector<5x32xbf16>
    %c0_10 = arith.constant 0 : index
    %c0_11 = arith.constant 0 : index
    %27 = vector.load %arg4[%c0_10, %c0_11] : memref<32x96xbf16, #tpu.memory_space<vmem>>, vector<32x96xbf16>
    %cst_12 = arith.constant dense<0.000000e+00> : vector<5x96xf32>
    %28 = tpu.matmul %26, %27, %cst_12 {dimension_numbers = #tpu.dot_dimension_numbers<[1], [0], [0], [1], [0, 0, 1, 1], [], []>} : vector<5x32xbf16>, vector<32x96xbf16>, vector<5x96xf32> -> vector<5x96xf32>
    %c0_13 = arith.constant 0 : index
    %c0_14 = arith.constant 0 : index
    %29 = vector.load %arg5[%c0_13, %c0_14] : memref<1x96xf32, #tpu.memory_space<vmem>>, vector<1x96xf32>
    %30 = vector.broadcast %29 : vector<1x96xf32> to vector<5x96xf32>
    %31 = arith.addf %28, %30 : vector<5x96xf32>
    %32 = vector.extract_strided_slice %31 {offsets = [0, 0], sizes = [5, 8], strides = [1, 1]} : vector<5x96xf32> to vector<5x8xf32>
    %33 = arith.truncf %32 : vector<5x8xf32> to vector<5x8xbf16>
    %34 = vector.extract_strided_slice %31 {offsets = [0, 32], sizes = [5, 8], strides = [1, 1]} : vector<5x96xf32> to vector<5x8xf32>
    %35 = arith.truncf %34 : vector<5x8xf32> to vector<5x8xbf16>
    %36 = vector.extract_strided_slice %31 {offsets = [0, 64], sizes = [5, 8], strides = [1, 1]} : vector<5x96xf32> to vector<5x8xf32>
    %37 = arith.truncf %36 : vector<5x8xf32> to vector<5x8xbf16>
    %cst_15 = arith.constant dense<0.000000e+00> : vector<5x5xf32>
    %38 = tpu.matmul %33, %35, %cst_15 {dimension_numbers = #tpu.dot_dimension_numbers<[1], [1], [0], [0], [0, 0, 1, 0], [], []>} : vector<5x8xbf16>, vector<5x8xbf16>, vector<5x5xf32> -> vector<5x5xf32>
    %cst_16 = arith.constant dense<0xFF800000> : vector<5xf32>
    %39 = vector.multi_reduction <maximumf>, %38, %cst_16 [1] : vector<5x5xf32> to vector<5xf32>
    %40 = vector.shape_cast %39 : vector<5xf32> to vector<5x1xf32>
    %41 = vector.broadcast %40 : vector<5x1xf32> to vector<5x5xf32>
    %42 = arith.subf %38, %41 : vector<5x5xf32>
    %43 = math.exp %42 : vector<5x5xf32>
    %cst_17 = arith.constant dense<0.000000e+00> : vector<5xf32>
    %44 = vector.multi_reduction <add>, %43, %cst_17 [1] : vector<5x5xf32> to vector<5xf32>
    %45 = vector.shape_cast %44 : vector<5xf32> to vector<5x1xf32>
    %46 = tpu.reciprocal %45 {approx = true} : vector<5x1xf32> -> vector<5x1xf32>
    %47 = vector.broadcast %46 : vector<5x1xf32> to vector<5x5xf32>
    %48 = arith.mulf %43, %47 : vector<5x5xf32>
    %49 = arith.truncf %48 : vector<5x5xf32> to vector<5x5xbf16>
    %cst_18 = arith.constant dense<0.000000e+00> : vector<5x8xf32>
    %50 = tpu.matmul %49, %37, %cst_18 {dimension_numbers = #tpu.dot_dimension_numbers<[1], [0], [0], [1], [0, 0, 1, 1], [], []>} : vector<5x5xbf16>, vector<5x8xbf16>, vector<5x8xf32> -> vector<5x8xf32>
    %51 = vector.extract_strided_slice %31 {offsets = [0, 8], sizes = [5, 8], strides = [1, 1]} : vector<5x96xf32> to vector<5x8xf32>
    %52 = arith.truncf %51 : vector<5x8xf32> to vector<5x8xbf16>
    %53 = vector.extract_strided_slice %31 {offsets = [0, 40], sizes = [5, 8], strides = [1, 1]} : vector<5x96xf32> to vector<5x8xf32>
    %54 = arith.truncf %53 : vector<5x8xf32> to vector<5x8xbf16>
    %55 = vector.extract_strided_slice %31 {offsets = [0, 72], sizes = [5, 8], strides = [1, 1]} : vector<5x96xf32> to vector<5x8xf32>
    %56 = arith.truncf %55 : vector<5x8xf32> to vector<5x8xbf16>
    %cst_19 = arith.constant dense<0.000000e+00> : vector<5x5xf32>
    %57 = tpu.matmul %52, %54, %cst_19 {dimension_numbers = #tpu.dot_dimension_numbers<[1], [1], [0], [0], [0, 0, 1, 0], [], []>} : vector<5x8xbf16>, vector<5x8xbf16>, vector<5x5xf32> -> vector<5x5xf32>
    %cst_20 = arith.constant dense<0xFF800000> : vector<5xf32>
    %58 = vector.multi_reduction <maximumf>, %57, %cst_20 [1] : vector<5x5xf32> to vector<5xf32>
    %59 = vector.shape_cast %58 : vector<5xf32> to vector<5x1xf32>
    %60 = vector.broadcast %59 : vector<5x1xf32> to vector<5x5xf32>
    %61 = arith.subf %57, %60 : vector<5x5xf32>
    %62 = math.exp %61 : vector<5x5xf32>
    %cst_21 = arith.constant dense<0.000000e+00> : vector<5xf32>
    %63 = vector.multi_reduction <add>, %62, %cst_21 [1] : vector<5x5xf32> to vector<5xf32>
    %64 = vector.shape_cast %63 : vector<5xf32> to vector<5x1xf32>
    %65 = tpu.reciprocal %64 {approx = true} : vector<5x1xf32> -> vector<5x1xf32>
    %66 = vector.broadcast %65 : vector<5x1xf32> to vector<5x5xf32>
    %67 = arith.mulf %62, %66 : vector<5x5xf32>
    %68 = arith.truncf %67 : vector<5x5xf32> to vector<5x5xbf16>
    %cst_22 = arith.constant dense<0.000000e+00> : vector<5x8xf32>
    %69 = tpu.matmul %68, %56, %cst_22 {dimension_numbers = #tpu.dot_dimension_numbers<[1], [0], [0], [1], [0, 0, 1, 1], [], []>} : vector<5x5xbf16>, vector<5x8xbf16>, vector<5x8xf32> -> vector<5x8xf32>
    %70 = vector.extract_strided_slice %31 {offsets = [0, 16], sizes = [5, 8], strides = [1, 1]} : vector<5x96xf32> to vector<5x8xf32>
    %71 = arith.truncf %70 : vector<5x8xf32> to vector<5x8xbf16>
    %72 = vector.extract_strided_slice %31 {offsets = [0, 48], sizes = [5, 8], strides = [1, 1]} : vector<5x96xf32> to vector<5x8xf32>
    %73 = arith.truncf %72 : vector<5x8xf32> to vector<5x8xbf16>
    %74 = vector.extract_strided_slice %31 {offsets = [0, 80], sizes = [5, 8], strides = [1, 1]} : vector<5x96xf32> to vector<5x8xf32>
    %75 = arith.truncf %74 : vector<5x8xf32> to vector<5x8xbf16>
    %cst_23 = arith.constant dense<0.000000e+00> : vector<5x5xf32>
    %76 = tpu.matmul %71, %73, %cst_23 {dimension_numbers = #tpu.dot_dimension_numbers<[1], [1], [0], [0], [0, 0, 1, 0], [], []>} : vector<5x8xbf16>, vector<5x8xbf16>, vector<5x5xf32> -> vector<5x5xf32>
    %cst_24 = arith.constant dense<0xFF800000> : vector<5xf32>
    %77 = vector.multi_reduction <maximumf>, %76, %cst_24 [1] : vector<5x5xf32> to vector<5xf32>
    %78 = vector.shape_cast %77 : vector<5xf32> to vector<5x1xf32>
    %79 = vector.broadcast %78 : vector<5x1xf32> to vector<5x5xf32>
    %80 = arith.subf %76, %79 : vector<5x5xf32>
    %81 = math.exp %80 : vector<5x5xf32>
    %cst_25 = arith.constant dense<0.000000e+00> : vector<5xf32>
    %82 = vector.multi_reduction <add>, %81, %cst_25 [1] : vector<5x5xf32> to vector<5xf32>
    %83 = vector.shape_cast %82 : vector<5xf32> to vector<5x1xf32>
    %84 = tpu.reciprocal %83 {approx = true} : vector<5x1xf32> -> vector<5x1xf32>
    %85 = vector.broadcast %84 : vector<5x1xf32> to vector<5x5xf32>
    %86 = arith.mulf %81, %85 : vector<5x5xf32>
    %87 = arith.truncf %86 : vector<5x5xf32> to vector<5x5xbf16>
    %cst_26 = arith.constant dense<0.000000e+00> : vector<5x8xf32>
    %88 = tpu.matmul %87, %75, %cst_26 {dimension_numbers = #tpu.dot_dimension_numbers<[1], [0], [0], [1], [0, 0, 1, 1], [], []>} : vector<5x5xbf16>, vector<5x8xbf16>, vector<5x8xf32> -> vector<5x8xf32>
    %89 = vector.extract_strided_slice %31 {offsets = [0, 24], sizes = [5, 8], strides = [1, 1]} : vector<5x96xf32> to vector<5x8xf32>
    %90 = arith.truncf %89 : vector<5x8xf32> to vector<5x8xbf16>
    %91 = vector.extract_strided_slice %31 {offsets = [0, 56], sizes = [5, 8], strides = [1, 1]} : vector<5x96xf32> to vector<5x8xf32>
    %92 = arith.truncf %91 : vector<5x8xf32> to vector<5x8xbf16>
    %93 = vector.extract_strided_slice %31 {offsets = [0, 88], sizes = [5, 8], strides = [1, 1]} : vector<5x96xf32> to vector<5x8xf32>
    %94 = arith.truncf %93 : vector<5x8xf32> to vector<5x8xbf16>
    %cst_27 = arith.constant dense<0.000000e+00> : vector<5x5xf32>
    %95 = tpu.matmul %90, %92, %cst_27 {dimension_numbers = #tpu.dot_dimension_numbers<[1], [1], [0], [0], [0, 0, 1, 0], [], []>} : vector<5x8xbf16>, vector<5x8xbf16>, vector<5x5xf32> -> vector<5x5xf32>
    %cst_28 = arith.constant dense<0xFF800000> : vector<5xf32>
    %96 = vector.multi_reduction <maximumf>, %95, %cst_28 [1] : vector<5x5xf32> to vector<5xf32>
    %97 = vector.shape_cast %96 : vector<5xf32> to vector<5x1xf32>
    %98 = vector.broadcast %97 : vector<5x1xf32> to vector<5x5xf32>
    %99 = arith.subf %95, %98 : vector<5x5xf32>
    %100 = math.exp %99 : vector<5x5xf32>
    %cst_29 = arith.constant dense<0.000000e+00> : vector<5xf32>
    %101 = vector.multi_reduction <add>, %100, %cst_29 [1] : vector<5x5xf32> to vector<5xf32>
    %102 = vector.shape_cast %101 : vector<5xf32> to vector<5x1xf32>
    %103 = tpu.reciprocal %102 {approx = true} : vector<5x1xf32> -> vector<5x1xf32>
    %104 = vector.broadcast %103 : vector<5x1xf32> to vector<5x5xf32>
    %105 = arith.mulf %100, %104 : vector<5x5xf32>
    %106 = arith.truncf %105 : vector<5x5xf32> to vector<5x5xbf16>
    %cst_30 = arith.constant dense<0.000000e+00> : vector<5x8xf32>
    %107 = tpu.matmul %106, %94, %cst_30 {dimension_numbers = #tpu.dot_dimension_numbers<[1], [0], [0], [1], [0, 0, 1, 1], [], []>} : vector<5x5xbf16>, vector<5x8xbf16>, vector<5x8xf32> -> vector<5x8xf32>
    %108 = tpu.concatenate %50, %69, %88, %107 in 1 : vector<5x8xf32>, vector<5x8xf32>, vector<5x8xf32>, vector<5x8xf32> -> vector<5x32xf32>
    %109 = arith.truncf %108 : vector<5x32xf32> to vector<5x32xbf16>
    %c0_31 = arith.constant 0 : index
    %c0_32 = arith.constant 0 : index
    %110 = vector.load %arg6[%c0_31, %c0_32] : memref<32x32xbf16, #tpu.memory_space<vmem>>, vector<32x32xbf16>
    %cst_33 = arith.constant dense<0.000000e+00> : vector<5x32xf32>
    %111 = tpu.matmul %109, %110, %cst_33 {dimension_numbers = #tpu.dot_dimension_numbers<[1], [0], [0], [1], [0, 0, 1, 1], [], []>} : vector<5x32xbf16>, vector<32x32xbf16>, vector<5x32xf32> -> vector<5x32xf32>
    %112 = arith.addf %1, %111 : vector<5x32xf32>
    %c0_34 = arith.constant 0 : index
    %c0_35 = arith.constant 0 : index
    %113 = vector.load %arg7[%c0_34, %c0_35] : memref<1x32xf32, #tpu.memory_space<vmem>>, vector<1x32xf32>
    %114 = vector.broadcast %113 : vector<1x32xf32> to vector<5x32xf32>
    %115 = arith.addf %112, %114 : vector<5x32xf32>
    %c0_36 = arith.constant 0 : index
    %c0_37 = arith.constant 0 : index
    %116 = vector.load %arg8[%c0_36, %c0_37] : memref<1x32xf32, #tpu.memory_space<vmem>>, vector<1x32xf32>
    %c0_38 = arith.constant 0 : index
    %c0_39 = arith.constant 0 : index
    %117 = vector.load %arg9[%c0_38, %c0_39] : memref<1x32xf32, #tpu.memory_space<vmem>>, vector<1x32xf32>
    %cst_40 = arith.constant dense<0.000000e+00> : vector<5xf32>
    %118 = vector.multi_reduction <add>, %115, %cst_40 [1] : vector<5x32xf32> to vector<5xf32>
    %119 = vector.shape_cast %118 : vector<5xf32> to vector<5x1xf32>
    %cst_41 = arith.constant 3.200000e+01 : f32
    %120 = vector.broadcast %cst_41 : f32 to vector<5x1xf32>
    %121 = arith.divf %119, %120 : vector<5x1xf32>
    %122 = vector.broadcast %121 : vector<5x1xf32> to vector<5x32xf32>
    %123 = arith.subf %115, %122 : vector<5x32xf32>
    %124 = arith.mulf %123, %123 : vector<5x32xf32>
    %cst_42 = arith.constant dense<0.000000e+00> : vector<5xf32>
    %125 = vector.multi_reduction <add>, %124, %cst_42 [1] : vector<5x32xf32> to vector<5xf32>
    %126 = vector.shape_cast %125 : vector<5xf32> to vector<5x1xf32>
    %cst_43 = arith.constant 3.200000e+01 : f32
    %127 = vector.broadcast %cst_43 : f32 to vector<5x1xf32>
    %128 = arith.divf %126, %127 : vector<5x1xf32>
    %129 = vector.broadcast %121 : vector<5x1xf32> to vector<5x32xf32>
    %130 = arith.subf %115, %129 : vector<5x32xf32>
    %cst_44 = arith.constant 9.99999974E-6 : f32
    %131 = vector.broadcast %cst_44 : f32 to vector<5x1xf32>
    %132 = arith.addf %128, %131 : vector<5x1xf32>
    %133 = math.rsqrt %132 : vector<5x1xf32>
    %134 = vector.broadcast %133 : vector<5x1xf32> to vector<5x32xf32>
    %135 = arith.mulf %130, %134 : vector<5x32xf32>
    %136 = vector.broadcast %116 : vector<1x32xf32> to vector<5x32xf32>
    %137 = arith.mulf %135, %136 : vector<5x32xf32>
    %138 = vector.broadcast %117 : vector<1x32xf32> to vector<5x32xf32>
    %139 = arith.addf %137, %138 : vector<5x32xf32>
    %140 = arith.truncf %139 : vector<5x32xf32> to vector<5x32xbf16>
    %c0_45 = arith.constant 0 : index
    %c0_46 = arith.constant 0 : index
    %141 = vector.load %arg10[%c0_45, %c0_46] : memref<32x128xbf16, #tpu.memory_space<vmem>>, vector<32x128xbf16>
    %cst_47 = arith.constant dense<0.000000e+00> : vector<5x128xf32>
    %142 = tpu.matmul %140, %141, %cst_47 {dimension_numbers = #tpu.dot_dimension_numbers<[1], [0], [0], [1], [0, 0, 1, 1], [], []>} : vector<5x32xbf16>, vector<32x128xbf16>, vector<5x128xf32> -> vector<5x128xf32>
    %c0_48 = arith.constant 0 : index
    %c0_49 = arith.constant 0 : index
    %143 = vector.load %arg11[%c0_48, %c0_49] : memref<1x128xf32, #tpu.memory_space<vmem>>, vector<1x128xf32>
    %144 = vector.broadcast %143 : vector<1x128xf32> to vector<5x128xf32>
    %145 = arith.addf %142, %144 : vector<5x128xf32>
    %cst_50 = arith.constant 1.702000e+00 : f32
    %146 = vector.broadcast %cst_50 : f32 to vector<5x128xf32>
    %147 = arith.mulf %146, %145 : vector<5x128xf32>
    %148 = arith.negf %147 : vector<5x128xf32>
    %149 = math.exp %148 : vector<5x128xf32>
    %cst_51 = arith.constant 1.000000e+00 : f32
    %150 = vector.broadcast %cst_51 : f32 to vector<5x128xf32>
    %151 = arith.addf %150, %149 : vector<5x128xf32>
    %152 = arith.divf %150, %151 : vector<5x128xf32>
    %153 = arith.mulf %145, %152 : vector<5x128xf32>
    %154 = arith.truncf %153 : vector<5x128xf32> to vector<5x128xbf16>
    %c0_52 = arith.constant 0 : index
    %c0_53 = arith.constant 0 : index
    %155 = vector.load %arg12[%c0_52, %c0_53] : memref<128x32xbf16, #tpu.memory_space<vmem>>, vector<128x32xbf16>
    %cst_54 = arith.constant dense<0.000000e+00> : vector<5x32xf32>
    %156 = tpu.matmul %154, %155, %cst_54 {dimension_numbers = #tpu.dot_dimension_numbers<[1], [0], [0], [1], [0, 0, 1, 1], [], []>} : vector<5x128xbf16>, vector<128x32xbf16>, vector<5x32xf32> -> vector<5x32xf32>
    %c0_55 = arith.constant 0 : index
    %c0_56 = arith.constant 0 : index
    %157 = vector.load %arg13[%c0_55, %c0_56] : memref<1x32xf32, #tpu.memory_space<vmem>>, vector<1x32xf32>
    %158 = vector.broadcast %157 : vector<1x32xf32> to vector<5x32xf32>
    %159 = arith.addf %156, %158 : vector<5x32xf32>
    %160 = arith.addf %115, %159 : vector<5x32xf32>
    %c0_57 = arith.constant 0 : index
    %c0_58 = arith.constant 0 : index
    %c0_59 = arith.constant 0 : index
    %161 = vector.load %arg14[%c0_57, %c0_58, %c0_59] : memref<1x5x32xf32, #tpu.memory_space<vmem>>, vector<1x5x32xf32>
    %162 = vector.shape_cast %161 : vector<1x5x32xf32> to vector<5x32xf32>
    %163 = vector.shape_cast %160 : vector<5x32xf32> to vector<1x5x32xf32>
    tpu.vector_store %arg14[%c0_57, %c0_58, %c0_59], %163 {strides = array<i32>} : memref<1x5x32xf32, #tpu.memory_space<vmem>>, vector<1x5x32xf32>,
    return
  }
  func.func @transform_0(%arg0: i32) -> (i32, i32, i32) {
    %c0_i32 = arith.constant 0 : i32
    %c0_i32_0 = arith.constant 0 : i32
    %c0_i32_1 = arith.constant 0 : i32
    return %arg0, %c0_i32, %c0_i32_0 : i32, i32, i32
  }
  func.func @transform_1(%arg0: i32) -> (i32, i32) {
    %c0_i32 = arith.constant 0 : i32
    %c0_i32_0 = arith.constant 0 : i32
    %c0_i32_1 = arith.constant 0 : i32
    return %c0_i32, %c0_i32_0 : i32, i32
  }
  func.func @transform_2(%arg0: i32) -> (i32, i32) {
    %c0_i32 = arith.constant 0 : i32
    %c0_i32_0 = arith.constant 0 : i32
    %c0_i32_1 = arith.constant 0 : i32
    return %c0_i32, %c0_i32_0 : i32, i32
  }
  func.func @transform_3(%arg0: i32) -> (i32, i32) {
    %c0_i32 = arith.constant 0 : i32
    %c0_i32_0 = arith.constant 0 : i32
    %c0_i32_1 = arith.constant 0 : i32
    return %c0_i32, %c0_i32_0 : i32, i32
  }
  func.func @transform_4(%arg0: i32) -> (i32, i32) {
    %c0_i32 = arith.constant 0 : i32
    %c0_i32_0 = arith.constant 0 : i32
    %c0_i32_1 = arith.constant 0 : i32
    return %c0_i32, %c0_i32_0 : i32, i32
  }
  func.func @transform_5(%arg0: i32) -> (i32, i32) {
    %c0_i32 = arith.constant 0 : i32
    %c0_i32_0 = arith.constant 0 : i32
    %c0_i32_1 = arith.constant 0 : i32
    return %c0_i32, %c0_i32_0 : i32, i32
  }
  func.func @transform_6(%arg0: i32) -> (i32, i32) {
    %c0_i32 = arith.constant 0 : i32
    %c0_i32_0 = arith.constant 0 : i32
    %c0_i32_1 = arith.constant 0 : i32
    return %c0_i32, %c0_i32_0 : i32, i32
  }
  func.func @transform_7(%arg0: i32) -> (i32, i32) {
    %c0_i32 = arith.constant 0 : i32
    %c0_i32_0 = arith.constant 0 : i32
    %c0_i32_1 = arith.constant 0 : i32
    return %c0_i32, %c0_i32_0 : i32, i32
  }
  func.func @transform_8(%arg0: i32) -> (i32, i32) {
    %c0_i32 = arith.constant 0 : i32
    %c0_i32_0 = arith.constant 0 : i32
    %c0_i32_1 = arith.constant 0 : i32
    return %c0_i32, %c0_i32_0 : i32, i32
  }
  func.func @transform_9(%arg0: i32) -> (i32, i32) {
    %c0_i32 = arith.constant 0 : i32
    %c0_i32_0 = arith.constant 0 : i32
    %c0_i32_1 = arith.constant 0 : i32
    return %c0_i32, %c0_i32_0 : i32, i32
  }
  func.func @transform_10(%arg0: i32) -> (i32, i32) {
    %c0_i32 = arith.constant 0 : i32
    %c0_i32_0 = arith.constant 0 : i32
    %c0_i32_1 = arith.constant 0 : i32
    return %c0_i32, %c0_i32_0 : i32, i32
  }
  func.func @transform_11(%arg0: i32) -> (i32, i32) {
    %c0_i32 = arith.constant 0 : i32
    %c0_i32_0 = arith.constant 0 : i32
    %c0_i32_1 = arith.constant 0 : i32
    return %c0_i32, %c0_i32_0 : i32, i32
  }
  func.func @transform_12(%arg0: i32) -> (i32, i32) {
    %c0_i32 = arith.constant 0 : i32
    %c0_i32_0 = arith.constant 0 : i32
    %c0_i32_1 = arith.constant 0 : i32
    return %c0_i32, %c0_i32_0 : i32, i32
  }
  func.func @transform_13(%arg0: i32) -> (i32, i32, i32) {
    %c0_i32 = arith.constant 0 : i32
    %c0_i32_0 = arith.constant 0 : i32
    %c0_i32_1 = arith.constant 0 : i32
    return %arg0, %c0_i32, %c0_i32_0 : i32, i32, i32
  }
}

module attributes {stable_mosaic.version = 11 : i64} {
  func.func @_pos_ln_kernel(%arg0: i32, %arg1: memref<2x5x32xf32, #tpu.memory_space<vmem>>, %arg2: memref<5x32xf32, #tpu.memory_space<vmem>>, %arg3: memref<1x32xf32, #tpu.memory_space<vmem>>, %arg4: memref<1x32xf32, #tpu.memory_space<vmem>>, %arg5: memref<2x5x32xf32, #tpu.memory_space<vmem>>) attributes {dimension_semantics = [#tpu.dimension_semantics<parallel>], iteration_bounds = array<i64: 1>, scalar_prefetch = 0 : i64, scratch_operands = 0 : i64, tpu.core_type = #tpu.core_type<tc>, window_params = [{transform_indices = @transform_0, window_bounds = array<i64: 2, 5, 32>}, {pipeline_mode = #tpu.pipeline_mode<synchronous>, transform_indices = @transform_1, window_bounds = array<i64: 5, 32>}, {pipeline_mode = #tpu.pipeline_mode<synchronous>, transform_indices = @transform_2, window_bounds = array<i64: 1, 32>}, {pipeline_mode = #tpu.pipeline_mode<synchronous>, transform_indices = @transform_3, window_bounds = array<i64: 1, 32>}, {transform_indices = @transform_4, window_bounds = array<i64: 2, 5, 32>}]} {
    %c0 = arith.constant 0 : index
    %c0_0 = arith.constant 0 : index
    %c0_1 = arith.constant 0 : index
    %0 = vector.load %arg1[%c0, %c0_0, %c0_1] : memref<2x5x32xf32, #tpu.memory_space<vmem>>, vector<2x5x32xf32>
    %c0_2 = arith.constant 0 : index
    %c0_3 = arith.constant 0 : index
    %1 = vector.load %arg2[%c0_2, %c0_3] : memref<5x32xf32, #tpu.memory_space<vmem>>, vector<5x32xf32>
    %2 = vector.shape_cast %1 : vector<5x32xf32> to vector<1x5x32xf32>
    %3 = vector.broadcast %2 : vector<1x5x32xf32> to vector<2x5x32xf32>
    %4 = arith.addf %0, %3 : vector<2x5x32xf32>
    %c0_4 = arith.constant 0 : index
    %c0_5 = arith.constant 0 : index
    %5 = vector.load %arg3[%c0_4, %c0_5] : memref<1x32xf32, #tpu.memory_space<vmem>>, vector<1x32xf32>
    %c0_6 = arith.constant 0 : index
    %c0_7 = arith.constant 0 : index
    %6 = vector.load %arg4[%c0_6, %c0_7] : memref<1x32xf32, #tpu.memory_space<vmem>>, vector<1x32xf32>
    %cst = arith.constant dense<0.000000e+00> : vector<2x5xf32>
    %7 = vector.multi_reduction <add>, %4, %cst [2] : vector<2x5x32xf32> to vector<2x5xf32>
    %8 = vector.shape_cast %7 : vector<2x5xf32> to vector<2x5x1xf32>
    %cst_8 = arith.constant 3.200000e+01 : f32
    %9 = vector.broadcast %cst_8 : f32 to vector<2x5x1xf32>
    %10 = arith.divf %8, %9 : vector<2x5x1xf32>
    %11 = vector.broadcast %10 : vector<2x5x1xf32> to vector<2x5x32xf32>
    %12 = arith.subf %4, %11 : vector<2x5x32xf32>
    %13 = arith.mulf %12, %12 : vector<2x5x32xf32>
    %cst_9 = arith.constant dense<0.000000e+00> : vector<2x5xf32>
    %14 = vector.multi_reduction <add>, %13, %cst_9 [2] : vector<2x5x32xf32> to vector<2x5xf32>
    %15 = vector.shape_cast %14 : vector<2x5xf32> to vector<2x5x1xf32>
    %cst_10 = arith.constant 3.200000e+01 : f32
    %16 = vector.broadcast %cst_10 : f32 to vector<2x5x1xf32>
    %17 = arith.divf %15, %16 : vector<2x5x1xf32>
    %18 = vector.broadcast %10 : vector<2x5x1xf32> to vector<2x5x32xf32>
    %19 = arith.subf %4, %18 : vector<2x5x32xf32>
    %cst_11 = arith.constant 9.99999974E-6 : f32
    %20 = vector.broadcast %cst_11 : f32 to vector<2x5x1xf32>
    %21 = arith.addf %17, %20 : vector<2x5x1xf32>
    %22 = math.rsqrt %21 : vector<2x5x1xf32>
    %23 = vector.broadcast %22 : vector<2x5x1xf32> to vector<2x5x32xf32>
    %24 = arith.mulf %19, %23 : vector<2x5x32xf32>
    %25 = vector.shape_cast %5 : vector<1x32xf32> to vector<1x1x32xf32>
    %26 = vector.broadcast %25 : vector<1x1x32xf32> to vector<2x5x32xf32>
    %27 = arith.mulf %24, %26 : vector<2x5x32xf32>
    %28 = vector.shape_cast %6 : vector<1x32xf32> to vector<1x1x32xf32>
    %29 = vector.broadcast %28 : vector<1x1x32xf32> to vector<2x5x32xf32>
    %30 = arith.addf %27, %29 : vector<2x5x32xf32>
    %c0_12 = arith.constant 0 : index
    %c0_13 = arith.constant 0 : index
    %c0_14 = arith.constant 0 : index
    %31 = vector.load %arg5[%c0_12, %c0_13, %c0_14] : memref<2x5x32xf32, #tpu.memory_space<vmem>>, vector<2x5x32xf32>
    tpu.vector_store %arg5[%c0_12, %c0_13, %c0_14], %30 {strides = array<i32>} : memref<2x5x32xf32, #tpu.memory_space<vmem>>, vector<2x5x32xf32>,
    return
  }
  func.func @transform_0(%arg0: i32) -> (i32, i32, i32) {
    %c0_i32 = arith.constant 0 : i32
    %c0_i32_0 = arith.constant 0 : i32
    %c0_i32_1 = arith.constant 0 : i32
    return %arg0, %c0_i32, %c0_i32_0 : i32, i32, i32
  }
  func.func @transform_1(%arg0: i32) -> (i32, i32) {
    %c0_i32 = arith.constant 0 : i32
    %c0_i32_0 = arith.constant 0 : i32
    %c0_i32_1 = arith.constant 0 : i32
    return %c0_i32, %c0_i32_0 : i32, i32
  }
  func.func @transform_2(%arg0: i32) -> (i32, i32) {
    %c0_i32 = arith.constant 0 : i32
    %c0_i32_0 = arith.constant 0 : i32
    %c0_i32_1 = arith.constant 0 : i32
    return %c0_i32, %c0_i32_0 : i32, i32
  }
  func.func @transform_3(%arg0: i32) -> (i32, i32) {
    %c0_i32 = arith.constant 0 : i32
    %c0_i32_0 = arith.constant 0 : i32
    %c0_i32_1 = arith.constant 0 : i32
    return %c0_i32, %c0_i32_0 : i32, i32
  }
  func.func @transform_4(%arg0: i32) -> (i32, i32, i32) {
    %c0_i32 = arith.constant 0 : i32
    %c0_i32_0 = arith.constant 0 : i32
    %c0_i32_1 = arith.constant 0 : i32
    return %arg0, %c0_i32, %c0_i32_0 : i32, i32, i32
  }
}

module attributes {stable_mosaic.version = 11 : i64} {
  func.func @_layer_kernel(%arg0: i32, %arg1: memref<1x7x32xf32, #tpu.memory_space<vmem>>, %arg2: memref<1x32xf32, #tpu.memory_space<vmem>>, %arg3: memref<1x32xf32, #tpu.memory_space<vmem>>, %arg4: memref<32x96xbf16, #tpu.memory_space<vmem>>, %arg5: memref<1x96xf32, #tpu.memory_space<vmem>>, %arg6: memref<32x32xbf16, #tpu.memory_space<vmem>>, %arg7: memref<1x32xf32, #tpu.memory_space<vmem>>, %arg8: memref<1x32xf32, #tpu.memory_space<vmem>>, %arg9: memref<1x32xf32, #tpu.memory_space<vmem>>, %arg10: memref<32x128xbf16, #tpu.memory_space<vmem>>, %arg11: memref<1x128xf32, #tpu.memory_space<vmem>>, %arg12: memref<128x32xbf16, #tpu.memory_space<vmem>>, %arg13: memref<1x32xf32, #tpu.memory_space<vmem>>, %arg14: memref<1x7x32xf32, #tpu.memory_space<vmem>>) attributes {dimension_semantics = [#tpu.dimension_semantics<parallel>], iteration_bounds = array<i64: 2>, scalar_prefetch = 0 : i64, scratch_operands = 0 : i64, tpu.core_type = #tpu.core_type<tc>, window_params = [{transform_indices = @transform_0, window_bounds = array<i64: 1, 7, 32>}, {pipeline_mode = #tpu.pipeline_mode<synchronous>, transform_indices = @transform_1, window_bounds = array<i64: 1, 32>}, {pipeline_mode = #tpu.pipeline_mode<synchronous>, transform_indices = @transform_2, window_bounds = array<i64: 1, 32>}, {pipeline_mode = #tpu.pipeline_mode<synchronous>, transform_indices = @transform_3, window_bounds = array<i64: 32, 96>}, {pipeline_mode = #tpu.pipeline_mode<synchronous>, transform_indices = @transform_4, window_bounds = array<i64: 1, 96>}, {pipeline_mode = #tpu.pipeline_mode<synchronous>, transform_indices = @transform_5, window_bounds = array<i64: 32, 32>}, {pipeline_mode = #tpu.pipeline_mode<synchronous>, transform_indices = @transform_6, window_bounds = array<i64: 1, 32>}, {pipeline_mode = #tpu.pipeline_mode<synchronous>, transform_indices = @transform_7, window_bounds = array<i64: 1, 32>}, {pipeline_mode = #tpu.pipeline_mode<synchronous>, transform_indices = @transform_8, window_bounds = array<i64: 1, 32>}, {pipeline_mode = #tpu.pipeline_mode<synchronous>, transform_indices = @transform_9, window_bounds = array<i64: 32, 128>}, {pipeline_mode = #tpu.pipeline_mode<synchronous>, transform_indices = @transform_10, window_bounds = array<i64: 1, 128>}, {pipeline_mode = #tpu.pipeline_mode<synchronous>, transform_indices = @transform_11, window_bounds = array<i64: 128, 32>}, {pipeline_mode = #tpu.pipeline_mode<synchronous>, transform_indices = @transform_12, window_bounds = array<i64: 1, 32>}, {transform_indices = @transform_13, window_bounds = array<i64: 1, 7, 32>}]} {
    %c0 = arith.constant 0 : index
    %c0_0 = arith.constant 0 : index
    %c0_1 = arith.constant 0 : index
    %0 = vector.load %arg1[%c0, %c0_0, %c0_1] : memref<1x7x32xf32, #tpu.memory_space<vmem>>, vector<1x7x32xf32>
    %1 = vector.shape_cast %0 : vector<1x7x32xf32> to vector<7x32xf32>
    %c0_2 = arith.constant 0 : index
    %c0_3 = arith.constant 0 : index
    %2 = vector.load %arg2[%c0_2, %c0_3] : memref<1x32xf32, #tpu.memory_space<vmem>>, vector<1x32xf32>
    %c0_4 = arith.constant 0 : index
    %c0_5 = arith.constant 0 : index
    %3 = vector.load %arg3[%c0_4, %c0_5] : memref<1x32xf32, #tpu.memory_space<vmem>>, vector<1x32xf32>
    %cst = arith.constant dense<0.000000e+00> : vector<7xf32>
    %4 = vector.multi_reduction <add>, %1, %cst [1] : vector<7x32xf32> to vector<7xf32>
    %5 = vector.shape_cast %4 : vector<7xf32> to vector<7x1xf32>
    %cst_6 = arith.constant 3.200000e+01 : f32
    %6 = vector.broadcast %cst_6 : f32 to vector<7x1xf32>
    %7 = arith.divf %5, %6 : vector<7x1xf32>
    %8 = vector.broadcast %7 : vector<7x1xf32> to vector<7x32xf32>
    %9 = arith.subf %1, %8 : vector<7x32xf32>
    %10 = arith.mulf %9, %9 : vector<7x32xf32>
    %cst_7 = arith.constant dense<0.000000e+00> : vector<7xf32>
    %11 = vector.multi_reduction <add>, %10, %cst_7 [1] : vector<7x32xf32> to vector<7xf32>
    %12 = vector.shape_cast %11 : vector<7xf32> to vector<7x1xf32>
    %cst_8 = arith.constant 3.200000e+01 : f32
    %13 = vector.broadcast %cst_8 : f32 to vector<7x1xf32>
    %14 = arith.divf %12, %13 : vector<7x1xf32>
    %15 = vector.broadcast %7 : vector<7x1xf32> to vector<7x32xf32>
    %16 = arith.subf %1, %15 : vector<7x32xf32>
    %cst_9 = arith.constant 9.99999974E-6 : f32
    %17 = vector.broadcast %cst_9 : f32 to vector<7x1xf32>
    %18 = arith.addf %14, %17 : vector<7x1xf32>
    %19 = math.rsqrt %18 : vector<7x1xf32>
    %20 = vector.broadcast %19 : vector<7x1xf32> to vector<7x32xf32>
    %21 = arith.mulf %16, %20 : vector<7x32xf32>
    %22 = vector.broadcast %2 : vector<1x32xf32> to vector<7x32xf32>
    %23 = arith.mulf %21, %22 : vector<7x32xf32>
    %24 = vector.broadcast %3 : vector<1x32xf32> to vector<7x32xf32>
    %25 = arith.addf %23, %24 : vector<7x32xf32>
    %26 = arith.truncf %25 : vector<7x32xf32> to vector<7x32xbf16>
    %c0_10 = arith.constant 0 : index
    %c0_11 = arith.constant 0 : index
    %27 = vector.load %arg4[%c0_10, %c0_11] : memref<32x96xbf16, #tpu.memory_space<vmem>>, vector<32x96xbf16>
    %cst_12 = arith.constant dense<0.000000e+00> : vector<7x96xf32>
    %28 = tpu.matmul %26, %27, %cst_12 {dimension_numbers = #tpu.dot_dimension_numbers<[1], [0], [0], [1], [0, 0, 1, 1], [], []>} : vector<7x32xbf16>, vector<32x96xbf16>, vector<7x96xf32> -> vector<7x96xf32>
    %c0_13 = arith.constant 0 : index
    %c0_14 = arith.constant 0 : index
    %29 = vector.load %arg5[%c0_13, %c0_14] : memref<1x96xf32, #tpu.memory_space<vmem>>, vector<1x96xf32>
    %30 = vector.broadcast %29 : vector<1x96xf32> to vector<7x96xf32>
    %31 = arith.addf %28, %30 : vector<7x96xf32>
    %32 = vector.extract_strided_slice %31 {offsets = [0, 0], sizes = [7, 8], strides = [1, 1]} : vector<7x96xf32> to vector<7x8xf32>
    %33 = arith.truncf %32 : vector<7x8xf32> to vector<7x8xbf16>
    %34 = vector.extract_strided_slice %31 {offsets = [0, 32], sizes = [7, 8], strides = [1, 1]} : vector<7x96xf32> to vector<7x8xf32>
    %35 = arith.truncf %34 : vector<7x8xf32> to vector<7x8xbf16>
    %36 = vector.extract_strided_slice %31 {offsets = [0, 64], sizes = [7, 8], strides = [1, 1]} : vector<7x96xf32> to vector<7x8xf32>
    %37 = arith.truncf %36 : vector<7x8xf32> to vector<7x8xbf16>
    %cst_15 = arith.constant dense<0.000000e+00> : vector<7x7xf32>
    %38 = tpu.matmul %33, %35, %cst_15 {dimension_numbers = #tpu.dot_dimension_numbers<[1], [1], [0], [0], [0, 0, 1, 0], [], []>} : vector<7x8xbf16>, vector<7x8xbf16>, vector<7x7xf32> -> vector<7x7xf32>
    %cst_16 = arith.constant dense<0xFF800000> : vector<7xf32>
    %39 = vector.multi_reduction <maximumf>, %38, %cst_16 [1] : vector<7x7xf32> to vector<7xf32>
    %40 = vector.shape_cast %39 : vector<7xf32> to vector<7x1xf32>
    %41 = vector.broadcast %40 : vector<7x1xf32> to vector<7x7xf32>
    %42 = arith.subf %38, %41 : vector<7x7xf32>
    %43 = math.exp %42 : vector<7x7xf32>
    %cst_17 = arith.constant dense<0.000000e+00> : vector<7xf32>
    %44 = vector.multi_reduction <add>, %43, %cst_17 [1] : vector<7x7xf32> to vector<7xf32>
    %45 = vector.shape_cast %44 : vector<7xf32> to vector<7x1xf32>
    %46 = tpu.reciprocal %45 {approx = true} : vector<7x1xf32> -> vector<7x1xf32>
    %47 = vector.broadcast %46 : vector<7x1xf32> to vector<7x7xf32>
    %48 = arith.mulf %43, %47 : vector<7x7xf32>
    %49 = arith.truncf %48 : vector<7x7xf32> to vector<7x7xbf16>
    %cst_18 = arith.constant dense<0.000000e+00> : vector<7x8xf32>
    %50 = tpu.matmul %49, %37, %cst_18 {dimension_numbers = #tpu.dot_dimension_numbers<[1], [0], [0], [1], [0, 0, 1, 1], [], []>} : vector<7x7xbf16>, vector<7x8xbf16>, vector<7x8xf32> -> vector<7x8xf32>
    %51 = vector.extract_strided_slice %31 {offsets = [0, 8], sizes = [7, 8], strides = [1, 1]} : vector<7x96xf32> to vector<7x8xf32>
    %52 = arith.truncf %51 : vector<7x8xf32> to vector<7x8xbf16>
    %53 = vector.extract_strided_slice %31 {offsets = [0, 40], sizes = [7, 8], strides = [1, 1]} : vector<7x96xf32> to vector<7x8xf32>
    %54 = arith.truncf %53 : vector<7x8xf32> to vector<7x8xbf16>
    %55 = vector.extract_strided_slice %31 {offsets = [0, 72], sizes = [7, 8], strides = [1, 1]} : vector<7x96xf32> to vector<7x8xf32>
    %56 = arith.truncf %55 : vector<7x8xf32> to vector<7x8xbf16>
    %cst_19 = arith.constant dense<0.000000e+00> : vector<7x7xf32>
    %57 = tpu.matmul %52, %54, %cst_19 {dimension_numbers = #tpu.dot_dimension_numbers<[1], [1], [0], [0], [0, 0, 1, 0], [], []>} : vector<7x8xbf16>, vector<7x8xbf16>, vector<7x7xf32> -> vector<7x7xf32>
    %cst_20 = arith.constant dense<0xFF800000> : vector<7xf32>
    %58 = vector.multi_reduction <maximumf>, %57, %cst_20 [1] : vector<7x7xf32> to vector<7xf32>
    %59 = vector.shape_cast %58 : vector<7xf32> to vector<7x1xf32>
    %60 = vector.broadcast %59 : vector<7x1xf32> to vector<7x7xf32>
    %61 = arith.subf %57, %60 : vector<7x7xf32>
    %62 = math.exp %61 : vector<7x7xf32>
    %cst_21 = arith.constant dense<0.000000e+00> : vector<7xf32>
    %63 = vector.multi_reduction <add>, %62, %cst_21 [1] : vector<7x7xf32> to vector<7xf32>
    %64 = vector.shape_cast %63 : vector<7xf32> to vector<7x1xf32>
    %65 = tpu.reciprocal %64 {approx = true} : vector<7x1xf32> -> vector<7x1xf32>
    %66 = vector.broadcast %65 : vector<7x1xf32> to vector<7x7xf32>
    %67 = arith.mulf %62, %66 : vector<7x7xf32>
    %68 = arith.truncf %67 : vector<7x7xf32> to vector<7x7xbf16>
    %cst_22 = arith.constant dense<0.000000e+00> : vector<7x8xf32>
    %69 = tpu.matmul %68, %56, %cst_22 {dimension_numbers = #tpu.dot_dimension_numbers<[1], [0], [0], [1], [0, 0, 1, 1], [], []>} : vector<7x7xbf16>, vector<7x8xbf16>, vector<7x8xf32> -> vector<7x8xf32>
    %70 = vector.extract_strided_slice %31 {offsets = [0, 16], sizes = [7, 8], strides = [1, 1]} : vector<7x96xf32> to vector<7x8xf32>
    %71 = arith.truncf %70 : vector<7x8xf32> to vector<7x8xbf16>
    %72 = vector.extract_strided_slice %31 {offsets = [0, 48], sizes = [7, 8], strides = [1, 1]} : vector<7x96xf32> to vector<7x8xf32>
    %73 = arith.truncf %72 : vector<7x8xf32> to vector<7x8xbf16>
    %74 = vector.extract_strided_slice %31 {offsets = [0, 80], sizes = [7, 8], strides = [1, 1]} : vector<7x96xf32> to vector<7x8xf32>
    %75 = arith.truncf %74 : vector<7x8xf32> to vector<7x8xbf16>
    %cst_23 = arith.constant dense<0.000000e+00> : vector<7x7xf32>
    %76 = tpu.matmul %71, %73, %cst_23 {dimension_numbers = #tpu.dot_dimension_numbers<[1], [1], [0], [0], [0, 0, 1, 0], [], []>} : vector<7x8xbf16>, vector<7x8xbf16>, vector<7x7xf32> -> vector<7x7xf32>
    %cst_24 = arith.constant dense<0xFF800000> : vector<7xf32>
    %77 = vector.multi_reduction <maximumf>, %76, %cst_24 [1] : vector<7x7xf32> to vector<7xf32>
    %78 = vector.shape_cast %77 : vector<7xf32> to vector<7x1xf32>
    %79 = vector.broadcast %78 : vector<7x1xf32> to vector<7x7xf32>
    %80 = arith.subf %76, %79 : vector<7x7xf32>
    %81 = math.exp %80 : vector<7x7xf32>
    %cst_25 = arith.constant dense<0.000000e+00> : vector<7xf32>
    %82 = vector.multi_reduction <add>, %81, %cst_25 [1] : vector<7x7xf32> to vector<7xf32>
    %83 = vector.shape_cast %82 : vector<7xf32> to vector<7x1xf32>
    %84 = tpu.reciprocal %83 {approx = true} : vector<7x1xf32> -> vector<7x1xf32>
    %85 = vector.broadcast %84 : vector<7x1xf32> to vector<7x7xf32>
    %86 = arith.mulf %81, %85 : vector<7x7xf32>
    %87 = arith.truncf %86 : vector<7x7xf32> to vector<7x7xbf16>
    %cst_26 = arith.constant dense<0.000000e+00> : vector<7x8xf32>
    %88 = tpu.matmul %87, %75, %cst_26 {dimension_numbers = #tpu.dot_dimension_numbers<[1], [0], [0], [1], [0, 0, 1, 1], [], []>} : vector<7x7xbf16>, vector<7x8xbf16>, vector<7x8xf32> -> vector<7x8xf32>
    %89 = vector.extract_strided_slice %31 {offsets = [0, 24], sizes = [7, 8], strides = [1, 1]} : vector<7x96xf32> to vector<7x8xf32>
    %90 = arith.truncf %89 : vector<7x8xf32> to vector<7x8xbf16>
    %91 = vector.extract_strided_slice %31 {offsets = [0, 56], sizes = [7, 8], strides = [1, 1]} : vector<7x96xf32> to vector<7x8xf32>
    %92 = arith.truncf %91 : vector<7x8xf32> to vector<7x8xbf16>
    %93 = vector.extract_strided_slice %31 {offsets = [0, 88], sizes = [7, 8], strides = [1, 1]} : vector<7x96xf32> to vector<7x8xf32>
    %94 = arith.truncf %93 : vector<7x8xf32> to vector<7x8xbf16>
    %cst_27 = arith.constant dense<0.000000e+00> : vector<7x7xf32>
    %95 = tpu.matmul %90, %92, %cst_27 {dimension_numbers = #tpu.dot_dimension_numbers<[1], [1], [0], [0], [0, 0, 1, 0], [], []>} : vector<7x8xbf16>, vector<7x8xbf16>, vector<7x7xf32> -> vector<7x7xf32>
    %cst_28 = arith.constant dense<0xFF800000> : vector<7xf32>
    %96 = vector.multi_reduction <maximumf>, %95, %cst_28 [1] : vector<7x7xf32> to vector<7xf32>
    %97 = vector.shape_cast %96 : vector<7xf32> to vector<7x1xf32>
    %98 = vector.broadcast %97 : vector<7x1xf32> to vector<7x7xf32>
    %99 = arith.subf %95, %98 : vector<7x7xf32>
    %100 = math.exp %99 : vector<7x7xf32>
    %cst_29 = arith.constant dense<0.000000e+00> : vector<7xf32>
    %101 = vector.multi_reduction <add>, %100, %cst_29 [1] : vector<7x7xf32> to vector<7xf32>
    %102 = vector.shape_cast %101 : vector<7xf32> to vector<7x1xf32>
    %103 = tpu.reciprocal %102 {approx = true} : vector<7x1xf32> -> vector<7x1xf32>
    %104 = vector.broadcast %103 : vector<7x1xf32> to vector<7x7xf32>
    %105 = arith.mulf %100, %104 : vector<7x7xf32>
    %106 = arith.truncf %105 : vector<7x7xf32> to vector<7x7xbf16>
    %cst_30 = arith.constant dense<0.000000e+00> : vector<7x8xf32>
    %107 = tpu.matmul %106, %94, %cst_30 {dimension_numbers = #tpu.dot_dimension_numbers<[1], [0], [0], [1], [0, 0, 1, 1], [], []>} : vector<7x7xbf16>, vector<7x8xbf16>, vector<7x8xf32> -> vector<7x8xf32>
    %108 = tpu.concatenate %50, %69, %88, %107 in 1 : vector<7x8xf32>, vector<7x8xf32>, vector<7x8xf32>, vector<7x8xf32> -> vector<7x32xf32>
    %109 = arith.truncf %108 : vector<7x32xf32> to vector<7x32xbf16>
    %c0_31 = arith.constant 0 : index
    %c0_32 = arith.constant 0 : index
    %110 = vector.load %arg6[%c0_31, %c0_32] : memref<32x32xbf16, #tpu.memory_space<vmem>>, vector<32x32xbf16>
    %cst_33 = arith.constant dense<0.000000e+00> : vector<7x32xf32>
    %111 = tpu.matmul %109, %110, %cst_33 {dimension_numbers = #tpu.dot_dimension_numbers<[1], [0], [0], [1], [0, 0, 1, 1], [], []>} : vector<7x32xbf16>, vector<32x32xbf16>, vector<7x32xf32> -> vector<7x32xf32>
    %112 = arith.addf %1, %111 : vector<7x32xf32>
    %c0_34 = arith.constant 0 : index
    %c0_35 = arith.constant 0 : index
    %113 = vector.load %arg7[%c0_34, %c0_35] : memref<1x32xf32, #tpu.memory_space<vmem>>, vector<1x32xf32>
    %114 = vector.broadcast %113 : vector<1x32xf32> to vector<7x32xf32>
    %115 = arith.addf %112, %114 : vector<7x32xf32>
    %c0_36 = arith.constant 0 : index
    %c0_37 = arith.constant 0 : index
    %116 = vector.load %arg8[%c0_36, %c0_37] : memref<1x32xf32, #tpu.memory_space<vmem>>, vector<1x32xf32>
    %c0_38 = arith.constant 0 : index
    %c0_39 = arith.constant 0 : index
    %117 = vector.load %arg9[%c0_38, %c0_39] : memref<1x32xf32, #tpu.memory_space<vmem>>, vector<1x32xf32>
    %cst_40 = arith.constant dense<0.000000e+00> : vector<7xf32>
    %118 = vector.multi_reduction <add>, %115, %cst_40 [1] : vector<7x32xf32> to vector<7xf32>
    %119 = vector.shape_cast %118 : vector<7xf32> to vector<7x1xf32>
    %cst_41 = arith.constant 3.200000e+01 : f32
    %120 = vector.broadcast %cst_41 : f32 to vector<7x1xf32>
    %121 = arith.divf %119, %120 : vector<7x1xf32>
    %122 = vector.broadcast %121 : vector<7x1xf32> to vector<7x32xf32>
    %123 = arith.subf %115, %122 : vector<7x32xf32>
    %124 = arith.mulf %123, %123 : vector<7x32xf32>
    %cst_42 = arith.constant dense<0.000000e+00> : vector<7xf32>
    %125 = vector.multi_reduction <add>, %124, %cst_42 [1] : vector<7x32xf32> to vector<7xf32>
    %126 = vector.shape_cast %125 : vector<7xf32> to vector<7x1xf32>
    %cst_43 = arith.constant 3.200000e+01 : f32
    %127 = vector.broadcast %cst_43 : f32 to vector<7x1xf32>
    %128 = arith.divf %126, %127 : vector<7x1xf32>
    %129 = vector.broadcast %121 : vector<7x1xf32> to vector<7x32xf32>
    %130 = arith.subf %115, %129 : vector<7x32xf32>
    %cst_44 = arith.constant 9.99999974E-6 : f32
    %131 = vector.broadcast %cst_44 : f32 to vector<7x1xf32>
    %132 = arith.addf %128, %131 : vector<7x1xf32>
    %133 = math.rsqrt %132 : vector<7x1xf32>
    %134 = vector.broadcast %133 : vector<7x1xf32> to vector<7x32xf32>
    %135 = arith.mulf %130, %134 : vector<7x32xf32>
    %136 = vector.broadcast %116 : vector<1x32xf32> to vector<7x32xf32>
    %137 = arith.mulf %135, %136 : vector<7x32xf32>
    %138 = vector.broadcast %117 : vector<1x32xf32> to vector<7x32xf32>
    %139 = arith.addf %137, %138 : vector<7x32xf32>
    %140 = arith.truncf %139 : vector<7x32xf32> to vector<7x32xbf16>
    %c0_45 = arith.constant 0 : index
    %c0_46 = arith.constant 0 : index
    %141 = vector.load %arg10[%c0_45, %c0_46] : memref<32x128xbf16, #tpu.memory_space<vmem>>, vector<32x128xbf16>
    %cst_47 = arith.constant dense<0.000000e+00> : vector<7x128xf32>
    %142 = tpu.matmul %140, %141, %cst_47 {dimension_numbers = #tpu.dot_dimension_numbers<[1], [0], [0], [1], [0, 0, 1, 1], [], []>} : vector<7x32xbf16>, vector<32x128xbf16>, vector<7x128xf32> -> vector<7x128xf32>
    %c0_48 = arith.constant 0 : index
    %c0_49 = arith.constant 0 : index
    %143 = vector.load %arg11[%c0_48, %c0_49] : memref<1x128xf32, #tpu.memory_space<vmem>>, vector<1x128xf32>
    %144 = vector.broadcast %143 : vector<1x128xf32> to vector<7x128xf32>
    %145 = arith.addf %142, %144 : vector<7x128xf32>
    %cst_50 = arith.constant 1.702000e+00 : f32
    %146 = vector.broadcast %cst_50 : f32 to vector<7x128xf32>
    %147 = arith.mulf %146, %145 : vector<7x128xf32>
    %148 = arith.negf %147 : vector<7x128xf32>
    %149 = math.exp %148 : vector<7x128xf32>
    %cst_51 = arith.constant 1.000000e+00 : f32
    %150 = vector.broadcast %cst_51 : f32 to vector<7x128xf32>
    %151 = arith.addf %150, %149 : vector<7x128xf32>
    %152 = arith.divf %150, %151 : vector<7x128xf32>
    %153 = arith.mulf %145, %152 : vector<7x128xf32>
    %154 = arith.truncf %153 : vector<7x128xf32> to vector<7x128xbf16>
    %c0_52 = arith.constant 0 : index
    %c0_53 = arith.constant 0 : index
    %155 = vector.load %arg12[%c0_52, %c0_53] : memref<128x32xbf16, #tpu.memory_space<vmem>>, vector<128x32xbf16>
    %cst_54 = arith.constant dense<0.000000e+00> : vector<7x32xf32>
    %156 = tpu.matmul %154, %155, %cst_54 {dimension_numbers = #tpu.dot_dimension_numbers<[1], [0], [0], [1], [0, 0, 1, 1], [], []>} : vector<7x128xbf16>, vector<128x32xbf16>, vector<7x32xf32> -> vector<7x32xf32>
    %c0_55 = arith.constant 0 : index
    %c0_56 = arith.constant 0 : index
    %157 = vector.load %arg13[%c0_55, %c0_56] : memref<1x32xf32, #tpu.memory_space<vmem>>, vector<1x32xf32>
    %158 = vector.broadcast %157 : vector<1x32xf32> to vector<7x32xf32>
    %159 = arith.addf %156, %158 : vector<7x32xf32>
    %160 = arith.addf %115, %159 : vector<7x32xf32>
    %c0_57 = arith.constant 0 : index
    %c0_58 = arith.constant 0 : index
    %c0_59 = arith.constant 0 : index
    %161 = vector.load %arg14[%c0_57, %c0_58, %c0_59] : memref<1x7x32xf32, #tpu.memory_space<vmem>>, vector<1x7x32xf32>
    %162 = vector.shape_cast %161 : vector<1x7x32xf32> to vector<7x32xf32>
    %163 = vector.shape_cast %160 : vector<7x32xf32> to vector<1x7x32xf32>
    tpu.vector_store %arg14[%c0_57, %c0_58, %c0_59], %163 {strides = array<i32>} : memref<1x7x32xf32, #tpu.memory_space<vmem>>, vector<1x7x32xf32>,
    return
  }
  func.func @transform_0(%arg0: i32) -> (i32, i32, i32) {
    %c0_i32 = arith.constant 0 : i32
    %c0_i32_0 = arith.constant 0 : i32
    %c0_i32_1 = arith.constant 0 : i32
    return %arg0, %c0_i32, %c0_i32_0 : i32, i32, i32
  }
  func.func @transform_1(%arg0: i32) -> (i32, i32) {
    %c0_i32 = arith.constant 0 : i32
    %c0_i32_0 = arith.constant 0 : i32
    %c0_i32_1 = arith.constant 0 : i32
    return %c0_i32, %c0_i32_0 : i32, i32
  }
  func.func @transform_2(%arg0: i32) -> (i32, i32) {
    %c0_i32 = arith.constant 0 : i32
    %c0_i32_0 = arith.constant 0 : i32
    %c0_i32_1 = arith.constant 0 : i32
    return %c0_i32, %c0_i32_0 : i32, i32
  }
  func.func @transform_3(%arg0: i32) -> (i32, i32) {
    %c0_i32 = arith.constant 0 : i32
    %c0_i32_0 = arith.constant 0 : i32
    %c0_i32_1 = arith.constant 0 : i32
    return %c0_i32, %c0_i32_0 : i32, i32
  }
  func.func @transform_4(%arg0: i32) -> (i32, i32) {
    %c0_i32 = arith.constant 0 : i32
    %c0_i32_0 = arith.constant 0 : i32
    %c0_i32_1 = arith.constant 0 : i32
    return %c0_i32, %c0_i32_0 : i32, i32
  }
  func.func @transform_5(%arg0: i32) -> (i32, i32) {
    %c0_i32 = arith.constant 0 : i32
    %c0_i32_0 = arith.constant 0 : i32
    %c0_i32_1 = arith.constant 0 : i32
    return %c0_i32, %c0_i32_0 : i32, i32
  }
  func.func @transform_6(%arg0: i32) -> (i32, i32) {
    %c0_i32 = arith.constant 0 : i32
    %c0_i32_0 = arith.constant 0 : i32
    %c0_i32_1 = arith.constant 0 : i32
    return %c0_i32, %c0_i32_0 : i32, i32
  }
  func.func @transform_7(%arg0: i32) -> (i32, i32) {
    %c0_i32 = arith.constant 0 : i32
    %c0_i32_0 = arith.constant 0 : i32
    %c0_i32_1 = arith.constant 0 : i32
    return %c0_i32, %c0_i32_0 : i32, i32
  }
  func.func @transform_8(%arg0: i32) -> (i32, i32) {
    %c0_i32 = arith.constant 0 : i32
    %c0_i32_0 = arith.constant 0 : i32
    %c0_i32_1 = arith.constant 0 : i32
    return %c0_i32, %c0_i32_0 : i32, i32
  }
  func.func @transform_9(%arg0: i32) -> (i32, i32) {
    %c0_i32 = arith.constant 0 : i32
    %c0_i32_0 = arith.constant 0 : i32
    %c0_i32_1 = arith.constant 0 : i32
    return %c0_i32, %c0_i32_0 : i32, i32
  }
  func.func @transform_10(%arg0: i32) -> (i32, i32) {
    %c0_i32 = arith.constant 0 : i32
    %c0_i32_0 = arith.constant 0 : i32
    %c0_i32_1 = arith.constant 0 : i32
    return %c0_i32, %c0_i32_0 : i32, i32
  }
  func.func @transform_11(%arg0: i32) -> (i32, i32) {
    %c0_i32 = arith.constant 0 : i32
    %c0_i32_0 = arith.constant 0 : i32
    %c0_i32_1 = arith.constant 0 : i32
    return %c0_i32, %c0_i32_0 : i32, i32
  }
  func.func @transform_12(%arg0: i32) -> (i32, i32) {
    %c0_i32 = arith.constant 0 : i32
    %c0_i32_0 = arith.constant 0 : i32
    %c0_i32_1 = arith.constant 0 : i32
    return %c0_i32, %c0_i32_0 : i32, i32
  }
  func.func @transform_13(%arg0: i32) -> (i32, i32, i32) {
    %c0_i32 = arith.constant 0 : i32
    %c0_i32_0 = arith.constant 0 : i32
    %c0_i32_1 = arith.constant 0 : i32
    return %arg0, %c0_i32, %c0_i32_0 : i32, i32, i32
  }
}

module attributes {stable_mosaic.version = 11 : i64} {
  func.func @_head_kernel(%arg0: i32, %arg1: memref<2x32xf32, #tpu.memory_space<vmem>>, %arg2: memref<1x32xf32, #tpu.memory_space<vmem>>, %arg3: memref<1x32xf32, #tpu.memory_space<vmem>>, %arg4: memref<32x16xbf16, #tpu.memory_space<vmem>>, %arg5: memref<128x16xbf16, #tpu.memory_space<vmem>>, %arg6: memref<2x128xf32, #tpu.memory_space<vmem>>) attributes {dimension_semantics = [#tpu.dimension_semantics<arbitrary>], iteration_bounds = array<i64: 1>, scalar_prefetch = 0 : i64, scratch_operands = 0 : i64, tpu.core_type = #tpu.core_type<tc>, window_params = [{pipeline_mode = #tpu.pipeline_mode<synchronous>, transform_indices = @transform_0, window_bounds = array<i64: 2, 32>}, {pipeline_mode = #tpu.pipeline_mode<synchronous>, transform_indices = @transform_1, window_bounds = array<i64: 1, 32>}, {pipeline_mode = #tpu.pipeline_mode<synchronous>, transform_indices = @transform_2, window_bounds = array<i64: 1, 32>}, {pipeline_mode = #tpu.pipeline_mode<synchronous>, transform_indices = @transform_3, window_bounds = array<i64: 32, 16>}, {pipeline_mode = #tpu.pipeline_mode<synchronous>, transform_indices = @transform_4, window_bounds = array<i64: 128, 16>}, {pipeline_mode = #tpu.pipeline_mode<synchronous>, transform_indices = @transform_5, window_bounds = array<i64: 2, 128>}]} {
    %c0 = arith.constant 0 : index
    %c0_0 = arith.constant 0 : index
    %0 = vector.load %arg1[%c0, %c0_0] : memref<2x32xf32, #tpu.memory_space<vmem>>, vector<2x32xf32>
    %c0_1 = arith.constant 0 : index
    %c0_2 = arith.constant 0 : index
    %1 = vector.load %arg2[%c0_1, %c0_2] : memref<1x32xf32, #tpu.memory_space<vmem>>, vector<1x32xf32>
    %c0_3 = arith.constant 0 : index
    %c0_4 = arith.constant 0 : index
    %2 = vector.load %arg3[%c0_3, %c0_4] : memref<1x32xf32, #tpu.memory_space<vmem>>, vector<1x32xf32>
    %cst = arith.constant dense<0.000000e+00> : vector<2xf32>
    %3 = vector.multi_reduction <add>, %0, %cst [1] : vector<2x32xf32> to vector<2xf32>
    %4 = vector.shape_cast %3 : vector<2xf32> to vector<2x1xf32>
    %cst_5 = arith.constant 3.200000e+01 : f32
    %5 = vector.broadcast %cst_5 : f32 to vector<2x1xf32>
    %6 = arith.divf %4, %5 : vector<2x1xf32>
    %7 = vector.broadcast %6 : vector<2x1xf32> to vector<2x32xf32>
    %8 = arith.subf %0, %7 : vector<2x32xf32>
    %9 = arith.mulf %8, %8 : vector<2x32xf32>
    %cst_6 = arith.constant dense<0.000000e+00> : vector<2xf32>
    %10 = vector.multi_reduction <add>, %9, %cst_6 [1] : vector<2x32xf32> to vector<2xf32>
    %11 = vector.shape_cast %10 : vector<2xf32> to vector<2x1xf32>
    %cst_7 = arith.constant 3.200000e+01 : f32
    %12 = vector.broadcast %cst_7 : f32 to vector<2x1xf32>
    %13 = arith.divf %11, %12 : vector<2x1xf32>
    %14 = vector.broadcast %6 : vector<2x1xf32> to vector<2x32xf32>
    %15 = arith.subf %0, %14 : vector<2x32xf32>
    %cst_8 = arith.constant 9.99999974E-6 : f32
    %16 = vector.broadcast %cst_8 : f32 to vector<2x1xf32>
    %17 = arith.addf %13, %16 : vector<2x1xf32>
    %18 = math.rsqrt %17 : vector<2x1xf32>
    %19 = vector.broadcast %18 : vector<2x1xf32> to vector<2x32xf32>
    %20 = arith.mulf %15, %19 : vector<2x32xf32>
    %21 = vector.broadcast %1 : vector<1x32xf32> to vector<2x32xf32>
    %22 = arith.mulf %20, %21 : vector<2x32xf32>
    %23 = vector.broadcast %2 : vector<1x32xf32> to vector<2x32xf32>
    %24 = arith.addf %22, %23 : vector<2x32xf32>
    %25 = arith.truncf %24 : vector<2x32xf32> to vector<2x32xbf16>
    %c0_9 = arith.constant 0 : index
    %c0_10 = arith.constant 0 : index
    %26 = vector.load %arg4[%c0_9, %c0_10] : memref<32x16xbf16, #tpu.memory_space<vmem>>, vector<32x16xbf16>
    %cst_11 = arith.constant dense<0.000000e+00> : vector<2x16xf32>
    %27 = tpu.matmul %25, %26, %cst_11 {dimension_numbers = #tpu.dot_dimension_numbers<[1], [0], [0], [1], [0, 0, 1, 1], [], []>} : vector<2x32xbf16>, vector<32x16xbf16>, vector<2x16xf32> -> vector<2x16xf32>
    %28 = arith.mulf %27, %27 : vector<2x16xf32>
    %cst_12 = arith.constant dense<0.000000e+00> : vector<2xf32>
    %29 = vector.multi_reduction <add>, %28, %cst_12 [1] : vector<2x16xf32> to vector<2xf32>
    %30 = vector.shape_cast %29 : vector<2xf32> to vector<2x1xf32>
    %cst_13 = arith.constant 1.000000e-24 : f32
    %31 = vector.broadcast %cst_13 : f32 to vector<2x1xf32>
    %32 = arith.maximumf %30, %31 : vector<2x1xf32>
    %33 = math.rsqrt %32 : vector<2x1xf32>
    %34 = vector.broadcast %33 : vector<2x1xf32> to vector<2x16xf32>
    %35 = arith.mulf %27, %34 : vector<2x16xf32>
    %36 = arith.truncf %35 : vector<2x16xf32> to vector<2x16xbf16>
    %c0_14 = arith.constant 0 : index
    %c0_15 = arith.constant 0 : index
    %37 = vector.load %arg5[%c0_14, %c0_15] : memref<128x16xbf16, #tpu.memory_space<vmem>>, vector<128x16xbf16>
    %cst_16 = arith.constant dense<0.000000e+00> : vector<2x128xf32>
    %38 = tpu.matmul %36, %37, %cst_16 {dimension_numbers = #tpu.dot_dimension_numbers<[1], [1], [0], [0], [0, 0, 1, 0], [], []>} : vector<2x16xbf16>, vector<128x16xbf16>, vector<2x128xf32> -> vector<2x128xf32>
    %cst_17 = arith.constant 1.000000e+02 : f32
    %39 = vector.broadcast %cst_17 : f32 to vector<2x128xf32>
    %40 = arith.mulf %39, %38 : vector<2x128xf32>
    %41 = tpu.iota {dimensions = array<i32: 1>} : vector<2x128xi32>
    %c8_i32 = arith.constant 8 : i32
    %42 = vector.broadcast %c8_i32 : i32 to vector<2x128xi32>
    %43 = arith.cmpi slt, %41, %42 : vector<2x128xi32>
    %cst_18 = arith.constant 0xFF800000 : f32
    %44 = vector.broadcast %cst_18 : f32 to vector<2x128xf32>
    %45 = arith.select %43, %40, %44 : vector<2x128xi1>, vector<2x128xf32>
    %cst_19 = arith.constant dense<0xFF800000> : vector<2xf32>
    %46 = vector.multi_reduction <maximumf>, %45, %cst_19 [1] : vector<2x128xf32> to vector<2xf32>
    %47 = vector.shape_cast %46 : vector<2xf32> to vector<2x1xf32>
    %48 = vector.broadcast %47 : vector<2x1xf32> to vector<2x128xf32>
    %49 = arith.subf %45, %48 : vector<2x128xf32>
    %50 = math.exp %49 : vector<2x128xf32>
    %cst_20 = arith.constant dense<0.000000e+00> : vector<2xf32>
    %51 = vector.multi_reduction <add>, %50, %cst_20 [1] : vector<2x128xf32> to vector<2xf32>
    %52 = vector.shape_cast %51 : vector<2xf32> to vector<2x1xf32>
    %53 = tpu.reciprocal %52 : vector<2x1xf32> -> vector<2x1xf32>
    %54 = vector.broadcast %53 : vector<2x1xf32> to vector<2x128xf32>
    %55 = arith.mulf %50, %54 : vector<2x128xf32>
    %cst_21 = arith.constant 14.2857141 : f32
    %56 = vector.broadcast %cst_21 : f32 to vector<2x128xf32>
    %57 = arith.mulf %55, %56 : vector<2x128xf32>
    %c0_22 = arith.constant 0 : index
    %c0_23 = arith.constant 0 : index
    %58 = vector.load %arg6[%c0_22, %c0_23] : memref<2x128xf32, #tpu.memory_space<vmem>>, vector<2x128xf32>
    tpu.vector_store %arg6[%c0_22, %c0_23], %57 {strides = array<i32>} : memref<2x128xf32, #tpu.memory_space<vmem>>, vector<2x128xf32>,
    return
  }
  func.func @transform_0(%arg0: i32) -> (i32, i32) {
    %c0_i32 = arith.constant 0 : i32
    %c0_i32_0 = arith.constant 0 : i32
    %c0_i32_1 = arith.constant 0 : i32
    return %c0_i32, %c0_i32_0 : i32, i32
  }
  func.func @transform_1(%arg0: i32) -> (i32, i32) {
    %c0_i32 = arith.constant 0 : i32
    %c0_i32_0 = arith.constant 0 : i32
    %c0_i32_1 = arith.constant 0 : i32
    return %c0_i32, %c0_i32_0 : i32, i32
  }
  func.func @transform_2(%arg0: i32) -> (i32, i32) {
    %c0_i32 = arith.constant 0 : i32
    %c0_i32_0 = arith.constant 0 : i32
    %c0_i32_1 = arith.constant 0 : i32
    return %c0_i32, %c0_i32_0 : i32, i32
  }
  func.func @transform_3(%arg0: i32) -> (i32, i32) {
    %c0_i32 = arith.constant 0 : i32
    %c0_i32_0 = arith.constant 0 : i32
    %c0_i32_1 = arith.constant 0 : i32
    return %c0_i32, %c0_i32_0 : i32, i32
  }
  func.func @transform_4(%arg0: i32) -> (i32, i32) {
    %c0_i32 = arith.constant 0 : i32
    %c0_i32_0 = arith.constant 0 : i32
    %c0_i32_1 = arith.constant 0 : i32
    return %c0_i32, %c0_i32_0 : i32, i32
  }
  func.func @transform_5(%arg0: i32) -> (i32, i32) {
    %c0_i32 = arith.constant 0 : i32
    %c0_i32_0 = arith.constant 0 : i32
    %c0_i32_1 = arith.constant 0 : i32
    return %c0_i32, %c0_i32_0 : i32, i32
  }
}

</mosaic_0001>

<llo_original>
// kernel: tpu_custom_call.1
$region0: #{tpu_custom_call.1}
  #allocation0 [shape = 'u32[]', space=smem, size = 0x4, offset = 0x4, fixed_abs, tag = 'smem constant byte address 0x4 - core index']
  #allocation1 [shape = 'u32[144,128]{1,0:T(1,128)}', space=vmem, size = 0x12000, scoped, tag = 'internal scratch']
  %s0 = inlined_call_operand.hbm [shape: f32[8,128], index: 0, kind: input, shape index: {}]
  %s1 = inlined_call_operand.hbm [shape: f32[16,128], index: 1, kind: output, shape index: {}]
  %s2 = sld [smem:[#allocation0]]
  $region41: #{tpu_custom_call.1} parent=0
    _
  %s4 = ssub.s32 1, %s2
  %s5 = scalar_select 0, %s4, %s2
  $region1: #{tpu_custom_call.1} parent=0
    #allocation2 [shape = 'u8[4096]{0}', space=vmem, size = 0x1000, scoped, tag = 'input window, operand 0, single buffered']
    #allocation3 [shape = 's32[2]{0}', space=sflag, size = 0x8, scoped, tag = 'scoped memory for tpu_custom_call.1']
    #allocation4 [shape = 's32[2]{0}', space=sflag, size = 0x8, scoped, tag = 'scoped memory for tpu_custom_call.1']
    #allocation5 [shape = 'u8[8192]{0}', space=vmem, size = 0x2000, scoped, tag = 'output window, operand 0']
    %6 = vsyncpa [#allocation3], 0
    %7 = vsyncpa [#allocation4], 0
    %s8 = scalar_lea.sflag [#allocation4], 1
    %9 = vsyncpa %s8, 0
    loop: start=0, step=1, limit=4
    $region2: #{tpu_custom_call.1} parent=1 // loop_pre_header
      _
    $region3: #{tpu_custom_call.1} parent=1 // loop_header
      %s11 = sphi 0, %s15
      %p12 = scmp.ge.s32.totalorder %s11, 4
      %s19 = sphi 0, %s19
      %s21 = sphi 0, %s19
      %s22 = sphi 0, %s21
      %s36 = sphi 0, %s22
      %s42 = sphi 0, %s44
      %s45 = sphi 0, %s42
      %s46 = sphi 0, %s45
      %s62 = sphi 0, %s46
    $region4: #{tpu_custom_call.1} parent=1 // loop_header_branch
      %14 = sbr.rel (%p12) target = $region8
    $region5: #{tpu_custom_call.1} parent=1 // loop_body
      %s16 = ssub.s32 %s11, 1
      %s17 = ssub.s32 %s11, 2
      %s18 = sadd.s32 %s11, 1
      %s20 = sadd.s32 %s19, 1
      %p23 = scmp.eq.s32.totalorder %s11, 1
      %p24 = scmp.ne.s32.totalorder %s19, %s21
      %p25 = scmp.eq.s32.totalorder %s11, 0
      %p26 = por %p24, %p25
      %p27 = scmp.ne.s32.totalorder %s19, %s21
      %p28 = scmp.eq.s32.totalorder %s16, 1
      %p29 = por %p27, %p28
      %p30 = scmp.ne.s32.totalorder %s21, %s22
      %p31 = scmp.eq.s32.totalorder %s16, 0
      %p32 = por %p30, %p31
      %p33 = scmp.ne.s32.totalorder %s21, %s22
      %p34 = scmp.eq.s32.totalorder %s17, 1
      %p35 = por %p33, %p34
      %p37 = scmp.ne.s32.totalorder %s22, %s36
      %p38 = scmp.eq.s32.totalorder %s17, 0
      %p39 = por %p37, %p38
      %s40 = ssub.s32 %s11, %s18
      %p41 = scmp.eq.s32.totalorder %s40, 0
      %s43 = sadd.s32 %s42, 1
      %s44 = scalar_select %p41, %s42, %s43
      %p47 = pneg %p41
      %p48 = scmp.eq.s32.totalorder %s11, 1
      %p49 = por %p47, %p48
      %p50 = scmp.ne.s32.totalorder %s42, %s45
      %p51 = scmp.eq.s32.totalorder %s11, 0
      %p52 = por %p50, %p51
      %p53 = scmp.ne.s32.totalorder %s42, %s45
      %p54 = scmp.eq.s32.totalorder %s16, 1
      %p55 = por %p53, %p54
      %p56 = scmp.ne.s32.totalorder %s45, %s46
      %p57 = scmp.eq.s32.totalorder %s16, 0
      %p58 = por %p56, %p57
      %p59 = scmp.ne.s32.totalorder %s45, %s46
      %p60 = scmp.eq.s32.totalorder %s17, 1
      %p61 = por %p59, %p60
      %p63 = scmp.ne.s32.totalorder %s46, %s62
      %p64 = scmp.eq.s32.totalorder %s17, 0
      %p65 = por %p63, %p64
      %p66 = scmp.le.s32.totalorder 1, %s11
      %p67 = scmp.lt.s32.totalorder %s11, 3
      %p68 = pnand %p66, %p67
      %p69 = pneg %p68
      // Predicated region
      $region9: #{tpu_custom_call.1} parent=5 // pred_check
        _
      $region10: #{tpu_custom_call.1} parent=5 // pred_check_branch
        %71 = sbr.rel (%p68) target = $region12
      $region11: #{tpu_custom_call.1} parent=5 // pred_region
        %s72 = ssub.s32 %s11, 1
        // Predicated region
        $region13: #{tpu_custom_call.1} parent=11 // pred_check
          %p73 = pneg %p32
        $region14: #{tpu_custom_call.1} parent=11 // pred_check_branch
          %75 = sbr.rel (%p73) target = $region16
        $region15: #{tpu_custom_call.1} parent=11 // pred_region
          %s77 = ssub.s32 128, 128
          %78 = vsyncadd [#allocation3], %s77
          %s80 = sshll.u32 [#allocation2], 4
          %s81 = int_to_ptr.vmem [resolvable:$true] %s80
          %83 = dma.hbm_to_vmem [thread:$0]  %s0, 128, %s81, [#allocation3]
        $region16: #{tpu_custom_call.1} parent=11 // pred_fallthru
          _
      $region12: #{tpu_custom_call.1} parent=5 // pred_fallthru
        _
      %p84 = scmp.lt.s32.totalorder %s11, 2
      // Predicated region
      $region17: #{tpu_custom_call.1} parent=5 // pred_check
        %p85 = pneg %p84
      $region18: #{tpu_custom_call.1} parent=5 // pred_check_branch
        %87 = sbr.rel (%p85) target = $region20
      $region19: #{tpu_custom_call.1} parent=5 // pred_region
        _
      $region20: #{tpu_custom_call.1} parent=5 // pred_fallthru
        _
      %p88 = scmp.le.s32.totalorder 1, %s11
      %p89 = scmp.lt.s32.totalorder %s11, 3
      %p90 = pnand %p88, %p89
      %p91 = pneg %p90
      // Predicated region
      $region21: #{tpu_custom_call.1} parent=5 // pred_check
        _
      $region22: #{tpu_custom_call.1} parent=5 // pred_check_branch
        %93 = sbr.rel (%p90) target = $region24
      $region23: #{tpu_custom_call.1} parent=5 // pred_region
        %s94 = ssub.s32 %s11, 1
        // Predicated region
        $region25: #{tpu_custom_call.1} parent=23 // pred_check
          %p95 = pneg %p32
        $region26: #{tpu_custom_call.1} parent=23 // pred_check_branch
          %97 = sbr.rel (%p95) target = $region28
        $region27: #{tpu_custom_call.1} parent=23 // pred_region
          %98 = dma.done [#allocation3], 128
        $region28: #{tpu_custom_call.1} parent=23 // pred_fallthru
          _
        %p99 = pneg %p32
        %p100 = pneg %p29
        %p101 = pneg %p58
        %p102 = pneg %p55
        %s103 = sand.u32 %s45, 1
        %s104 = scalar_lea.sflag [#allocation4], %s103
        %s105 = sand.u32 %s45, 1
        %s106 = smul.addr %s105, 8
        %s107 = scalar_lea.vmem [#allocation5], %s106
        %v108 = vld [vmem:[#allocation2] sm:$0xff]
        %v109 = vmul.f32 %v108, 2.0
        %110 = vst [vmem:[%s107] sm:$0xff] %v109
        %s111 = sand.u32 %s45, 1
        %s112 = scalar_lea.sflag [#allocation4], %s111
        %s113 = sand.u32 %s45, 1
        %s114 = smul.addr %s113, 8
        %s115 = scalar_lea.vmem [#allocation5], %s114
        // Predicated region
        $region29: #{tpu_custom_call.1} parent=23 // pred_check
          %p116 = pneg %p55
        $region30: #{tpu_custom_call.1} parent=23 // pred_check_branch
          %118 = sbr.rel (%p116) target = $region32
        $region31: #{tpu_custom_call.1} parent=23 // pred_region
          %s120 = ssub.s32 128, 128
          %121 = vsyncadd %s112, %s120
          %s122 = smul.addr %s16, 128
          %s123 = scalar_lea.hbm %s1, %s122
          %s125 = sshll.u32 %s115, 4
          %s126 = int_to_ptr.vmem [resolvable:$true] %s125
          %128 = dma.vmem_to_hbm [thread:$0]  %s126, 128, %s123, %s112
        $region32: #{tpu_custom_call.1} parent=23 // pred_fallthru
          _
      $region24: #{tpu_custom_call.1} parent=5 // pred_fallthru
        _
      %p129 = scmp.le.s32.totalorder 2, %s11
      // Predicated region
      $region33: #{tpu_custom_call.1} parent=5 // pred_check
        %p130 = pneg %p129
      $region34: #{tpu_custom_call.1} parent=5 // pred_check_branch
        %132 = sbr.rel (%p130) target = $region36
      $region35: #{tpu_custom_call.1} parent=5 // pred_region
        %s133 = ssub.s32 %s11, 2
        // Predicated region
        $region37: #{tpu_custom_call.1} parent=35 // pred_check
          %p134 = pneg %p61
        $region38: #{tpu_custom_call.1} parent=35 // pred_check_branch
          %136 = sbr.rel (%p134) target = $region40
        $region39: #{tpu_custom_call.1} parent=35 // pred_region
          %s137 = sand.u32 %s46, 1
          %s138 = scalar_lea.sflag [#allocation4], %s137
          %s139 = sand.u32 %s46, 1
          %s140 = smul.addr %s139, 8
          %s141 = scalar_lea.vmem [#allocation5], %s140
          %142 = dma.done %s138, 128
        $region40: #{tpu_custom_call.1} parent=35 // pred_fallthru
          _
      $region36: #{tpu_custom_call.1} parent=5 // pred_fallthru
        _
    $region6: #{tpu_custom_call.1} parent=1 // loop_footer
      %s15 = sadd.s32 1, %s11
    $region7: #{tpu_custom_call.1} parent=1 // loop_footer_branch
      %10 = sbr.rel target = $region3
    $region8: #{tpu_custom_call.1} parent=1 // loop_exit
      _
    %143 = vsyncpa [#allocation3], 1
    %s144 = scalar_lea.sflag [#allocation3], 1
    %145 = vsyncpa %s144, 1
    %146 = vsyncpa [#allocation4], 1
    %s147 = scalar_lea.sflag [#allocation4], 1
    %148 = vsyncpa %s147, 1

// kernel: deep_prompt_clip_forward.5
$region0: #{deep_prompt_clip_forward.5}
  #allocation0 [shape = 'u32[]', space=smem, size = 0x4, offset = 0x4, fixed_abs, tag = 'smem constant byte address 0x4 - core index']
  #allocation1 [shape = 'u32[144,128]{1,0:T(1,128)}', space=vmem, size = 0x12000, scoped, tag = 'internal scratch']
  %s0 = inlined_call_operand.vmem [shape: bf16[8,192], index: 0, kind: input, shape index: {}]
  %s1 = inlined_call_operand.vmem [shape: bf16[192,32], index: 1, kind: input, shape index: {}]
  %s2 = inlined_call_operand.vmem [shape: f32[8,32], index: 2, kind: output, shape index: {}]
  %s3 = sld [smem:[#allocation0]]
  $region18: #{deep_prompt_clip_forward.5} parent=0
    _
  %s5 = ssub.s32 1, %s3
  %s6 = scalar_select 0, %s5, %s3
  // Predicated region
  $region2: #{deep_prompt_clip_forward.5} parent=0 // pred_check
    _
  $region3: #{deep_prompt_clip_forward.5} parent=0 // pred_check_branch
    %8 = sbr.rel (0) target = $region5
  $region4: #{deep_prompt_clip_forward.5} parent=0 // pred_region
    _
  $region5: #{deep_prompt_clip_forward.5} parent=0 // pred_fallthru
    _
  // Predicated region
  $region6: #{deep_prompt_clip_forward.5} parent=0 // pred_check
    _
  $region7: #{deep_prompt_clip_forward.5} parent=0 // pred_check_branch
    %10 = sbr.rel (0) target = $region9
  $region8: #{deep_prompt_clip_forward.5} parent=0 // pred_region
    _
  $region9: #{deep_prompt_clip_forward.5} parent=0 // pred_fallthru
    _
  %v12 = vld [vmem:[%s0] sm:$0xff]
  %v13 = vld [vmem:[%s1] sm:$0xf]
  %v14 = vld [vmem:[%s1 + $0x4] sm:$0xf]
  %v15 = vld [vmem:[%s1 + $0x8] sm:$0xf]
  %v16 = vld [vmem:[%s1 + $0xc] sm:$0xf]
  %v17 = vld [vmem:[%s1 + $0x10] sm:$0xf]
  %v18 = vld [vmem:[%s1 + $0x14] sm:$0xf]
  %v19 = vld [vmem:[%s1 + $0x18] sm:$0xf]
  %v20 = vld [vmem:[%s1 + $0x1c] sm:$0xf]
  %v21 = vld [vmem:[%s1 + $0x20] sm:$0xf]
  %v22 = vld [vmem:[%s1 + $0x24] sm:$0xf]
  %v23 = vld [vmem:[%s1 + $0x28] sm:$0xf]
  %v24 = vld [vmem:[%s1 + $0x2c] sm:$0xf]
  %v25 = vld [vmem:[%s1 + $0x30] sm:$0xf]
  %v26 = vld [vmem:[%s1 + $0x34] sm:$0xf]
  %v27 = vld [vmem:[%s1 + $0x38] sm:$0xf]
  %v28 = vld [vmem:[%s1 + $0x3c] sm:$0xf]
  %v29 = vld [vmem:[%s1 + $0x40] sm:$0xf]
  %v30 = vld [vmem:[%s1 + $0x44] sm:$0xf]
  %v31 = vld [vmem:[%s1 + $0x48] sm:$0xf]
  %v32 = vld [vmem:[%s1 + $0x4c] sm:$0xf]
  %v33 = vld [vmem:[%s1 + $0x50] sm:$0xf]
  %v34 = vld [vmem:[%s1 + $0x54] sm:$0xf]
  %v35 = vld [vmem:[%s1 + $0x58] sm:$0xf]
  %v36 = vld [vmem:[%s1 + $0x5c] sm:$0xf]
  %v38 = vunpack.c.l.b16 %v12
  %v39 = vunpack.c.h.b16 %v12
  %v40 = vpack.c.b16 %v38, %v38
  %v41 = vpack.c.b16 %v39, %v39
  %v67 = vunpack.c.l.b16 %v13
  %v68 = vunpack.c.l.b16 %v14
  %v69 = vunpack.c.l.b16 %v15
  %v70 = vunpack.c.l.b16 %v16
  %v71 = vunpack.c.l.b16 %v17
  %v72 = vunpack.c.l.b16 %v18
  %v73 = vunpack.c.l.b16 %v19
  %v74 = vunpack.c.l.b16 %v20
  %v75 = vunpack.c.l.b16 %v21
  %v76 = vunpack.c.l.b16 %v22
  %v77 = vunpack.c.l.b16 %v23
  %v78 = vunpack.c.l.b16 %v24
  %v79 = vunpack.c.l.b16 %v25
  %v80 = vunpack.c.l.b16 %v26
  %v81 = vunpack.c.l.b16 %v27
  %v82 = vunpack.c.l.b16 %v28
  %v83 = vunpack.c.l.b16 %v29
  %v84 = vunpack.c.l.b16 %v30
  %v85 = vunpack.c.l.b16 %v31
  %v86 = vunpack.c.l.b16 %v32
  %v87 = vunpack.c.l.b16 %v33
  %v88 = vunpack.c.l.b16 %v34
  %v89 = vunpack.c.l.b16 %v35
  %v90 = vunpack.c.l.b16 %v36
  %v91 = vpack.c.b16 %v68, %v67
  %v92 = vpack.c.b16 %v70, %v69
  %v93 = vpack.c.b16 %v72, %v71
  %v94 = vpack.c.b16 %v74, %v73
  %v95 = vpack.c.b16 %v76, %v75
  %v96 = vpack.c.b16 %v78, %v77
  %v97 = vpack.c.b16 %v80, %v79
  %v98 = vpack.c.b16 %v82, %v81
  %v99 = vpack.c.b16 %v84, %v83
  %v100 = vpack.c.b16 %v86, %v85
  %v101 = vpack.c.b16 %v88, %v87
  %v102 = vpack.c.b16 %v90, %v89
  %vm115 = vcmask 523264
  %v117 = vsel %vm115, %v41, 0
  %119 = vmatprep.subr.bf16.mxu0 0
  %120 = vmatpush1.bf16.msra.mxu0 %v91
  %121 = vmatprep.subr.bf16.mxu0 0
  %122 = vmatpush1.bf16.msra.mxu0 %v92
  %123 = vmatprep.subr.bf16.mxu0 0
  %124 = vmatpush1.bf16.msra.mxu0 %v93
  %125 = vmatprep.subr.bf16.mxu0 0
  %126 = vmatpush1.bf16.msra.mxu0 %v94
  %127 = vmatprep.subr.bf16.mxu0 0
  %128 = vmatpush1.bf16.msra.mxu0 %v95
  %129 = vmatprep.subr.bf16.mxu0 0
  %130 = vmatpush1.bf16.msra.mxu0 %v96
  %131 = vmatprep.subr.bf16.mxu0 0
  %132 = vmatpush1.bf16.msra.mxu0 %v97
  %133 = vmatprep.subr.bf16.mxu0 0
  %134 = vmatpush1.bf16.msra.mxu0 %v98
  %135 = vmatprep.subr.bf16.mxu0 0
  %136 = vmatpush1.bf16.msra.mxu0 %v99
  %137 = vmatprep.subr.bf16.mxu0 0
  %138 = vmatpush1.bf16.msra.mxu0 %v100
  %139 = vmatprep.subr.bf16.mxu0 0
  %140 = vmatpush1.bf16.msra.mxu0 %v101
  %141 = vmatprep.subr.bf16.mxu0 0
  %142 = vmatpush1.bf16.msra.mxu0 %v102
  %143 = vmatprep.subr.bf16.mxu0 0
  %144 = vmatpush1.bf16.msra.mxu0 0
  %145 = vmatprep.subr.bf16.mxu0 0
  %146 = vmatpush1.bf16.msra.mxu0 0
  %147 = vmatprep.subr.bf16.mxu0 0
  %148 = vmatpush1.bf16.msra.mxu0 0
  %149 = vmatprep.subr.bf16.mxu0 0
  %150 = vmatpush1.bf16.msra.mxu0 0
  %151 = vmatprep.mubr.bf16.mxu0 %v117
  %152 = vmatmul.mubr.bf16.gmra.mrb[0].mxu0 %v40
  %v153 = vpop.f32.mrb[0].mxu0
  %v154 = vadd.f32 0.0, %v153
  %v155 = vpop.f32.mrb[0].mxu0
  %v156 = vpop.f32.mrb[0].mxu0
  %v157 = vpop.f32.mrb[0].mxu0
  %158 = vdwg.mxu0
  %vm159 = vcmask 261120
  %160 = vst.msk [vmem:[%s2] sm:$0xff] %vm159, %v154
  // Predicated region
  $region10: #{deep_prompt_clip_forward.5} parent=0 // pred_check
    _
  $region11: #{deep_prompt_clip_forward.5} parent=0 // pred_check_branch
    %162 = sbr.rel (0) target = $region13
  $region12: #{deep_prompt_clip_forward.5} parent=0 // pred_region
    _
  $region13: #{deep_prompt_clip_forward.5} parent=0 // pred_fallthru
    _
  // Predicated region
  $region14: #{deep_prompt_clip_forward.5} parent=0 // pred_check
    _
  $region15: #{deep_prompt_clip_forward.5} parent=0 // pred_check_branch
    %164 = sbr.rel (0) target = $region17
  $region16: #{deep_prompt_clip_forward.5} parent=0 // pred_region
    _
  $region17: #{deep_prompt_clip_forward.5} parent=0 // pred_fallthru
    _

// kernel: deep_prompt_clip_forward.6
$region0: #{deep_prompt_clip_forward.6}
  #allocation0 [shape = 'u32[]', space=smem, size = 0x4, offset = 0x4, fixed_abs, tag = 'smem constant byte address 0x4 - core index']
  #allocation1 [shape = 'u32[144,128]{1,0:T(1,128)}', space=vmem, size = 0x12000, scoped, tag = 'internal scratch']
  %s0 = inlined_call_operand.vmem [shape: f32[2,5,32], index: 0, kind: input, shape index: {}]
  %s1 = inlined_call_operand.vmem [shape: f32[5,32], index: 1, kind: input, shape index: {}]
  %s2 = inlined_call_operand.vmem [shape: f32[1,32], index: 2, kind: input, shape index: {}]
  %s3 = inlined_call_operand.vmem [shape: f32[1,32], index: 3, kind: input, shape index: {}]
  %s4 = inlined_call_operand.vmem [shape: f32[2,5,32], index: 4, kind: output, shape index: {}]
  %s5 = sld [smem:[#allocation0]]
  $region26: #{deep_prompt_clip_forward.6} parent=0
    _
  %s7 = ssub.s32 1, %s5
  %s8 = scalar_select 0, %s7, %s5
  // Predicated region
  $region2: #{deep_prompt_clip_forward.6} parent=0 // pred_check
    _
  $region3: #{deep_prompt_clip_forward.6} parent=0 // pred_check_branch
    %10 = sbr.rel (0) target = $region5
  $region4: #{deep_prompt_clip_forward.6} parent=0 // pred_region
    _
  $region5: #{deep_prompt_clip_forward.6} parent=0 // pred_fallthru
    _
  // Predicated region
  $region6: #{deep_prompt_clip_forward.6} parent=0 // pred_check
    _
  $region7: #{deep_prompt_clip_forward.6} parent=0 // pred_check_branch
    %12 = sbr.rel (0) target = $region9
  $region8: #{deep_prompt_clip_forward.6} parent=0 // pred_region
    _
  $region9: #{deep_prompt_clip_forward.6} parent=0 // pred_fallthru
    _
  // Predicated region
  $region10: #{deep_prompt_clip_forward.6} parent=0 // pred_check
    _
  $region11: #{deep_prompt_clip_forward.6} parent=0 // pred_check_branch
    %14 = sbr.rel (0) target = $region13
  $region12: #{deep_prompt_clip_forward.6} parent=0 // pred_region
    _
  $region13: #{deep_prompt_clip_forward.6} parent=0 // pred_fallthru
    _
  // Predicated region
  $region14: #{deep_prompt_clip_forward.6} parent=0 // pred_check
    _
  $region15: #{deep_prompt_clip_forward.6} parent=0 // pred_check_branch
    %16 = sbr.rel (0) target = $region17
  $region16: #{deep_prompt_clip_forward.6} parent=0 // pred_region
    _
  $region17: #{deep_prompt_clip_forward.6} parent=0 // pred_fallthru
    _
  %v17 = vld [vmem:[%s0] sm:$0x1f]
  %v18 = vld [vmem:[%s0 + $0x8] sm:$0x1f]
  %v19 = vld [vmem:[%s1] sm:$0x1f]
  %v20 = vadd.f32 %v17, %v19
  %v21 = vadd.f32 %v18, %v19
  %v22 = vld [vmem:[%s2] sm:$0x1]
  %v23 = vld [vmem:[%s3] sm:$0x1]
  %vm24 = vcmask 258048
  %v25 = vsel %vm24, %v20, 0.0
  %26 = vadd.xlane.f32.xlu0 %v25
  %v27 = vpop.xlane.xlu0 %26
  %v28 = vsel %vm24, %v21, 0.0
  %29 = vadd.xlane.f32.xlu0 %v28
  %v30 = vpop.xlane.xlu0 %29
  %v31 = vrcp.pop 32.0
  %v32 = vmul.f32 %v27, %v31
  %v33 = vmul.f32 %v30, %v31
  %v34 = vsub.f32 %v20, %v32
  %v35 = vsub.f32 %v21, %v33
  %v36 = vmul.f32 %v34, %v34
  %v37 = vmul.f32 %v35, %v35
  %v38 = vsel %vm24, %v36, 0.0
  %39 = vadd.xlane.f32.xlu0 %v38
  %v40 = vpop.xlane.xlu0 %39
  %v41 = vsel %vm24, %v37, 0.0
  %42 = vadd.xlane.f32.xlu0 %v41
  %v43 = vpop.xlane.xlu0 %42
  %v44 = vmul.f32 %v40, %v31
  %v45 = vmul.f32 %v43, %v31
  %v46 = vadd.f32 %v44, 1e-05
  %v47 = vadd.f32 %v45, 1e-05
  %v48 = vrsqrt.pop %v46
  %v49 = vrsqrt.pop %v47
  %v50 = vmul.f32 %v34, %v48
  %v51 = vmul.f32 %v35, %v49
  %v53 = vlaneseq
  %v54 = vshrl.u32 %v53, 7
  %v55 = vsub.s32 0, %v54
  %v56 = vrot.slane %v22, %v55
  %v58 = vmul.f32 %v50, %v56
  %v59 = vmul.f32 %v51, %v56
  %v61 = vlaneseq
  %v62 = vshrl.u32 %v61, 7
  %v63 = vsub.s32 0, %v62
  %v64 = vrot.slane %v23, %v63
  %v66 = vadd.f32 %v58, %v64
  %v67 = vadd.f32 %v59, %v64
  %68 = vst.msk [vmem:[%s4] sm:$0x1f] %vm24, %v66
  %69 = vst.msk [vmem:[%s4 + $0x8] sm:$0x1f] %vm24, %v67
  // Predicated region
  $region18: #{deep_prompt_clip_forward.6} parent=0 // pred_check
    _
  $region19: #{deep_prompt_clip_forward.6} parent=0 // pred_check_branch
    %71 = sbr.rel (0) target = $region21
  $region20: #{deep_prompt_clip_forward.6} parent=0 // pred_region
    _
  $region21: #{deep_prompt_clip_forward.6} parent=0 // pred_fallthru
    _
  // Predicated region
  $region22: #{deep_prompt_clip_forward.6} parent=0 // pred_check
    _
  $region23: #{deep_prompt_clip_forward.6} parent=0 // pred_check_branch
    %73 = sbr.rel (0) target = $region25
  $region24: #{deep_prompt_clip_forward.6} parent=0 // pred_region
    _
  $region25: #{deep_prompt_clip_forward.6} parent=0 // pred_fallthru
    _

// kernel: deep_prompt_clip_forward.7
$region0: #{deep_prompt_clip_forward.7}
  #allocation0 [shape = 'u32[]', space=smem, size = 0x4, offset = 0x4, fixed_abs, tag = 'smem constant byte address 0x4 - core index']
  #allocation1 [shape = 'u32[144,128]{1,0:T(1,128)}', space=vmem, size = 0x12000, scoped, tag = 'internal scratch']
  %s0 = inlined_call_operand.vmem [shape: f32[2,5,32], index: 0, kind: input, shape index: {}]
  %s1 = inlined_call_operand.vmem [shape: f32[1,32], index: 1, kind: input, shape index: {}]
  %s2 = inlined_call_operand.vmem [shape: f32[1,32], index: 2, kind: input, shape index: {}]
  %s3 = inlined_call_operand.vmem [shape: bf16[32,96], index: 3, kind: input, shape index: {}]
  %s4 = inlined_call_operand.vmem [shape: f32[1,96], index: 4, kind: input, shape index: {}]
  %s5 = inlined_call_operand.vmem [shape: bf16[32,32], index: 5, kind: input, shape index: {}]
  %s6 = inlined_call_operand.vmem [shape: f32[1,32], index: 6, kind: input, shape index: {}]
  %s7 = inlined_call_operand.vmem [shape: f32[1,32], index: 7, kind: input, shape index: {}]
  %s8 = inlined_call_operand.vmem [shape: f32[1,32], index: 8, kind: input, shape index: {}]
  %s9 = inlined_call_operand.vmem [shape: bf16[32,128], index: 9, kind: input, shape index: {}]
  %s10 = inlined_call_operand.vmem [shape: f32[1,128], index: 10, kind: input, shape index: {}]
  %s11 = inlined_call_operand.vmem [shape: bf16[128,32], index: 11, kind: input, shape index: {}]
  %s12 = inlined_call_operand.vmem [shape: f32[1,32], index: 12, kind: input, shape index: {}]
  %s13 = inlined_call_operand.vmem [shape: f32[2,5,32], index: 13, kind: output, shape index: {}]
  %s14 = sld [smem:[#allocation0]]
  $region85: #{deep_prompt_clip_forward.7} parent=0
    _
  %s16 = ssub.s32 1, %s14
  %s17 = scalar_select 0, %s16, %s14
  loop: start=0, step=1, limit=4
  $region2: #{deep_prompt_clip_forward.7} parent=0 // loop_pre_header
    _
  $region3: #{deep_prompt_clip_forward.7} parent=0 // loop_header
    %s19 = sphi 0, %s23
    %p20 = scmp.ge.s32.totalorder %s19, 4
    %s29 = sphi 0, %s31
    %s32 = sphi 0, %s29
    %s33 = sphi 0, %s32
    %s49 = sphi 0, %s33
    %s53 = sphi 0, %s53
    %s55 = sphi 0, %s53
    %s56 = sphi 0, %s55
    %s70 = sphi 0, %s56
    %s74 = sphi 0, %s74
    %s76 = sphi 0, %s74
    %s77 = sphi 0, %s76
    %s91 = sphi 0, %s77
    %s95 = sphi 0, %s95
    %s97 = sphi 0, %s95
    %s98 = sphi 0, %s97
    %s112 = sphi 0, %s98
    %s116 = sphi 0, %s116
    %s118 = sphi 0, %s116
    %s119 = sphi 0, %s118
    %s133 = sphi 0, %s119
    %s137 = sphi 0, %s137
    %s139 = sphi 0, %s137
    %s140 = sphi 0, %s139
    %s154 = sphi 0, %s140
    %s158 = sphi 0, %s158
    %s160 = sphi 0, %s158
    %s161 = sphi 0, %s160
    %s175 = sphi 0, %s161
    %s179 = sphi 0, %s179
    %s181 = sphi 0, %s179
    %s182 = sphi 0, %s181
    %s196 = sphi 0, %s182
    %s200 = sphi 0, %s200
    %s202 = sphi 0, %s200
    %s203 = sphi 0, %s202
    %s217 = sphi 0, %s203
    %s221 = sphi 0, %s221
    %s223 = sphi 0, %s221
    %s224 = sphi 0, %s223
    %s238 = sphi 0, %s224
    %s242 = sphi 0, %s242
    %s244 = sphi 0, %s242
    %s245 = sphi 0, %s244
    %s259 = sphi 0, %s245
    %s263 = sphi 0, %s263
    %s265 = sphi 0, %s263
    %s266 = sphi 0, %s265
    %s280 = sphi 0, %s266
    %s284 = sphi 0, %s284
    %s286 = sphi 0, %s284
    %s287 = sphi 0, %s286
    %s301 = sphi 0, %s287
    %s307 = sphi 0, %s309
    %s310 = sphi 0, %s307
    %s311 = sphi 0, %s310
    %s327 = sphi 0, %s311
  $region4: #{deep_prompt_clip_forward.7} parent=0 // loop_header_branch
    %22 = sbr.rel (%p20) target = $region8
  $region5: #{deep_prompt_clip_forward.7} parent=0 // loop_body
    %s24 = ssub.s32 %s19, 1
    %s25 = ssub.s32 %s19, 2
    %s26 = sadd.s32 %s19, 1
    %s27 = ssub.s32 %s19, %s26
    %p28 = scmp.eq.s32.totalorder %s27, 0
    %s30 = sadd.s32 %s29, 1
    %s31 = scalar_select %p28, %s29, %s30
    %p34 = pneg %p28
    %p35 = scmp.eq.s32.totalorder %s19, 1
    %p36 = por %p34, %p35
    %p37 = scmp.ne.s32.totalorder %s29, %s32
    %p38 = scmp.eq.s32.totalorder %s19, 0
    %p39 = por %p37, %p38
    %p40 = scmp.ne.s32.totalorder %s29, %s32
    %p41 = scmp.eq.s32.totalorder %s24, 1
    %p42 = por %p40, %p41
    %p43 = scmp.ne.s32.totalorder %s32, %s33
    %p44 = scmp.eq.s32.totalorder %s24, 0
    %p45 = por %p43, %p44
    %p46 = scmp.ne.s32.totalorder %s32, %s33
    %p47 = scmp.eq.s32.totalorder %s25, 1
    %p48 = por %p46, %p47
    %p50 = scmp.ne.s32.totalorder %s33, %s49
    %p51 = scmp.eq.s32.totalorder %s25, 0
    %p52 = por %p50, %p51
    %s54 = sadd.s32 %s53, 1
    %p57 = scmp.eq.s32.totalorder %s19, 1
    %p58 = scmp.ne.s32.totalorder %s53, %s55
    %p59 = scmp.eq.s32.totalorder %s19, 0
    %p60 = por %p58, %p59
    %p61 = scmp.ne.s32.totalorder %s53, %s55
    %p62 = scmp.eq.s32.totalorder %s24, 1
    %p63 = por %p61, %p62
    %p64 = scmp.ne.s32.totalorder %s55, %s56
    %p65 = scmp.eq.s32.totalorder %s24, 0
    %p66 = por %p64, %p65
    %p67 = scmp.ne.s32.totalorder %s55, %s56
    %p68 = scmp.eq.s32.totalorder %s25, 1
    %p69 = por %p67, %p68
    %p71 = scmp.ne.s32.totalorder %s56, %s70
    %p72 = scmp.eq.s32.totalorder %s25, 0
    %p73 = por %p71, %p72
    %s75 = sadd.s32 %s74, 1
    %p78 = scmp.eq.s32.totalorder %s19, 1
    %p79 = scmp.ne.s32.totalorder %s74, %s76
    %p80 = scmp.eq.s32.totalorder %s19, 0
    %p81 = por %p79, %p80
    %p82 = scmp.ne.s32.totalorder %s74, %s76
    %p83 = scmp.eq.s32.totalorder %s24, 1
    %p84 = por %p82, %p83
    %p85 = scmp.ne.s32.totalorder %s76, %s77
    %p86 = scmp.eq.s32.totalorder %s24, 0
    %p87 = por %p85, %p86
    %p88 = scmp.ne.s32.totalorder %s76, %s77
    %p89 = scmp.eq.s32.totalorder %s25, 1
    %p90 = por %p88, %p89
    %p92 = scmp.ne.s32.totalorder %s77, %s91
    %p93 = scmp.eq.s32.totalorder %s25, 0
    %p94 = por %p92, %p93
    %s96 = sadd.s32 %s95, 1
    %p99 = scmp.eq.s32.totalorder %s19, 1
    %p100 = scmp.ne.s32.totalorder %s95, %s97
    %p101 = scmp.eq.s32.totalorder %s19, 0
    %p102 = por %p100, %p101
    %p103 = scmp.ne.s32.totalorder %s95, %s97
    %p104 = scmp.eq.s32.totalorder %s24, 1
    %p105 = por %p103, %p104
    %p106 = scmp.ne.s32.totalorder %s97, %s98
    %p107 = scmp.eq.s32.totalorder %s24, 0
    %p108 = por %p106, %p107
    %p109 = scmp.ne.s32.totalorder %s97, %s98
    %p110 = scmp.eq.s32.totalorder %s25, 1
    %p111 = por %p109, %p110
    %p113 = scmp.ne.s32.totalorder %s98, %s112
    %p114 = scmp.eq.s32.totalorder %s25, 0
    %p115 = por %p113, %p114
    %s117 = sadd.s32 %s116, 1
    %p120 = scmp.eq.s32.totalorder %s19, 1
    %p121 = scmp.ne.s32.totalorder %s116, %s118
    %p122 = scmp.eq.s32.totalorder %s19, 0
    %p123 = por %p121, %p122
    %p124 = scmp.ne.s32.totalorder %s116, %s118
    %p125 = scmp.eq.s32.totalorder %s24, 1
    %p126 = por %p124, %p125
    %p127 = scmp.ne.s32.totalorder %s118, %s119
    %p128 = scmp.eq.s32.totalorder %s24, 0
    %p129 = por %p127, %p128
    %p130 = scmp.ne.s32.totalorder %s118, %s119
    %p131 = scmp.eq.s32.totalorder %s25, 1
    %p132 = por %p130, %p131
    %p134 = scmp.ne.s32.totalorder %s119, %s133
    %p135 = scmp.eq.s32.totalorder %s25, 0
    %p136 = por %p134, %p135
    %s138 = sadd.s32 %s137, 1
    %p141 = scmp.eq.s32.totalorder %s19, 1
    %p142 = scmp.ne.s32.totalorder %s137, %s139
    %p143 = scmp.eq.s32.totalorder %s19, 0
    %p144 = por %p142, %p143
    %p145 = scmp.ne.s32.totalorder %s137, %s139
    %p146 = scmp.eq.s32.totalorder %s24, 1
    %p147 = por %p145, %p146
    %p148 = scmp.ne.s32.totalorder %s139, %s140
    %p149 = scmp.eq.s32.totalorder %s24, 0
    %p150 = por %p148, %p149
    %p151 = scmp.ne.s32.totalorder %s139, %s140
    %p152 = scmp.eq.s32.totalorder %s25, 1
    %p153 = por %p151, %p152
    %p155 = scmp.ne.s32.totalorder %s140, %s154
    %p156 = scmp.eq.s32.totalorder %s25, 0
    %p157 = por %p155, %p156
    %s159 = sadd.s32 %s158, 1
    %p162 = scmp.eq.s32.totalorder %s19, 1
    %p163 = scmp.ne.s32.totalorder %s158, %s160
    %p164 = scmp.eq.s32.totalorder %s19, 0
    %p165 = por %p163, %p164
    %p166 = scmp.ne.s32.totalorder %s158, %s160
    %p167 = scmp.eq.s32.totalorder %s24, 1
    %p168 = por %p166, %p167
    %p169 = scmp.ne.s32.totalorder %s160, %s161
    %p170 = scmp.eq.s32.totalorder %s24, 0
    %p171 = por %p169, %p170
    %p172 = scmp.ne.s32.totalorder %s160, %s161
    %p173 = scmp.eq.s32.totalorder %s25, 1
    %p174 = por %p172, %p173
    %p176 = scmp.ne.s32.totalorder %s161, %s175
    %p177 = scmp.eq.s32.totalorder %s25, 0
    %p178 = por %p176, %p177
    %s180 = sadd.s32 %s179, 1
    %p183 = scmp.eq.s32.totalorder %s19, 1
    %p184 = scmp.ne.s32.totalorder %s179, %s181
    %p185 = scmp.eq.s32.totalorder %s19, 0
    %p186 = por %p184, %p185
    %p187 = scmp.ne.s32.totalorder %s179, %s181
    %p188 = scmp.eq.s32.totalorder %s24, 1
    %p189 = por %p187, %p188
    %p190 = scmp.ne.s32.totalorder %s181, %s182
    %p191 = scmp.eq.s32.totalorder %s24, 0
    %p192 = por %p190, %p191
    %p193 = scmp.ne.s32.totalorder %s181, %s182
    %p194 = scmp.eq.s32.totalorder %s25, 1
    %p195 = por %p193, %p194
    %p197 = scmp.ne.s32.totalorder %s182, %s196
    %p198 = scmp.eq.s32.totalorder %s25, 0
    %p199 = por %p197, %p198
    %s201 = sadd.s32 %s200, 1
    %p204 = scmp.eq.s32.totalorder %s19, 1
    %p205 = scmp.ne.s32.totalorder %s200, %s202
    %p206 = scmp.eq.s32.totalorder %s19, 0
    %p207 = por %p205, %p206
    %p208 = scmp.ne.s32.totalorder %s200, %s202
    %p209 = scmp.eq.s32.totalorder %s24, 1
    %p210 = por %p208, %p209
    %p211 = scmp.ne.s32.totalorder %s202, %s203
    %p212 = scmp.eq.s32.totalorder %s24, 0
    %p213 = por %p211, %p212
    %p214 = scmp.ne.s32.totalorder %s202, %s203
    %p215 = scmp.eq.s32.totalorder %s25, 1
    %p216 = por %p214, %p215
    %p218 = scmp.ne.s32.totalorder %s203, %s217
    %p219 = scmp.eq.s32.totalorder %s25, 0
    %p220 = por %p218, %p219
    %s222 = sadd.s32 %s221, 1
    %p225 = scmp.eq.s32.totalorder %s19, 1
    %p226 = scmp.ne.s32.totalorder %s221, %s223
    %p227 = scmp.eq.s32.totalorder %s19, 0
    %p228 = por %p226, %p227
    %p229 = scmp.ne.s32.totalorder %s221, %s223
    %p230 = scmp.eq.s32.totalorder %s24, 1
    %p231 = por %p229, %p230
    %p232 = scmp.ne.s32.totalorder %s223, %s224
    %p233 = scmp.eq.s32.totalorder %s24, 0
    %p234 = por %p232, %p233
    %p235 = scmp.ne.s32.totalorder %s223, %s224
    %p236 = scmp.eq.s32.totalorder %s25, 1
    %p237 = por %p235, %p236
    %p239 = scmp.ne.s32.totalorder %s224, %s238
    %p240 = scmp.eq.s32.totalorder %s25, 0
    %p241 = por %p239, %p240
    %s243 = sadd.s32 %s242, 1
    %p246 = scmp.eq.s32.totalorder %s19, 1
    %p247 = scmp.ne.s32.totalorder %s242, %s244
    %p248 = scmp.eq.s32.totalorder %s19, 0
    %p249 = por %p247, %p248
    %p250 = scmp.ne.s32.totalorder %s242, %s244
    %p251 = scmp.eq.s32.totalorder %s24, 1
    %p252 = por %p250, %p251
    %p253 = scmp.ne.s32.totalorder %s244, %s245
    %p254 = scmp.eq.s32.totalorder %s24, 0
    %p255 = por %p253, %p254
    %p256 = scmp.ne.s32.totalorder %s244, %s245
    %p257 = scmp.eq.s32.totalorder %s25, 1
    %p258 = por %p256, %p257
    %p260 = scmp.ne.s32.totalorder %s245, %s259
    %p261 = scmp.eq.s32.totalorder %s25, 0
    %p262 = por %p260, %p261
    %s264 = sadd.s32 %s263, 1
    %p267 = scmp.eq.s32.totalorder %s19, 1
    %p268 = scmp.ne.s32.totalorder %s263, %s265
    %p269 = scmp.eq.s32.totalorder %s19, 0
    %p270 = por %p268, %p269
    %p271 = scmp.ne.s32.totalorder %s263, %s265
    %p272 = scmp.eq.s32.totalorder %s24, 1
    %p273 = por %p271, %p272
    %p274 = scmp.ne.s32.totalorder %s265, %s266
    %p275 = scmp.eq.s32.totalorder %s24, 0
    %p276 = por %p274, %p275
    %p277 = scmp.ne.s32.totalorder %s265, %s266
    %p278 = scmp.eq.s32.totalorder %s25, 1
    %p279 = por %p277, %p278
    %p281 = scmp.ne.s32.totalorder %s266, %s280
    %p282 = scmp.eq.s32.totalorder %s25, 0
    %p283 = por %p281, %p282
    %s285 = sadd.s32 %s284, 1
    %p288 = scmp.eq.s32.totalorder %s19, 1
    %p289 = scmp.ne.s32.totalorder %s284, %s286
    %p290 = scmp.eq.s32.totalorder %s19, 0
    %p291 = por %p289, %p290
    %p292 = scmp.ne.s32.totalorder %s284, %s286
    %p293 = scmp.eq.s32.totalorder %s24, 1
    %p294 = por %p292, %p293
    %p295 = scmp.ne.s32.totalorder %s286, %s287
    %p296 = scmp.eq.s32.totalorder %s24, 0
    %p297 = por %p295, %p296
    %p298 = scmp.ne.s32.totalorder %s286, %s287
    %p299 = scmp.eq.s32.totalorder %s25, 1
    %p300 = por %p298, %p299
    %p302 = scmp.ne.s32.totalorder %s287, %s301
    %p303 = scmp.eq.s32.totalorder %s25, 0
    %p304 = por %p302, %p303
    %s305 = ssub.s32 %s19, %s26
    %p306 = scmp.eq.s32.totalorder %s305, 0
    %s308 = sadd.s32 %s307, 1
    %s309 = scalar_select %p306, %s307, %s308
    %p312 = pneg %p306
    %p313 = scmp.eq.s32.totalorder %s19, 1
    %p314 = por %p312, %p313
    %p315 = scmp.ne.s32.totalorder %s307, %s310
    %p316 = scmp.eq.s32.totalorder %s19, 0
    %p317 = por %p315, %p316
    %p318 = scmp.ne.s32.totalorder %s307, %s310
    %p319 = scmp.eq.s32.totalorder %s24, 1
    %p320 = por %p318, %p319
    %p321 = scmp.ne.s32.totalorder %s310, %s311
    %p322 = scmp.eq.s32.totalorder %s24, 0
    %p323 = por %p321, %p322
    %p324 = scmp.ne.s32.totalorder %s310, %s311
    %p325 = scmp.eq.s32.totalorder %s25, 1
    %p326 = por %p324, %p325
    %p328 = scmp.ne.s32.totalorder %s311, %s327
    %p329 = scmp.eq.s32.totalorder %s25, 0
    %p330 = por %p328, %p329
    %p331 = scmp.le.s32.totalorder 1, %s19
    %p332 = scmp.lt.s32.totalorder %s19, 3
    %p333 = pnand %p331, %p332
    %p334 = pneg %p333
    // Predicated region
    $region9: #{deep_prompt_clip_forward.7} parent=5 // pred_check
      _
    $region10: #{deep_prompt_clip_forward.7} parent=5 // pred_check_branch
      %336 = sbr.rel (%p333) target = $region12
    $region11: #{deep_prompt_clip_forward.7} parent=5 // pred_region
      %s337 = ssub.s32 %s19, 1
      // Predicated region
      $region13: #{deep_prompt_clip_forward.7} parent=11 // pred_check
        %p338 = pneg %p66
      $region14: #{deep_prompt_clip_forward.7} parent=11 // pred_check_branch
        %340 = sbr.rel (%p338) target = $region16
      $region15: #{deep_prompt_clip_forward.7} parent=11 // pred_region
        _
      $region16: #{deep_prompt_clip_forward.7} parent=11 // pred_fallthru
        _
      // Predicated region
      $region17: #{deep_prompt_clip_forward.7} parent=11 // pred_check
        %p341 = pneg %p87
      $region18: #{deep_prompt_clip_forward.7} parent=11 // pred_check_branch
        %343 = sbr.rel (%p341) target = $region20
      $region19: #{deep_prompt_clip_forward.7} parent=11 // pred_region
        _
      $region20: #{deep_prompt_clip_forward.7} parent=11 // pred_fallthru
        _
      // Predicated region
      $region21: #{deep_prompt_clip_forward.7} parent=11 // pred_check
        %p344 = pneg %p108
      $region22: #{deep_prompt_clip_forward.7} parent=11 // pred_check_branch
        %346 = sbr.rel (%p344) target = $region24
      $region23: #{deep_prompt_clip_forward.7} parent=11 // pred_region
        _
      $region24: #{deep_prompt_clip_forward.7} parent=11 // pred_fallthru
        _
      // Predicated region
      $region25: #{deep_prompt_clip_forward.7} parent=11 // pred_check
        %p347 = pneg %p129
      $region26: #{deep_prompt_clip_forward.7} parent=11 // pred_check_branch
        %349 = sbr.rel (%p347) target = $region28
      $region27: #{deep_prompt_clip_forward.7} parent=11 // pred_region
        _
      $region28: #{deep_prompt_clip_forward.7} parent=11 // pred_fallthru
        _
      // Predicated region
      $region29: #{deep_prompt_clip_forward.7} parent=11 // pred_check
        %p350 = pneg %p150
      $region30: #{deep_prompt_clip_forward.7} parent=11 // pred_check_branch
        %352 = sbr.rel (%p350) target = $region32
      $region31: #{deep_prompt_clip_forward.7} parent=11 // pred_region
        _
      $region32: #{deep_prompt_clip_forward.7} parent=11 // pred_fallthru
        _
      // Predicated region
      $region33: #{deep_prompt_clip_forward.7} parent=11 // pred_check
        %p353 = pneg %p171
      $region34: #{deep_prompt_clip_forward.7} parent=11 // pred_check_branch
        %355 = sbr.rel (%p353) target = $region36
      $region35: #{deep_prompt_clip_forward.7} parent=11 // pred_region
        _
      $region36: #{deep_prompt_clip_forward.7} parent=11 // pred_fallthru
        _
      // Predicated region
      $region37: #{deep_prompt_clip_forward.7} parent=11 // pred_check
        %p356 = pneg %p192
      $region38: #{deep_prompt_clip_forward.7} parent=11 // pred_check_branch
        %358 = sbr.rel (%p356) target = $region40
      $region39: #{deep_prompt_clip_forward.7} parent=11 // pred_region
        _
      $region40: #{deep_prompt_clip_forward.7} parent=11 // pred_fallthru
        _
      // Predicated region
      $region41: #{deep_prompt_clip_forward.7} parent=11 // pred_check
        %p359 = pneg %p213
      $region42: #{deep_prompt_clip_forward.7} parent=11 // pred_check_branch
        %361 = sbr.rel (%p359) target = $region44
      $region43: #{deep_prompt_clip_forward.7} parent=11 // pred_region
        _
      $region44: #{deep_prompt_clip_forward.7} parent=11 // pred_fallthru
        _
      // Predicated region
      $region45: #{deep_prompt_clip_forward.7} parent=11 // pred_check
        %p362 = pneg %p234
      $region46: #{deep_prompt_clip_forward.7} parent=11 // pred_check_branch
        %364 = sbr.rel (%p362) target = $region48
      $region47: #{deep_prompt_clip_forward.7} parent=11 // pred_region
        _
      $region48: #{deep_prompt_clip_forward.7} parent=11 // pred_fallthru
        _
      // Predicated region
      $region49: #{deep_prompt_clip_forward.7} parent=11 // pred_check
        %p365 = pneg %p255
      $region50: #{deep_prompt_clip_forward.7} parent=11 // pred_check_branch
        %367 = sbr.rel (%p365) target = $region52
      $region51: #{deep_prompt_clip_forward.7} parent=11 // pred_region
        _
      $region52: #{deep_prompt_clip_forward.7} parent=11 // pred_fallthru
        _
      // Predicated region
      $region53: #{deep_prompt_clip_forward.7} parent=11 // pred_check
        %p368 = pneg %p276
      $region54: #{deep_prompt_clip_forward.7} parent=11 // pred_check_branch
        %370 = sbr.rel (%p368) target = $region56
      $region55: #{deep_prompt_clip_forward.7} parent=11 // pred_region
        _
      $region56: #{deep_prompt_clip_forward.7} parent=11 // pred_fallthru
        _
      // Predicated region
      $region57: #{deep_prompt_clip_forward.7} parent=11 // pred_check
        %p371 = pneg %p297
      $region58: #{deep_prompt_clip_forward.7} parent=11 // pred_check_branch
        %373 = sbr.rel (%p371) target = $region60
      $region59: #{deep_prompt_clip_forward.7} parent=11 // pred_region
        _
      $region60: #{deep_prompt_clip_forward.7} parent=11 // pred_fallthru
        _
    $region12: #{deep_prompt_clip_forward.7} parent=5 // pred_fallthru
      _
    %p374 = scmp.lt.s32.totalorder %s19, 2
    // Predicated region
    $region61: #{deep_prompt_clip_forward.7} parent=5 // pred_check
      %p375 = pneg %p374
    $region62: #{deep_prompt_clip_forward.7} parent=5 // pred_check_branch
      %377 = sbr.rel (%p375) target = $region64
    $region63: #{deep_prompt_clip_forward.7} parent=5 // pred_region
      // Predicated region
      $region65: #{deep_prompt_clip_forward.7} parent=63 // pred_check
        %p378 = pneg %p39
      $region66: #{deep_prompt_clip_forward.7} parent=63 // pred_check_branch
        %380 = sbr.rel (%p378) target = $region68
      $region67: #{deep_prompt_clip_forward.7} parent=63 // pred_region
        %p381 = scmp.lt.s32.totalorder %s19, 1
        %s382 = scalar_select %p381, %s19, 1
        %s383 = smul.addr %s382, 8
        %s384 = scalar_lea.vmem %s0, %s383
      $region68: #{deep_prompt_clip_forward.7} parent=63 // pred_fallthru
        _
    $region64: #{deep_prompt_clip_forward.7} parent=5 // pred_fallthru
      _
    %p385 = scmp.le.s32.totalorder 1, %s19
    %p386 = scmp.lt.s32.totalorder %s19, 3
    %p387 = pnand %p385, %p386
    %p388 = pneg %p387
    // Predicated region
    $region69: #{deep_prompt_clip_forward.7} parent=5 // pred_check
      _
    $region70: #{deep_prompt_clip_forward.7} parent=5 // pred_check_branch
      %390 = sbr.rel (%p387) target = $region72
    $region71: #{deep_prompt_clip_forward.7} parent=5 // pred_region
      %s391 = ssub.s32 %s19, 1
      %p392 = scmp.lt.s32.totalorder %s24, 1
      %s393 = scalar_select %p392, %s24, 1
      %s394 = smul.addr %s393, 8
      %s395 = scalar_lea.vmem %s0, %s394
      %p396 = pneg %p45
      %p397 = pneg %p42
      %p398 = pneg %p66
      %p399 = pneg %p63
      %p400 = pneg %p87
      %p401 = pneg %p84
      %p402 = pneg %p108
      %p403 = pneg %p105
      %p404 = pneg %p129
      %p405 = pneg %p126
      %p406 = pneg %p150
      %p407 = pneg %p147
      %p408 = pneg %p171
      %p409 = pneg %p168
      %p410 = pneg %p192
      %p411 = pneg %p189
      %p412 = pneg %p213
      %p413 = pneg %p210
      %p414 = pneg %p234
      %p415 = pneg %p231
      %p416 = pneg %p255
      %p417 = pneg %p252
      %p418 = pneg %p276
      %p419 = pneg %p273
      %p420 = pneg %p297
      %p421 = pneg %p294
      %p422 = pneg %p323
      %p423 = pneg %p320
      %p424 = scmp.lt.s32.totalorder %s24, 1
      %s425 = scalar_select %p424, %s24, 1
      %s426 = smul.addr %s425, 8
      %s427 = scalar_lea.vmem %s13, %s426
      %p428 = scmp.lt.s32.totalorder %s24, 1
      %s429 = scalar_select %p428, %s24, 1
      %s430 = smul.addr %s429, 8
      %s431 = scalar_lea.vmem %s0, %s430
      %p432 = scmp.lt.s32.totalorder %s24, 1
      %s433 = scalar_select %p432, %s24, 1
      %s434 = smul.addr %s433, 8
      %s435 = scalar_lea.vmem %s13, %s434
      %v437 = vld [vmem:[%s431] sm:$0x1f]
      %v438 = vld [vmem:[%s1] sm:$0x1]
      %v439 = vld [vmem:[%s2] sm:$0x1]
      %vm440 = vcmask 258048
      %v441 = vsel %vm440, %v437, 0.0
      %442 = vadd.xlane.f32.xlu0 %v441
      %v443 = vpop.xlane.xlu0 %442
      %v444 = vrcp.pop 32.0
      %v445 = vmul.f32 %v443, %v444
      %v446 = vsub.f32 %v437, %v445
      %v447 = vmul.f32 %v446, %v446
      %v448 = vsel %vm440, %v447, 0.0
      %449 = vadd.xlane.f32.xlu0 %v448
      %v450 = vpop.xlane.xlu0 %449
      %v451 = vmul.f32 %v450, %v444
      %v452 = vadd.f32 %v451, 1e-05
      %v453 = vrsqrt.pop %v452
      %v454 = vmul.f32 %v446, %v453
      %v456 = vlaneseq
      %v457 = vshrl.u32 %v456, 7
      %v458 = vsub.s32 0, %v457
      %v459 = vrot.slane %v438, %v458
      %v461 = vmul.f32 %v454, %v459
      %v463 = vlaneseq
      %v464 = vshrl.u32 %v463, 7
      %v465 = vsub.s32 0, %v464
      %v466 = vrot.slane %v439, %v465
      %v468 = vadd.f32 %v461, %v466
      %v469 = vpack.c.bf16 %v468, %v468
      %v470 = vld [vmem:[%s3] sm:$0xf]
      %v471 = vld [vmem:[%s3 + $0x4] sm:$0xf]
      %v472 = vld [vmem:[%s3 + $0x8] sm:$0xf]
      %v473 = vld [vmem:[%s3 + $0xc] sm:$0xf]
      %v474 = vld [vmem:[%s4] sm:$0x1]
      %v476 = vlaneseq
      %v477 = vshrl.u32 %v476, 7
      %v478 = vsub.s32 0, %v477
      %v479 = vrot.slane %v474, %v478
      %v485 = vunpack.c.l.b16 %v470
      %v486 = vunpack.c.l.b16 %v471
      %v487 = vunpack.c.l.b16 %v472
      %v488 = vunpack.c.l.b16 %v473
      %v489 = vpack.c.b16 %v486, %v485
      %v490 = vpack.c.b16 %v488, %v487
      %vm493 = vcmask 261120
      %v495 = vsel %vm493, %v469, 0
      %497 = vmatprep.subr.bf16.mxu0 0
      %498 = vmatpush1.bf16.msra.mxu0 %v489
      %499 = vmatprep.subr.bf16.mxu0 0
      %500 = vmatpush1.bf16.msra.mxu0 %v490
      %501 = vmatprep.subr.bf16.mxu0 0
      %502 = vmatpush1.bf16.msra.mxu0 0
      %503 = vmatprep.subr.bf16.mxu0 0
      %504 = vmatpush1.bf16.msra.mxu0 0
      %505 = vmatprep.subr.bf16.mxu0 0
      %506 = vmatpush1.bf16.msra.mxu0 0
      %507 = vmatprep.subr.bf16.mxu0 0
      %508 = vmatpush1.bf16.msra.mxu0 0
      %509 = vmatprep.subr.bf16.mxu0 0
      %510 = vmatpush1.bf16.msra.mxu0 0
      %511 = vmatprep.subr.bf16.mxu0 0
      %512 = vmatpush1.bf16.msra.mxu0 0
      %513 = vmatprep.subr.bf16.mxu0 0
      %514 = vmatpush1.bf16.msra.mxu0 0
      %515 = vmatprep.subr.bf16.mxu0 0
      %516 = vmatpush1.bf16.msra.mxu0 0
      %517 = vmatprep.subr.bf16.mxu0 0
      %518 = vmatpush1.bf16.msra.mxu0 0
      %519 = vmatprep.subr.bf16.mxu0 0
      %520 = vmatpush1.bf16.msra.mxu0 0
      %521 = vmatprep.subr.bf16.mxu0 0
      %522 = vmatpush1.bf16.msra.mxu0 0
      %523 = vmatprep.subr.bf16.mxu0 0
      %524 = vmatpush1.bf16.msra.mxu0 0
      %525 = vmatprep.subr.bf16.mxu0 0
      %526 = vmatpush1.bf16.msra.mxu0 0
      %527 = vmatprep.subr.bf16.mxu0 0
      %528 = vmatpush1.bf16.msra.mxu0 0
      %529 = vmatprep.mubr.bf16.mxu0 0
      %530 = vmatmul.mubr.bf16.gmra.mrb[0].mxu0 %v495
      %v531 = vpop.f32.mrb[0].mxu0
      %v532 = vadd.f32 %v479, %v531
      %v533 = vpop.f32.mrb[0].mxu0
      %v534 = vpop.f32.mrb[0].mxu0
      %v535 = vpop.f32.mrb[0].mxu0
      %536 = vdwg.mxu0
      %v537 = vpack.c.bf16 %v532, %v532
      %539 = vrot.lane.b32.xlu0 %v537, 96
      %v540 = vpop.permute.xlu0 %539
      %vm541 = vcmask 64512
      %v543 = vsel %vm541, %v537, 0
      %v546 = vsel %vm541, %v540, 0
      %548 = vmatprep.subr.bf16.mxu0 0
      %549 = vmatpush1.bf16.xpose.msra.mxu0 %v546
      %550 = vmatprep.subr.bf16.mxu0 0
      %551 = vmatpush1.bf16.xpose.msra.mxu0 0
      %552 = vmatprep.subr.bf16.mxu0 0
      %553 = vmatpush1.bf16.xpose.msra.mxu0 0
      %554 = vmatprep.subr.bf16.mxu0 0
      %555 = vmatpush1.bf16.xpose.msra.mxu0 0
      %556 = vmatprep.subr.bf16.mxu0 0
      %557 = vmatpush1.bf16.xpose.msra.mxu0 0
      %558 = vmatprep.subr.bf16.mxu0 0
      %559 = vmatpush1.bf16.xpose.msra.mxu0 0
      %560 = vmatprep.subr.bf16.mxu0 0
      %561 = vmatpush1.bf16.xpose.msra.mxu0 0
      %562 = vmatprep.subr.bf16.mxu0 0
      %563 = vmatpush1.bf16.xpose.msra.mxu0 0
      %564 = vmatprep.subr.bf16.mxu0 0
      %565 = vmatpush1.bf16.xpose.msra.mxu0 0
      %566 = vmatprep.subr.bf16.mxu0 0
      %567 = vmatpush1.bf16.xpose.msra.mxu0 0
      %568 = vmatprep.subr.bf16.mxu0 0
      %569 = vmatpush1.bf16.xpose.msra.mxu0 0
      %570 = vmatprep.subr.bf16.mxu0 0
      %571 = vmatpush1.bf16.xpose.msra.mxu0 0
      %572 = vmatprep.subr.bf16.mxu0 0
      %573 = vmatpush1.bf16.xpose.msra.mxu0 0
      %574 = vmatprep.subr.bf16.mxu0 0
      %575 = vmatpush1.bf16.xpose.msra.mxu0 0
      %576 = vmatprep.subr.bf16.mxu0 0
      %577 = vmatpush1.bf16.xpose.msra.mxu0 0
      %578 = vmatprep.subr.bf16.mxu0 0
      %579 = vmatpush1.bf16.xpose.msra.mxu0 0
      %580 = vmatprep.mubr.bf16.mxu0 0
      %581 = vmatmul.mubr.bf16.gmra.mrb[0].mxu0 %v543
      %v582 = vpop.f32.mrb[0].mxu0
      %v583 = vadd.f32 0.0, %v582
      %v584 = vpop.f32.mrb[0].mxu0
      %v585 = vpop.f32.mrb[0].mxu0
      %v586 = vpop.f32.mrb[0].mxu0
      %587 = vdwg.mxu0
      %vm588 = vcmask 36864
      %v589 = vsel %vm588, %v583, -inf
      %590 = vmax.xlane.f32.xlu0 %v589
      %v591 = vpop.xlane.xlu0 %590
      %v592 = vsub.f32 %v583, %v591
      %v593 = vmul.f32 %v592, 1.442695
      %v594 = vpow.pop %v593
      %v595 = vsel %vm588, %v594, 0.0
      %596 = vadd.xlane.f32.xlu0 %v595
      %v597 = vpop.xlane.xlu0 %596
      %v598 = vrcp.pop %v597
      %v599 = vmul.f32 %v594, %v598
      %v600 = vpack.c.bf16 %v599, %v599
      %601 = vrot.lane.b32.xlu0 %v537, 64
      %v602 = vpop.permute.xlu0 %601
      %vm603 = vcmask 39936
      %v605 = vsel %vm603, %v600, 0
      %vm607 = vcmask 1041408
      %vm608 = vcmask 1042432
      %v609 = vsel %vm607, 4294967295, 65535
      %v610 = vsel %vm608, %v609, 0
      %v612 = vand.u32 %v602, %v610
      %614 = vmatprep.subr.bf16.mxu0 0
      %615 = vmatpush1.bf16.msra.mxu0 %v612
      %616 = vmatprep.subr.bf16.mxu0 0
      %617 = vmatpush1.bf16.msra.mxu0 0
      %618 = vmatprep.subr.bf16.mxu0 0
      %619 = vmatpush1.bf16.msra.mxu0 0
      %620 = vmatprep.subr.bf16.mxu0 0
      %621 = vmatpush1.bf16.msra.mxu0 0
      %622 = vmatprep.subr.bf16.mxu0 0
      %623 = vmatpush1.bf16.msra.mxu0 0
      %624 = vmatprep.subr.bf16.mxu0 0
      %625 = vmatpush1.bf16.msra.mxu0 0
      %626 = vmatprep.subr.bf16.mxu0 0
      %627 = vmatpush1.bf16.msra.mxu0 0
      %628 = vmatprep.subr.bf16.mxu0 0
      %629 = vmatpush1.bf16.msra.mxu0 0
      %630 = vmatprep.subr.bf16.mxu0 0
      %631 = vmatpush1.bf16.msra.mxu0 0
      %632 = vmatprep.subr.bf16.mxu0 0
      %633 = vmatpush1.bf16.msra.mxu0 0
      %634 = vmatprep.subr.bf16.mxu0 0
      %635 = vmatpush1.bf16.msra.mxu0 0
      %636 = vmatprep.subr.bf16.mxu0 0
      %637 = vmatpush1.bf16.msra.mxu0 0
      %638 = vmatprep.subr.bf16.mxu0 0
      %639 = vmatpush1.bf16.msra.mxu0 0
      %640 = vmatprep.subr.bf16.mxu0 0
      %641 = vmatpush1.bf16.msra.mxu0 0
      %642 = vmatprep.subr.bf16.mxu0 0
      %643 = vmatpush1.bf16.msra.mxu0 0
      %644 = vmatprep.subr.bf16.mxu0 0
      %645 = vmatpush1.bf16.msra.mxu0 0
      %646 = vmatprep.mubr.bf16.mxu0 0
      %647 = vmatmul.mubr.bf16.gmra.mrb[0].mxu0 %v605
      %v648 = vpop.f32.mrb[0].mxu0
      %v649 = vadd.f32 0.0, %v648
      %v650 = vpop.f32.mrb[0].mxu0
      %v651 = vpop.f32.mrb[0].mxu0
      %v652 = vpop.f32.mrb[0].mxu0
      %653 = vdwg.mxu0
      %654 = vrot.lane.b32.xlu0 %v537, 120
      %v655 = vpop.permute.xlu0 %654
      %656 = vrot.lane.b32.xlu0 %v537, 88
      %v657 = vpop.permute.xlu0 %656
      %v659 = vsel %vm541, %v655, 0
      %v662 = vsel %vm541, %v657, 0
      %664 = vmatprep.subr.bf16.mxu0 0
      %665 = vmatpush1.bf16.xpose.msra.mxu0 %v662
      %666 = vmatprep.subr.bf16.mxu0 0
      %667 = vmatpush1.bf16.xpose.msra.mxu0 0
      %668 = vmatprep.subr.bf16.mxu0 0
      %669 = vmatpush1.bf16.xpose.msra.mxu0 0
      %670 = vmatprep.subr.bf16.mxu0 0
      %671 = vmatpush1.bf16.xpose.msra.mxu0 0
      %672 = vmatprep.subr.bf16.mxu0 0
      %673 = vmatpush1.bf16.xpose.msra.mxu0 0
      %674 = vmatprep.subr.bf16.mxu0 0
      %675 = vmatpush1.bf16.xpose.msra.mxu0 0
      %676 = vmatprep.subr.bf16.mxu0 0
      %677 = vmatpush1.bf16.xpose.msra.mxu0 0
      %678 = vmatprep.subr.bf16.mxu0 0
      %679 = vmatpush1.bf16.xpose.msra.mxu0 0
      %680 = vmatprep.subr.bf16.mxu0 0
      %681 = vmatpush1.bf16.xpose.msra.mxu0 0
      %682 = vmatprep.subr.bf16.mxu0 0
      %683 = vmatpush1.bf16.xpose.msra.mxu0 0
      %684 = vmatprep.subr.bf16.mxu0 0
      %685 = vmatpush1.bf16.xpose.msra.mxu0 0
      %686 = vmatprep.subr.bf16.mxu0 0
      %687 = vmatpush1.bf16.xpose.msra.mxu0 0
      %688 = vmatprep.subr.bf16.mxu0 0
      %689 = vmatpush1.bf16.xpose.msra.mxu0 0
      %690 = vmatprep.subr.bf16.mxu0 0
      %691 = vmatpush1.bf16.xpose.msra.mxu0 0
      %692 = vmatprep.subr.bf16.mxu0 0
      %693 = vmatpush1.bf16.xpose.msra.mxu0 0
      %694 = vmatprep.subr.bf16.mxu0 0
      %695 = vmatpush1.bf16.xpose.msra.mxu0 0
      %696 = vmatprep.mubr.bf16.mxu0 0
      %697 = vmatmul.mubr.bf16.gmra.mrb[0].mxu0 %v659
      %v698 = vpop.f32.mrb[0].mxu0
      %v699 = vadd.f32 0.0, %v698
      %v700 = vpop.f32.mrb[0].mxu0
      %v701 = vpop.f32.mrb[0].mxu0
      %v702 = vpop.f32.mrb[0].mxu0
      %703 = vdwg.mxu0
      %v704 = vsel %vm588, %v699, -inf
      %705 = vmax.xlane.f32.xlu0 %v704
      %v706 = vpop.xlane.xlu0 %705
      %v707 = vsub.f32 %v699, %v706
      %v708 = vmul.f32 %v707, 1.442695
      %v709 = vpow.pop %v708
      %v710 = vsel %vm588, %v709, 0.0
      %711 = vadd.xlane.f32.xlu0 %v710
      %v712 = vpop.xlane.xlu0 %711
      %v713 = vrcp.pop %v712
      %v714 = vmul.f32 %v709, %v713
      %v715 = vpack.c.bf16 %v714, %v714
      %716 = vrot.lane.b32.xlu0 %v537, 56
      %v717 = vpop.permute.xlu0 %716
      %v719 = vsel %vm603, %v715, 0
      %v722 = vand.u32 %v717, %v610
      %724 = vmatprep.subr.bf16.mxu0 0
      %725 = vmatpush1.bf16.msra.mxu0 %v722
      %726 = vmatprep.subr.bf16.mxu0 0
      %727 = vmatpush1.bf16.msra.mxu0 0
      %728 = vmatprep.subr.bf16.mxu0 0
      %729 = vmatpush1.bf16.msra.mxu0 0
      %730 = vmatprep.subr.bf16.mxu0 0
      %731 = vmatpush1.bf16.msra.mxu0 0
      %732 = vmatprep.subr.bf16.mxu0 0
      %733 = vmatpush1.bf16.msra.mxu0 0
      %734 = vmatprep.subr.bf16.mxu0 0
      %735 = vmatpush1.bf16.msra.mxu0 0
      %736 = vmatprep.subr.bf16.mxu0 0
      %737 = vmatpush1.bf16.msra.mxu0 0
      %738 = vmatprep.subr.bf16.mxu0 0
      %739 = vmatpush1.bf16.msra.mxu0 0
      %740 = vmatprep.subr.bf16.mxu0 0
      %741 = vmatpush1.bf16.msra.mxu0 0
      %742 = vmatprep.subr.bf16.mxu0 0
      %743 = vmatpush1.bf16.msra.mxu0 0
      %744 = vmatprep.subr.bf16.mxu0 0
      %745 = vmatpush1.bf16.msra.mxu0 0
      %746 = vmatprep.subr.bf16.mxu0 0
      %747 = vmatpush1.bf16.msra.mxu0 0
      %748 = vmatprep.subr.bf16.mxu0 0
      %749 = vmatpush1.bf16.msra.mxu0 0
      %750 = vmatprep.subr.bf16.mxu0 0
      %751 = vmatpush1.bf16.msra.mxu0 0
      %752 = vmatprep.subr.bf16.mxu0 0
      %753 = vmatpush1.bf16.msra.mxu0 0
      %754 = vmatprep.subr.bf16.mxu0 0
      %755 = vmatpush1.bf16.msra.mxu0 0
      %756 = vmatprep.mubr.bf16.mxu0 0
      %757 = vmatmul.mubr.bf16.gmra.mrb[0].mxu0 %v719
      %v758 = vpop.f32.mrb[0].mxu0
      %v759 = vadd.f32 0.0, %v758
      %v760 = vpop.f32.mrb[0].mxu0
      %v761 = vpop.f32.mrb[0].mxu0
      %v762 = vpop.f32.mrb[0].mxu0
      %763 = vdwg.mxu0
      %764 = vrot.lane.b32.xlu0 %v537, 112
      %v765 = vpop.permute.xlu0 %764
      %766 = vrot.lane.b32.xlu0 %v537, 80
      %v767 = vpop.permute.xlu0 %766
      %v769 = vsel %vm541, %v765, 0
      %v772 = vsel %vm541, %v767, 0
      %774 = vmatprep.subr.bf16.mxu0 0
      %775 = vmatpush1.bf16.xpose.msra.mxu0 %v772
      %776 = vmatprep.subr.bf16.mxu0 0
      %777 = vmatpush1.bf16.xpose.msra.mxu0 0
      %778 = vmatprep.subr.bf16.mxu0 0
      %779 = vmatpush1.bf16.xpose.msra.mxu0 0
      %780 = vmatprep.subr.bf16.mxu0 0
      %781 = vmatpush1.bf16.xpose.msra.mxu0 0
      %782 = vmatprep.subr.bf16.mxu0 0
      %783 = vmatpush1.bf16.xpose.msra.mxu0 0
      %784 = vmatprep.subr.bf16.mxu0 0
      %785 = vmatpush1.bf16.xpose.msra.mxu0 0
      %786 = vmatprep.subr.bf16.mxu0 0
      %787 = vmatpush1.bf16.xpose.msra.mxu0 0
      %788 = vmatprep.subr.bf16.mxu0 0
      %789 = vmatpush1.bf16.xpose.msra.mxu0 0
      %790 = vmatprep.subr.bf16.mxu0 0
      %791 = vmatpush1.bf16.xpose.msra.mxu0 0
      %792 = vmatprep.subr.bf16.mxu0 0
      %793 = vmatpush1.bf16.xpose.msra.mxu0 0
      %794 = vmatprep.subr.bf16.mxu0 0
      %795 = vmatpush1.bf16.xpose.msra.mxu0 0
      %796 = vmatprep.subr.bf16.mxu0 0
      %797 = vmatpush1.bf16.xpose.msra.mxu0 0
      %798 = vmatprep.subr.bf16.mxu0 0
      %799 = vmatpush1.bf16.xpose.msra.mxu0 0
      %800 = vmatprep.subr.bf16.mxu0 0
      %801 = vmatpush1.bf16.xpose.msra.mxu0 0
      %802 = vmatprep.subr.bf16.mxu0 0
      %803 = vmatpush1.bf16.xpose.msra.mxu0 0
      %804 = vmatprep.subr.bf16.mxu0 0
      %805 = vmatpush1.bf16.xpose.msra.mxu0 0
      %806 = vmatprep.mubr.bf16.mxu0 0
      %807 = vmatmul.mubr.bf16.gmra.mrb[0].mxu0 %v769
      %v808 = vpop.f32.mrb[0].mxu0
      %v809 = vadd.f32 0.0, %v808
      %v810 = vpop.f32.mrb[0].mxu0
      %v811 = vpop.f32.mrb[0].mxu0
      %v812 = vpop.f32.mrb[0].mxu0
      %813 = vdwg.mxu0
      %v814 = vsel %vm588, %v809, -inf
      %815 = vmax.xlane.f32.xlu0 %v814
      %v816 = vpop.xlane.xlu0 %815
      %v817 = vsub.f32 %v809, %v816
      %v818 = vmul.f32 %v817, 1.442695
      %v819 = vpow.pop %v818
      %v820 = vsel %vm588, %v819, 0.0
      %821 = vadd.xlane.f32.xlu0 %v820
      %v822 = vpop.xlane.xlu0 %821
      %v823 = vrcp.pop %v822
      %v824 = vmul.f32 %v819, %v823
      %v825 = vpack.c.bf16 %v824, %v824
      %826 = vrot.lane.b32.xlu0 %v537, 48
      %v827 = vpop.permute.xlu0 %826
      %v829 = vsel %vm603, %v825, 0
      %v832 = vand.u32 %v827, %v610
      %834 = vmatprep.subr.bf16.mxu0 0
      %835 = vmatpush1.bf16.msra.mxu0 %v832
      %836 = vmatprep.subr.bf16.mxu0 0
      %837 = vmatpush1.bf16.msra.mxu0 0
      %838 = vmatprep.subr.bf16.mxu0 0
      %839 = vmatpush1.bf16.msra.mxu0 0
      %840 = vmatprep.subr.bf16.mxu0 0
      %841 = vmatpush1.bf16.msra.mxu0 0
      %842 = vmatprep.subr.bf16.mxu0 0
      %843 = vmatpush1.bf16.msra.mxu0 0
      %844 = vmatprep.subr.bf16.mxu0 0
      %845 = vmatpush1.bf16.msra.mxu0 0
      %846 = vmatprep.subr.bf16.mxu0 0
      %847 = vmatpush1.bf16.msra.mxu0 0
      %848 = vmatprep.subr.bf16.mxu0 0
      %849 = vmatpush1.bf16.msra.mxu0 0
      %850 = vmatprep.subr.bf16.mxu0 0
      %851 = vmatpush1.bf16.msra.mxu0 0
      %852 = vmatprep.subr.bf16.mxu0 0
      %853 = vmatpush1.bf16.msra.mxu0 0
      %854 = vmatprep.subr.bf16.mxu0 0
      %855 = vmatpush1.bf16.msra.mxu0 0
      %856 = vmatprep.subr.bf16.mxu0 0
      %857 = vmatpush1.bf16.msra.mxu0 0
      %858 = vmatprep.subr.bf16.mxu0 0
      %859 = vmatpush1.bf16.msra.mxu0 0
      %860 = vmatprep.subr.bf16.mxu0 0
      %861 = vmatpush1.bf16.msra.mxu0 0
      %862 = vmatprep.subr.bf16.mxu0 0
      %863 = vmatpush1.bf16.msra.mxu0 0
      %864 = vmatprep.subr.bf16.mxu0 0
      %865 = vmatpush1.bf16.msra.mxu0 0
      %866 = vmatprep.mubr.bf16.mxu0 0
      %867 = vmatmul.mubr.bf16.gmra.mrb[0].mxu0 %v829
      %v868 = vpop.f32.mrb[0].mxu0
      %v869 = vadd.f32 0.0, %v868
      %v870 = vpop.f32.mrb[0].mxu0
      %v871 = vpop.f32.mrb[0].mxu0
      %v872 = vpop.f32.mrb[0].mxu0
      %873 = vdwg.mxu0
      %874 = vrot.lane.b32.xlu0 %v537, 104
      %v875 = vpop.permute.xlu0 %874
      %876 = vrot.lane.b32.xlu0 %v537, 72
      %v877 = vpop.permute.xlu0 %876
      %v879 = vsel %vm541, %v875, 0
      %v882 = vsel %vm541, %v877, 0
      %884 = vmatprep.subr.bf16.mxu0 0
      %885 = vmatpush1.bf16.xpose.msra.mxu0 %v882
      %886 = vmatprep.subr.bf16.mxu0 0
      %887 = vmatpush1.bf16.xpose.msra.mxu0 0
      %888 = vmatprep.subr.bf16.mxu0 0
      %889 = vmatpush1.bf16.xpose.msra.mxu0 0
      %890 = vmatprep.subr.bf16.mxu0 0
      %891 = vmatpush1.bf16.xpose.msra.mxu0 0
      %892 = vmatprep.subr.bf16.mxu0 0
      %893 = vmatpush1.bf16.xpose.msra.mxu0 0
      %894 = vmatprep.subr.bf16.mxu0 0
      %895 = vmatpush1.bf16.xpose.msra.mxu0 0
      %896 = vmatprep.subr.bf16.mxu0 0
      %897 = vmatpush1.bf16.xpose.msra.mxu0 0
      %898 = vmatprep.subr.bf16.mxu0 0
      %899 = vmatpush1.bf16.xpose.msra.mxu0 0
      %900 = vmatprep.subr.bf16.mxu0 0
      %901 = vmatpush1.bf16.xpose.msra.mxu0 0
      %902 = vmatprep.subr.bf16.mxu0 0
      %903 = vmatpush1.bf16.xpose.msra.mxu0 0
      %904 = vmatprep.subr.bf16.mxu0 0
      %905 = vmatpush1.bf16.xpose.msra.mxu0 0
      %906 = vmatprep.subr.bf16.mxu0 0
      %907 = vmatpush1.bf16.xpose.msra.mxu0 0
      %908 = vmatprep.subr.bf16.mxu0 0
      %909 = vmatpush1.bf16.xpose.msra.mxu0 0
      %910 = vmatprep.subr.bf16.mxu0 0
      %911 = vmatpush1.bf16.xpose.msra.mxu0 0
      %912 = vmatprep.subr.bf16.mxu0 0
      %913 = vmatpush1.bf16.xpose.msra.mxu0 0
      %914 = vmatprep.subr.bf16.mxu0 0
      %915 = vmatpush1.bf16.xpose.msra.mxu0 0
      %916 = vmatprep.mubr.bf16.mxu0 0
      %917 = vmatmul.mubr.bf16.gmra.mrb[0].mxu0 %v879
      %v918 = vpop.f32.mrb[0].mxu0
      %v919 = vadd.f32 0.0, %v918
      %v920 = vpop.f32.mrb[0].mxu0
      %v921 = vpop.f32.mrb[0].mxu0
      %v922 = vpop.f32.mrb[0].mxu0
      %923 = vdwg.mxu0
      %v924 = vsel %vm588, %v919, -inf
      %925 = vmax.xlane.f32.xlu0 %v924
      %v926 = vpop.xlane.xlu0 %925
      %v927 = vsub.f32 %v919, %v926
      %v928 = vmul.f32 %v927, 1.442695
      %v929 = vpow.pop %v928
      %v930 = vsel %vm588, %v929, 0.0
      %931 = vadd.xlane.f32.xlu0 %v930
      %v932 = vpop.xlane.xlu0 %931
      %v933 = vrcp.pop %v932
      %v934 = vmul.f32 %v929, %v933
      %v935 = vpack.c.bf16 %v934, %v934
      %936 = vrot.lane.b32.xlu0 %v537, 40
      %v937 = vpop.permute.xlu0 %936
      %v939 = vsel %vm603, %v935, 0
      %v942 = vand.u32 %v937, %v610
      %944 = vmatprep.subr.bf16.mxu0 0
      %945 = vmatpush1.bf16.msra.mxu0 %v942
      %946 = vmatprep.subr.bf16.mxu0 0
      %947 = vmatpush1.bf16.msra.mxu0 0
      %948 = vmatprep.subr.bf16.mxu0 0
      %949 = vmatpush1.bf16.msra.mxu0 0
      %950 = vmatprep.subr.bf16.mxu0 0
      %951 = vmatpush1.bf16.msra.mxu0 0
      %952 = vmatprep.subr.bf16.mxu0 0
      %953 = vmatpush1.bf16.msra.mxu0 0
      %954 = vmatprep.subr.bf16.mxu0 0
      %955 = vmatpush1.bf16.msra.mxu0 0
      %956 = vmatprep.subr.bf16.mxu0 0
      %957 = vmatpush1.bf16.msra.mxu0 0
      %958 = vmatprep.subr.bf16.mxu0 0
      %959 = vmatpush1.bf16.msra.mxu0 0
      %960 = vmatprep.subr.bf16.mxu0 0
      %961 = vmatpush1.bf16.msra.mxu0 0
      %962 = vmatprep.subr.bf16.mxu0 0
      %963 = vmatpush1.bf16.msra.mxu0 0
      %964 = vmatprep.subr.bf16.mxu0 0
      %965 = vmatpush1.bf16.msra.mxu0 0
      %966 = vmatprep.subr.bf16.mxu0 0
      %967 = vmatpush1.bf16.msra.mxu0 0
      %968 = vmatprep.subr.bf16.mxu0 0
      %969 = vmatpush1.bf16.msra.mxu0 0
      %970 = vmatprep.subr.bf16.mxu0 0
      %971 = vmatpush1.bf16.msra.mxu0 0
      %972 = vmatprep.subr.bf16.mxu0 0
      %973 = vmatpush1.bf16.msra.mxu0 0
      %974 = vmatprep.subr.bf16.mxu0 0
      %975 = vmatpush1.bf16.msra.mxu0 0
      %976 = vmatprep.mubr.bf16.mxu0 0
      %977 = vmatmul.mubr.bf16.gmra.mrb[0].mxu0 %v939
      %v978 = vpop.f32.mrb[0].mxu0
      %v979 = vadd.f32 0.0, %v978
      %v980 = vpop.f32.mrb[0].mxu0
      %v981 = vpop.f32.mrb[0].mxu0
      %v982 = vpop.f32.mrb[0].mxu0
      %983 = vdwg.mxu0
      %985 = vrot.lane.b32.xlu0 %v759, 8
      %v986 = vpop.permute.xlu0 %985
      %989 = vrot.lane.b32.xlu0 %v869, 16
      %v990 = vpop.permute.xlu0 %989
      %993 = vrot.lane.b32.xlu0 %v979, 24
      %v994 = vpop.permute.xlu0 %993
      %v996 = vsel %vm541, %v649, %v986
      %vm997 = vcmask 130048
      %v998 = vsel %vm997, %v996, %v990
      %vm999 = vcmask 195584
      %v1000 = vsel %vm999, %v998, %v994
      %v1001 = vpack.c.bf16 %v1000, %v1000
      %v1002 = vld [vmem:[%s5] sm:$0xf]
      %v1003 = vld [vmem:[%s5 + $0x4] sm:$0xf]
      %v1004 = vld [vmem:[%s5 + $0x8] sm:$0xf]
      %v1005 = vld [vmem:[%s5 + $0xc] sm:$0xf]
      %v1010 = vunpack.c.l.b16 %v1002
      %v1011 = vunpack.c.l.b16 %v1003
      %v1012 = vunpack.c.l.b16 %v1004
      %v1013 = vunpack.c.l.b16 %v1005
      %v1014 = vpack.c.b16 %v1011, %v1010
      %v1015 = vpack.c.b16 %v1013, %v1012
      %v1019 = vsel %vm493, %v1001, 0
      %1021 = vmatprep.subr.bf16.mxu0 0
      %1022 = vmatpush1.bf16.msra.mxu0 %v1014
      %1023 = vmatprep.subr.bf16.mxu0 0
      %1024 = vmatpush1.bf16.msra.mxu0 %v1015
      %1025 = vmatprep.subr.bf16.mxu0 0
      %1026 = vmatpush1.bf16.msra.mxu0 0
      %1027 = vmatprep.subr.bf16.mxu0 0
      %1028 = vmatpush1.bf16.msra.mxu0 0
      %1029 = vmatprep.subr.bf16.mxu0 0
      %1030 = vmatpush1.bf16.msra.mxu0 0
      %1031 = vmatprep.subr.bf16.mxu0 0
      %1032 = vmatpush1.bf16.msra.mxu0 0
      %1033 = vmatprep.subr.bf16.mxu0 0
      %1034 = vmatpush1.bf16.msra.mxu0 0
      %1035 = vmatprep.subr.bf16.mxu0 0
      %1036 = vmatpush1.bf16.msra.mxu0 0
      %1037 = vmatprep.subr.bf16.mxu0 0
      %1038 = vmatpush1.bf16.msra.mxu0 0
      %1039 = vmatprep.subr.bf16.mxu0 0
      %1040 = vmatpush1.bf16.msra.mxu0 0
      %1041 = vmatprep.subr.bf16.mxu0 0
      %1042 = vmatpush1.bf16.msra.mxu0 0
      %1043 = vmatprep.subr.bf16.mxu0 0
      %1044 = vmatpush1.bf16.msra.mxu0 0
      %1045 = vmatprep.subr.bf16.mxu0 0
      %1046 = vmatpush1.bf16.msra.mxu0 0
      %1047 = vmatprep.subr.bf16.mxu0 0
      %1048 = vmatpush1.bf16.msra.mxu0 0
      %1049 = vmatprep.subr.bf16.mxu0 0
      %1050 = vmatpush1.bf16.msra.mxu0 0
      %1051 = vmatprep.subr.bf16.mxu0 0
      %1052 = vmatpush1.bf16.msra.mxu0 0
      %1053 = vmatprep.mubr.bf16.mxu0 0
      %1054 = vmatmul.mubr.bf16.gmra.mrb[0].mxu0 %v1019
      %v1055 = vpop.f32.mrb[0].mxu0
      %v1056 = vadd.f32 0.0, %v1055
      %v1057 = vpop.f32.mrb[0].mxu0
      %v1058 = vpop.f32.mrb[0].mxu0
      %v1059 = vpop.f32.mrb[0].mxu0
      %1060 = vdwg.mxu0
      %v1061 = vadd.f32 %v437, %v1056
      %v1062 = vld [vmem:[%s6] sm:$0x1]
      %v1064 = vlaneseq
      %v1065 = vshrl.u32 %v1064, 7
      %v1066 = vsub.s32 0, %v1065
      %v1067 = vrot.slane %v1062, %v1066
      %v1069 = vadd.f32 %v1061, %v1067
      %v1070 = vld [vmem:[%s7] sm:$0x1]
      %v1071 = vld [vmem:[%s8] sm:$0x1]
      %v1072 = vsel %vm440, %v1069, 0.0
      %1073 = vadd.xlane.f32.xlu0 %v1072
      %v1074 = vpop.xlane.xlu0 %1073
      %v1075 = vmul.f32 %v1074, %v444
      %v1076 = vsub.f32 %v1069, %v1075
      %v1077 = vmul.f32 %v1076, %v1076
      %v1078 = vsel %vm440, %v1077, 0.0
      %1079 = vadd.xlane.f32.xlu0 %v1078
      %v1080 = vpop.xlane.xlu0 %1079
      %v1081 = vmul.f32 %v1080, %v444
      %v1082 = vadd.f32 %v1081, 1e-05
      %v1083 = vrsqrt.pop %v1082
      %v1084 = vmul.f32 %v1076, %v1083
      %v1086 = vlaneseq
      %v1087 = vshrl.u32 %v1086, 7
      %v1088 = vsub.s32 0, %v1087
      %v1089 = vrot.slane %v1070, %v1088
      %v1091 = vmul.f32 %v1084, %v1089
      %v1093 = vlaneseq
      %v1094 = vshrl.u32 %v1093, 7
      %v1095 = vsub.s32 0, %v1094
      %v1096 = vrot.slane %v1071, %v1095
      %v1098 = vadd.f32 %v1091, %v1096
      %v1099 = vpack.c.bf16 %v1098, %v1098
      %v1100 = vld [vmem:[%s9] sm:$0xf]
      %v1101 = vld [vmem:[%s9 + $0x4] sm:$0xf]
      %v1102 = vld [vmem:[%s9 + $0x8] sm:$0xf]
      %v1103 = vld [vmem:[%s9 + $0xc] sm:$0xf]
      %v1104 = vld [vmem:[%s10] sm:$0x1]
      %v1106 = vlaneseq
      %v1107 = vshrl.u32 %v1106, 7
      %v1108 = vsub.s32 0, %v1107
      %v1109 = vrot.slane %v1104, %v1108
      %v1115 = vunpack.c.l.b16 %v1100
      %v1116 = vunpack.c.l.b16 %v1101
      %v1117 = vunpack.c.l.b16 %v1102
      %v1118 = vunpack.c.l.b16 %v1103
      %v1119 = vpack.c.b16 %v1116, %v1115
      %v1120 = vpack.c.b16 %v1118, %v1117
      %v1124 = vsel %vm493, %v1099, 0
      %1126 = vmatprep.subr.bf16.mxu0 0
      %1127 = vmatpush1.bf16.msra.mxu0 %v1119
      %1128 = vmatprep.subr.bf16.mxu0 0
      %1129 = vmatpush1.bf16.msra.mxu0 %v1120
      %1130 = vmatprep.subr.bf16.mxu0 0
      %1131 = vmatpush1.bf16.msra.mxu0 0
      %1132 = vmatprep.subr.bf16.mxu0 0
      %1133 = vmatpush1.bf16.msra.mxu0 0
      %1134 = vmatprep.subr.bf16.mxu0 0
      %1135 = vmatpush1.bf16.msra.mxu0 0
      %1136 = vmatprep.subr.bf16.mxu0 0
      %1137 = vmatpush1.bf16.msra.mxu0 0
      %1138 = vmatprep.subr.bf16.mxu0 0
      %1139 = vmatpush1.bf16.msra.mxu0 0
      %1140 = vmatprep.subr.bf16.mxu0 0
      %1141 = vmatpush1.bf16.msra.mxu0 0
      %1142 = vmatprep.subr.bf16.mxu0 0
      %1143 = vmatpush1.bf16.msra.mxu0 0
      %1144 = vmatprep.subr.bf16.mxu0 0
      %1145 = vmatpush1.bf16.msra.mxu0 0
      %1146 = vmatprep.subr.bf16.mxu0 0
      %1147 = vmatpush1.bf16.msra.mxu0 0
      %1148 = vmatprep.subr.bf16.mxu0 0
      %1149 = vmatpush1.bf16.msra.mxu0 0
      %1150 = vmatprep.subr.bf16.mxu0 0
      %1151 = vmatpush1.bf16.msra.mxu0 0
      %1152 = vmatprep.subr.bf16.mxu0 0
      %1153 = vmatpush1.bf16.msra.mxu0 0
      %1154 = vmatprep.subr.bf16.mxu0 0
      %1155 = vmatpush1.bf16.msra.mxu0 0
      %1156 = vmatprep.subr.bf16.mxu0 0
      %1157 = vmatpush1.bf16.msra.mxu0 0
      %1158 = vmatprep.mubr.bf16.mxu0 0
      %1159 = vmatmul.mubr.bf16.gmra.mrb[0].mxu0 %v1124
      %v1160 = vpop.f32.mrb[0].mxu0
      %v1161 = vadd.f32 %v1109, %v1160
      %v1162 = vpop.f32.mrb[0].mxu0
      %v1163 = vpop.f32.mrb[0].mxu0
      %v1164 = vpop.f32.mrb[0].mxu0
      %1165 = vdwg.mxu0
      %v1166 = vmul.f32 %v1161, 1.702
      %v1167 = vxor.u32 %v1166, 2147483648
      %v1168 = vmul.f32 %v1167, 1.442695
      %v1169 = vpow.pop %v1168
      %v1170 = vadd.f32 %v1169, 1.0
      %v1171 = vrcp.pop %v1170
      %v1172 = vmul.f32 1.0, %v1171
      %v1173 = vmul.f32 %v1161, %v1172
      %v1174 = vpack.c.bf16 %v1173, %v1173
      %v1175 = vld [vmem:[%s11] sm:$0xf]
      %v1176 = vld [vmem:[%s11 + $0x4] sm:$0xf]
      %v1177 = vld [vmem:[%s11 + $0x8] sm:$0xf]
      %v1178 = vld [vmem:[%s11 + $0xc] sm:$0xf]
      %v1179 = vld [vmem:[%s11 + $0x10] sm:$0xf]
      %v1180 = vld [vmem:[%s11 + $0x14] sm:$0xf]
      %v1181 = vld [vmem:[%s11 + $0x18] sm:$0xf]
      %v1182 = vld [vmem:[%s11 + $0x1c] sm:$0xf]
      %v1183 = vld [vmem:[%s11 + $0x20] sm:$0xf]
      %v1184 = vld [vmem:[%s11 + $0x24] sm:$0xf]
      %v1185 = vld [vmem:[%s11 + $0x28] sm:$0xf]
      %v1186 = vld [vmem:[%s11 + $0x2c] sm:$0xf]
      %v1187 = vld [vmem:[%s11 + $0x30] sm:$0xf]
      %v1188 = vld [vmem:[%s11 + $0x34] sm:$0xf]
      %v1189 = vld [vmem:[%s11 + $0x38] sm:$0xf]
      %v1190 = vld [vmem:[%s11 + $0x3c] sm:$0xf]
      %v1191 = vld [vmem:[%s12] sm:$0x1]
      %v1193 = vlaneseq
      %v1194 = vshrl.u32 %v1193, 7
      %v1195 = vsub.s32 0, %v1194
      %v1196 = vrot.slane %v1191, %v1195
      %v1214 = vunpack.c.l.b16 %v1175
      %v1215 = vunpack.c.l.b16 %v1176
      %v1216 = vunpack.c.l.b16 %v1177
      %v1217 = vunpack.c.l.b16 %v1178
      %v1218 = vunpack.c.l.b16 %v1179
      %v1219 = vunpack.c.l.b16 %v1180
      %v1220 = vunpack.c.l.b16 %v1181
      %v1221 = vunpack.c.l.b16 %v1182
      %v1222 = vunpack.c.l.b16 %v1183
      %v1223 = vunpack.c.l.b16 %v1184
      %v1224 = vunpack.c.l.b16 %v1185
      %v1225 = vunpack.c.l.b16 %v1186
      %v1226 = vunpack.c.l.b16 %v1187
      %v1227 = vunpack.c.l.b16 %v1188
      %v1228 = vunpack.c.l.b16 %v1189
      %v1229 = vunpack.c.l.b16 %v1190
      %v1230 = vpack.c.b16 %v1215, %v1214
      %v1231 = vpack.c.b16 %v1217, %v1216
      %v1232 = vpack.c.b16 %v1219, %v1218
      %v1233 = vpack.c.b16 %v1221, %v1220
      %v1234 = vpack.c.b16 %v1223, %v1222
      %v1235 = vpack.c.b16 %v1225, %v1224
      %v1236 = vpack.c.b16 %v1227, %v1226
      %v1237 = vpack.c.b16 %v1229, %v1228
      %1246 = vmatprep.subr.bf16.mxu0 0
      %1247 = vmatpush1.bf16.msra.mxu0 %v1230
      %1248 = vmatprep.subr.bf16.mxu0 0
      %1249 = vmatpush1.bf16.msra.mxu0 %v1231
      %1250 = vmatprep.subr.bf16.mxu0 0
      %1251 = vmatpush1.bf16.msra.mxu0 %v1232
      %1252 = vmatprep.subr.bf16.mxu0 0
      %1253 = vmatpush1.bf16.msra.mxu0 %v1233
      %1254 = vmatprep.subr.bf16.mxu0 0
      %1255 = vmatpush1.bf16.msra.mxu0 %v1234
      %1256 = vmatprep.subr.bf16.mxu0 0
      %1257 = vmatpush1.bf16.msra.mxu0 %v1235
      %1258 = vmatprep.subr.bf16.mxu0 0
      %1259 = vmatpush1.bf16.msra.mxu0 %v1236
      %1260 = vmatprep.subr.bf16.mxu0 0
      %1261 = vmatpush1.bf16.msra.mxu0 %v1237
      %1262 = vmatprep.subr.bf16.mxu0 0
      %1263 = vmatpush1.bf16.msra.mxu0 0
      %1264 = vmatprep.subr.bf16.mxu0 0
      %1265 = vmatpush1.bf16.msra.mxu0 0
      %1266 = vmatprep.subr.bf16.mxu0 0
      %1267 = vmatpush1.bf16.msra.mxu0 0
      %1268 = vmatprep.subr.bf16.mxu0 0
      %1269 = vmatpush1.bf16.msra.mxu0 0
      %1270 = vmatprep.subr.bf16.mxu0 0
      %1271 = vmatpush1.bf16.msra.mxu0 0
      %1272 = vmatprep.subr.bf16.mxu0 0
      %1273 = vmatpush1.bf16.msra.mxu0 0
      %1274 = vmatprep.subr.bf16.mxu0 0
      %1275 = vmatpush1.bf16.msra.mxu0 0
      %1276 = vmatprep.subr.bf16.mxu0 0
      %1277 = vmatpush1.bf16.msra.mxu0 0
      %1278 = vmatprep.mubr.bf16.mxu0 0
      %1279 = vmatmul.mubr.bf16.gmra.mrb[0].mxu0 %v1174
      %v1280 = vpop.f32.mrb[0].mxu0
      %v1281 = vadd.f32 %v1196, %v1280
      %v1282 = vpop.f32.mrb[0].mxu0
      %v1283 = vpop.f32.mrb[0].mxu0
      %v1284 = vpop.f32.mrb[0].mxu0
      %1285 = vdwg.mxu0
      %v1286 = vadd.f32 %v1069, %v1281
      %1287 = vst.msk [vmem:[%s435] sm:$0x1f] %vm440, %v1286
      %p1288 = scmp.lt.s32.totalorder %s24, 1
      %s1289 = scalar_select %p1288, %s24, 1
      %s1290 = smul.addr %s1289, 8
      %s1291 = scalar_lea.vmem %s13, %s1290
      // Predicated region
      $region73: #{deep_prompt_clip_forward.7} parent=71 // pred_check
        %p1292 = pneg %p320
      $region74: #{deep_prompt_clip_forward.7} parent=71 // pred_check_branch
        %1294 = sbr.rel (%p1292) target = $region76
      $region75: #{deep_prompt_clip_forward.7} parent=71 // pred_region
        _
      $region76: #{deep_prompt_clip_forward.7} parent=71 // pred_fallthru
        _
    $region72: #{deep_prompt_clip_forward.7} parent=5 // pred_fallthru
      _
    %p1295 = scmp.le.s32.totalorder 2, %s19
    // Predicated region
    $region77: #{deep_prompt_clip_forward.7} parent=5 // pred_check
      %p1296 = pneg %p1295
    $region78: #{deep_prompt_clip_forward.7} parent=5 // pred_check_branch
      %1298 = sbr.rel (%p1296) target = $region80
    $region79: #{deep_prompt_clip_forward.7} parent=5 // pred_region
      %s1299 = ssub.s32 %s19, 2
      // Predicated region
      $region81: #{deep_prompt_clip_forward.7} parent=79 // pred_check
        %p1300 = pneg %p326
      $region82: #{deep_prompt_clip_forward.7} parent=79 // pred_check_branch
        %1302 = sbr.rel (%p1300) target = $region84
      $region83: #{deep_prompt_clip_forward.7} parent=79 // pred_region
        %p1303 = scmp.lt.s32.totalorder %s25, 1
        %s1304 = scalar_select %p1303, %s25, 1
        %s1305 = smul.addr %s1304, 8
        %s1306 = scalar_lea.vmem %s13, %s1305
      $region84: #{deep_prompt_clip_forward.7} parent=79 // pred_fallthru
        _
    $region80: #{deep_prompt_clip_forward.7} parent=5 // pred_fallthru
      _
  $region6: #{deep_prompt_clip_forward.7} parent=0 // loop_footer
    %s23 = sadd.s32 1, %s19
  $region7: #{deep_prompt_clip_forward.7} parent=0 // loop_footer_branch
    %18 = sbr.rel target = $region3
  $region8: #{deep_prompt_clip_forward.7} parent=0 // loop_exit
    _

// kernel: deep_prompt_clip_forward.9
$region0: #{deep_prompt_clip_forward.9}
  #allocation0 [shape = 'u32[]', space=smem, size = 0x4, offset = 0x4, fixed_abs, tag = 'smem constant byte address 0x4 - core index']
  #allocation1 [shape = 'u32[144,128]{1,0:T(1,128)}', space=vmem, size = 0x12000, scoped, tag = 'internal scratch']
  %s0 = inlined_call_operand.vmem [shape: f32[2,32], index: 0, kind: input, shape index: {}]
  %s1 = inlined_call_operand.vmem [shape: f32[1,32], index: 1, kind: input, shape index: {}]
  %s2 = inlined_call_operand.vmem [shape: f32[1,32], index: 2, kind: input, shape index: {}]
  %s3 = inlined_call_operand.vmem [shape: bf16[32,16], index: 3, kind: input, shape index: {}]
  %s4 = inlined_call_operand.vmem [shape: bf16[128,16], index: 4, kind: input, shape index: {}]
  %s5 = inlined_call_operand.hbm [shape: f32[2,128], index: 5, kind: output, shape index: {}]
  %s6 = sld [smem:[#allocation0]]
  $region30: #{deep_prompt_clip_forward.9} parent=0
    _
  %s8 = ssub.s32 1, %s6
  %s9 = scalar_select 0, %s8, %s6
  $region1: #{deep_prompt_clip_forward.9} parent=0
    #allocation2 [shape = 'u8[1024]{0}', space=vmem, size = 0x400, scoped, tag = 'output window, operand 0, single buffered']
    #allocation3 [shape = 's32[1]{0}', space=sflag, size = 0x4, scoped, tag = 'scoped memory for deep_prompt_clip_forward.9']
    %10 = vsyncpa [#allocation3], 0
    // Predicated region
    $region2: #{deep_prompt_clip_forward.9} parent=1 // pred_check
      _
    $region3: #{deep_prompt_clip_forward.9} parent=1 // pred_check_branch
      %12 = sbr.rel (0) target = $region5
    $region4: #{deep_prompt_clip_forward.9} parent=1 // pred_region
      _
    $region5: #{deep_prompt_clip_forward.9} parent=1 // pred_fallthru
      _
    // Predicated region
    $region6: #{deep_prompt_clip_forward.9} parent=1 // pred_check
      _
    $region7: #{deep_prompt_clip_forward.9} parent=1 // pred_check_branch
      %14 = sbr.rel (0) target = $region9
    $region8: #{deep_prompt_clip_forward.9} parent=1 // pred_region
      _
    $region9: #{deep_prompt_clip_forward.9} parent=1 // pred_fallthru
      _
    // Predicated region
    $region10: #{deep_prompt_clip_forward.9} parent=1 // pred_check
      _
    $region11: #{deep_prompt_clip_forward.9} parent=1 // pred_check_branch
      %16 = sbr.rel (0) target = $region13
    $region12: #{deep_prompt_clip_forward.9} parent=1 // pred_region
      _
    $region13: #{deep_prompt_clip_forward.9} parent=1 // pred_fallthru
      _
    // Predicated region
    $region14: #{deep_prompt_clip_forward.9} parent=1 // pred_check
      _
    $region15: #{deep_prompt_clip_forward.9} parent=1 // pred_check_branch
      %18 = sbr.rel (0) target = $region17
    $region16: #{deep_prompt_clip_forward.9} parent=1 // pred_region
      _
    $region17: #{deep_prompt_clip_forward.9} parent=1 // pred_fallthru
      _
    // Predicated region
    $region18: #{deep_prompt_clip_forward.9} parent=1 // pred_check
      _
    $region19: #{deep_prompt_clip_forward.9} parent=1 // pred_check_branch
      %20 = sbr.rel (0) target = $region21
    $region20: #{deep_prompt_clip_forward.9} parent=1 // pred_region
      _
    $region21: #{deep_prompt_clip_forward.9} parent=1 // pred_fallthru
      _
    %v22 = vld [vmem:[%s0] sm:$0x3]
    %v23 = vld [vmem:[%s1] sm:$0x1]
    %v24 = vld [vmem:[%s2] sm:$0x1]
    %vm25 = vcmask 254976
    %v26 = vsel %vm25, %v22, 0.0
    %27 = vadd.xlane.f32.xlu0 %v26
    %v28 = vpop.xlane.xlu0 %27
    %v29 = vrcp.pop 32.0
    %v30 = vmul.f32 %v28, %v29
    %v31 = vsub.f32 %v22, %v30
    %v32 = vmul.f32 %v31, %v31
    %v33 = vsel %vm25, %v32, 0.0
    %34 = vadd.xlane.f32.xlu0 %v33
    %v35 = vpop.xlane.xlu0 %34
    %v36 = vmul.f32 %v35, %v29
    %v37 = vadd.f32 %v36, 1e-05
    %v38 = vrsqrt.pop %v37
    %v39 = vmul.f32 %v31, %v38
    %v41 = vlaneseq
    %v42 = vshrl.u32 %v41, 7
    %v43 = vsub.s32 0, %v42
    %v44 = vrot.slane %v23, %v43
    %v46 = vmul.f32 %v39, %v44
    %v48 = vlaneseq
    %v49 = vshrl.u32 %v48, 7
    %v50 = vsub.s32 0, %v49
    %v51 = vrot.slane %v24, %v50
    %v53 = vadd.f32 %v46, %v51
    %v54 = vpack.c.bf16 %v53, %v53
    %v55 = vld [vmem:[%s3] sm:$0xf]
    %v56 = vld [vmem:[%s3 + $0x4] sm:$0xf]
    %v57 = vld [vmem:[%s3 + $0x8] sm:$0xf]
    %v58 = vld [vmem:[%s3 + $0xc] sm:$0xf]
    %v63 = vunpack.c.l.b16 %v55
    %v64 = vunpack.c.l.b16 %v56
    %v65 = vunpack.c.l.b16 %v57
    %v66 = vunpack.c.l.b16 %v58
    %v67 = vpack.c.b16 %v64, %v63
    %v68 = vpack.c.b16 %v66, %v65
    %vm71 = vcmask 261120
    %v73 = vsel %vm71, %v54, 0
    %75 = vmatprep.subr.bf16.mxu0 0
    %76 = vmatpush1.bf16.msra.mxu0 %v67
    %77 = vmatprep.subr.bf16.mxu0 0
    %78 = vmatpush1.bf16.msra.mxu0 %v68
    %79 = vmatprep.subr.bf16.mxu0 0
    %80 = vmatpush1.bf16.msra.mxu0 0
    %81 = vmatprep.subr.bf16.mxu0 0
    %82 = vmatpush1.bf16.msra.mxu0 0
    %83 = vmatprep.subr.bf16.mxu0 0
    %84 = vmatpush1.bf16.msra.mxu0 0
    %85 = vmatprep.subr.bf16.mxu0 0
    %86 = vmatpush1.bf16.msra.mxu0 0
    %87 = vmatprep.subr.bf16.mxu0 0
    %88 = vmatpush1.bf16.msra.mxu0 0
    %89 = vmatprep.subr.bf16.mxu0 0
    %90 = vmatpush1.bf16.msra.mxu0 0
    %91 = vmatprep.subr.bf16.mxu0 0
    %92 = vmatpush1.bf16.msra.mxu0 0
    %93 = vmatprep.subr.bf16.mxu0 0
    %94 = vmatpush1.bf16.msra.mxu0 0
    %95 = vmatprep.subr.bf16.mxu0 0
    %96 = vmatpush1.bf16.msra.mxu0 0
    %97 = vmatprep.subr.bf16.mxu0 0
    %98 = vmatpush1.bf16.msra.mxu0 0
    %99 = vmatprep.subr.bf16.mxu0 0
    %100 = vmatpush1.bf16.msra.mxu0 0
    %101 = vmatprep.subr.bf16.mxu0 0
    %102 = vmatpush1.bf16.msra.mxu0 0
    %103 = vmatprep.subr.bf16.mxu0 0
    %104 = vmatpush1.bf16.msra.mxu0 0
    %105 = vmatprep.subr.bf16.mxu0 0
    %106 = vmatpush1.bf16.msra.mxu0 0
    %107 = vmatprep.mubr.bf16.mxu0 0
    %108 = vmatmul.mubr.bf16.gmra.mrb[0].mxu0 %v73
    %v109 = vpop.f32.mrb[0].mxu0
    %v110 = vadd.f32 0.0, %v109
    %v111 = vpop.f32.mrb[0].mxu0
    %v112 = vpop.f32.mrb[0].mxu0
    %v113 = vpop.f32.mrb[0].mxu0
    %114 = vdwg.mxu0
    %v115 = vmul.f32 %v110, %v110
    %vm116 = vcmask 123904
    %v117 = vsel %vm116, %v115, 0.0
    %118 = vadd.xlane.f32.xlu0 %v117
    %v119 = vpop.xlane.xlu0 %118
    %v120 = vmax.f32 %v119, 1e-24
    %v121 = vrsqrt.pop %v120
    %v122 = vmul.f32 %v110, %v121
    %v123 = vpack.c.bf16 %v122, %v122
    %v124 = vld [vmem:[%s4] sm:$0xf]
    %v125 = vld [vmem:[%s4 + $0x4] sm:$0xf]
    %v126 = vld [vmem:[%s4 + $0x8] sm:$0xf]
    %v127 = vld [vmem:[%s4 + $0xc] sm:$0xf]
    %v128 = vld [vmem:[%s4 + $0x10] sm:$0xf]
    %v129 = vld [vmem:[%s4 + $0x14] sm:$0xf]
    %v130 = vld [vmem:[%s4 + $0x18] sm:$0xf]
    %v131 = vld [vmem:[%s4 + $0x1c] sm:$0xf]
    %v132 = vld [vmem:[%s4 + $0x20] sm:$0xf]
    %v133 = vld [vmem:[%s4 + $0x24] sm:$0xf]
    %v134 = vld [vmem:[%s4 + $0x28] sm:$0xf]
    %v135 = vld [vmem:[%s4 + $0x2c] sm:$0xf]
    %v136 = vld [vmem:[%s4 + $0x30] sm:$0xf]
    %v137 = vld [vmem:[%s4 + $0x34] sm:$0xf]
    %v138 = vld [vmem:[%s4 + $0x38] sm:$0xf]
    %v139 = vld [vmem:[%s4 + $0x3c] sm:$0xf]
    %v156 = vunpack.c.l.b16 %v124
    %v157 = vunpack.c.l.b16 %v125
    %v158 = vunpack.c.l.b16 %v126
    %v159 = vunpack.c.l.b16 %v127
    %v160 = vunpack.c.l.b16 %v128
    %v161 = vunpack.c.l.b16 %v129
    %v162 = vunpack.c.l.b16 %v130
    %v163 = vunpack.c.l.b16 %v131
    %v164 = vunpack.c.l.b16 %v132
    %v165 = vunpack.c.l.b16 %v133
    %v166 = vunpack.c.l.b16 %v134
    %v167 = vunpack.c.l.b16 %v135
    %v168 = vunpack.c.l.b16 %v136
    %v169 = vunpack.c.l.b16 %v137
    %v170 = vunpack.c.l.b16 %v138
    %v171 = vunpack.c.l.b16 %v139
    %v172 = vpack.c.b16 %v157, %v156
    %v173 = vpack.c.b16 %v159, %v158
    %v174 = vpack.c.b16 %v161, %v160
    %v175 = vpack.c.b16 %v163, %v162
    %v176 = vpack.c.b16 %v165, %v164
    %v177 = vpack.c.b16 %v167, %v166
    %v178 = vpack.c.b16 %v169, %v168
    %v179 = vpack.c.b16 %v171, %v170
    %vm180 = vcmask 130048
    %v182 = vsel %vm180, %v123, 0
    %v185 = vsel %vm180, %v172, 0
    %v188 = vsel %vm180, %v173, 0
    %v191 = vsel %vm180, %v174, 0
    %v194 = vsel %vm180, %v175, 0
    %v197 = vsel %vm180, %v176, 0
    %v200 = vsel %vm180, %v177, 0
    %v203 = vsel %vm180, %v178, 0
    %v206 = vsel %vm180, %v179, 0
    %208 = vmatprep.subr.bf16.mxu0 0
    %209 = vmatpush1.bf16.xpose.msra.mxu0 %v185
    %210 = vmatprep.subr.bf16.mxu0 0
    %211 = vmatpush1.bf16.xpose.msra.mxu0 %v188
    %212 = vmatprep.subr.bf16.mxu0 0
    %213 = vmatpush1.bf16.xpose.msra.mxu0 %v191
    %214 = vmatprep.subr.bf16.mxu0 0
    %215 = vmatpush1.bf16.xpose.msra.mxu0 %v194
    %216 = vmatprep.subr.bf16.mxu0 0
    %217 = vmatpush1.bf16.xpose.msra.mxu0 %v197
    %218 = vmatprep.subr.bf16.mxu0 0
    %219 = vmatpush1.bf16.xpose.msra.mxu0 %v200
    %220 = vmatprep.subr.bf16.mxu0 0
    %221 = vmatpush1.bf16.xpose.msra.mxu0 %v203
    %222 = vmatprep.subr.bf16.mxu0 0
    %223 = vmatpush1.bf16.xpose.msra.mxu0 %v206
    %224 = vmatprep.subr.bf16.mxu0 0
    %225 = vmatpush1.bf16.xpose.msra.mxu0 0
    %226 = vmatprep.subr.bf16.mxu0 0
    %227 = vmatpush1.bf16.xpose.msra.mxu0 0
    %228 = vmatprep.subr.bf16.mxu0 0
    %229 = vmatpush1.bf16.xpose.msra.mxu0 0
    %230 = vmatprep.subr.bf16.mxu0 0
    %231 = vmatpush1.bf16.xpose.msra.mxu0 0
    %232 = vmatprep.subr.bf16.mxu0 0
    %233 = vmatpush1.bf16.xpose.msra.mxu0 0
    %234 = vmatprep.subr.bf16.mxu0 0
    %235 = vmatpush1.bf16.xpose.msra.mxu0 0
    %236 = vmatprep.subr.bf16.mxu0 0
    %237 = vmatpush1.bf16.xpose.msra.mxu0 0
    %238 = vmatprep.subr.bf16.mxu0 0
    %239 = vmatpush1.bf16.xpose.msra.mxu0 0
    %240 = vmatprep.mubr.bf16.mxu0 0
    %241 = vmatmul.mubr.bf16.gmra.mrb[0].mxu0 %v182
    %v242 = vpop.f32.mrb[0].mxu0
    %v243 = vadd.f32 0.0, %v242
    %v244 = vpop.f32.mrb[0].mxu0
    %v245 = vpop.f32.mrb[0].mxu0
    %v246 = vpop.f32.mrb[0].mxu0
    %247 = vdwg.mxu0
    %v248 = vmul.f32 %v243, 100.0
    %v249 = vlaneseq
    %v250 = vand.u32 %v249, 127
    %vm251 = vcmp.lt.s32.totalorder %v250, 8
    %v252 = vsel %vm251, %v248, -inf
    %vm253 = vcmask 1041408
    %v254 = vsel %vm253, %v252, -inf
    %255 = vmax.xlane.f32.xlu0 %v254
    %v256 = vpop.xlane.xlu0 %255
    %v257 = vsub.f32 %v252, %v256
    %v258 = vmul.f32 %v257, 1.442695
    %v259 = vpow.pop %v258
    %v260 = vsel %vm253, %v259, 0.0
    %261 = vadd.xlane.f32.xlu0 %v260
    %v262 = vpop.xlane.xlu0 %261
    %v263 = vrcp.pop %v262
    %v264 = vmul.f32 %v259, %v263
    %v265 = vmul.f32 %v264, 14.285714
    %266 = vst [vmem:[#allocation2] sm:$0x3] %v265
    // Predicated region
    $region22: #{deep_prompt_clip_forward.9} parent=1 // pred_check
      _
    $region23: #{deep_prompt_clip_forward.9} parent=1 // pred_check_branch
      %268 = sbr.rel (0) target = $region25
    $region24: #{deep_prompt_clip_forward.9} parent=1 // pred_region
      %s270 = ssub.s32 32, 32
      %271 = vsyncadd [#allocation3], %s270
      %s273 = sshll.u32 [#allocation2], 4
      %s274 = int_to_ptr.vmem [resolvable:$true] %s273
      %276 = dma.vmem_to_hbm [thread:$0]  %s274, 32, %s5, [#allocation3]
    $region25: #{deep_prompt_clip_forward.9} parent=1 // pred_fallthru
      _
    // Predicated region
    $region26: #{deep_prompt_clip_forward.9} parent=1 // pred_check
      _
    $region27: #{deep_prompt_clip_forward.9} parent=1 // pred_check_branch
      %278 = sbr.rel (0) target = $region29
    $region28: #{deep_prompt_clip_forward.9} parent=1 // pred_region
      %279 = dma.done [#allocation3], 32
    $region29: #{deep_prompt_clip_forward.9} parent=1 // pred_fallthru
      _
    %280 = vsyncpa [#allocation3], 1

// kernel: deep_prompt_clip_forward.8
$region0: #{deep_prompt_clip_forward.8}
  #allocation0 [shape = 'u32[]', space=smem, size = 0x4, offset = 0x4, fixed_abs, tag = 'smem constant byte address 0x4 - core index']
  #allocation1 [shape = 'u32[144,128]{1,0:T(1,128)}', space=vmem, size = 0x12000, scoped, tag = 'internal scratch']
  %s0 = inlined_call_operand.vmem [shape: f32[2,7,32], index: 0, kind: input, shape index: {}]
  %s1 = inlined_call_operand.vmem [shape: f32[1,32], index: 1, kind: input, shape index: {}]
  %s2 = inlined_call_operand.vmem [shape: f32[1,32], index: 2, kind: input, shape index: {}]
  %s3 = inlined_call_operand.vmem [shape: bf16[32,96], index: 3, kind: input, shape index: {}]
  %s4 = inlined_call_operand.vmem [shape: f32[1,96], index: 4, kind: input, shape index: {}]
  %s5 = inlined_call_operand.vmem [shape: bf16[32,32], index: 5, kind: input, shape index: {}]
  %s6 = inlined_call_operand.vmem [shape: f32[1,32], index: 6, kind: input, shape index: {}]
  %s7 = inlined_call_operand.vmem [shape: f32[1,32], index: 7, kind: input, shape index: {}]
  %s8 = inlined_call_operand.vmem [shape: f32[1,32], index: 8, kind: input, shape index: {}]
  %s9 = inlined_call_operand.vmem [shape: bf16[32,128], index: 9, kind: input, shape index: {}]
  %s10 = inlined_call_operand.vmem [shape: f32[1,128], index: 10, kind: input, shape index: {}]
  %s11 = inlined_call_operand.vmem [shape: bf16[128,32], index: 11, kind: input, shape index: {}]
  %s12 = inlined_call_operand.vmem [shape: f32[1,32], index: 12, kind: input, shape index: {}]
  %s13 = inlined_call_operand.vmem [shape: f32[2,7,32], index: 13, kind: output, shape index: {}]
  %s14 = sld [smem:[#allocation0]]
  $region85: #{deep_prompt_clip_forward.8} parent=0
    _
  %s16 = ssub.s32 1, %s14
  %s17 = scalar_select 0, %s16, %s14
  loop: start=0, step=1, limit=4
  $region2: #{deep_prompt_clip_forward.8} parent=0 // loop_pre_header
    _
  $region3: #{deep_prompt_clip_forward.8} parent=0 // loop_header
    %s19 = sphi 0, %s23
    %p20 = scmp.ge.s32.totalorder %s19, 4
    %s29 = sphi 0, %s31
    %s32 = sphi 0, %s29
    %s33 = sphi 0, %s32
    %s49 = sphi 0, %s33
    %s53 = sphi 0, %s53
    %s55 = sphi 0, %s53
    %s56 = sphi 0, %s55
    %s70 = sphi 0, %s56
    %s74 = sphi 0, %s74
    %s76 = sphi 0, %s74
    %s77 = sphi 0, %s76
    %s91 = sphi 0, %s77
    %s95 = sphi 0, %s95
    %s97 = sphi 0, %s95
    %s98 = sphi 0, %s97
    %s112 = sphi 0, %s98
    %s116 = sphi 0, %s116
    %s118 = sphi 0, %s116
    %s119 = sphi 0, %s118
    %s133 = sphi 0, %s119
    %s137 = sphi 0, %s137
    %s139 = sphi 0, %s137
    %s140 = sphi 0, %s139
    %s154 = sphi 0, %s140
    %s158 = sphi 0, %s158
    %s160 = sphi 0, %s158
    %s161 = sphi 0, %s160
    %s175 = sphi 0, %s161
    %s179 = sphi 0, %s179
    %s181 = sphi 0, %s179
    %s182 = sphi 0, %s181
    %s196 = sphi 0, %s182
    %s200 = sphi 0, %s200
    %s202 = sphi 0, %s200
    %s203 = sphi 0, %s202
    %s217 = sphi 0, %s203
    %s221 = sphi 0, %s221
    %s223 = sphi 0, %s221
    %s224 = sphi 0, %s223
    %s238 = sphi 0, %s224
    %s242 = sphi 0, %s242
    %s244 = sphi 0, %s242
    %s245 = sphi 0, %s244
    %s259 = sphi 0, %s245
    %s263 = sphi 0, %s263
    %s265 = sphi 0, %s263
    %s266 = sphi 0, %s265
    %s280 = sphi 0, %s266
    %s284 = sphi 0, %s284
    %s286 = sphi 0, %s284
    %s287 = sphi 0, %s286
    %s301 = sphi 0, %s287
    %s307 = sphi 0, %s309
    %s310 = sphi 0, %s307
    %s311 = sphi 0, %s310
    %s327 = sphi 0, %s311
  $region4: #{deep_prompt_clip_forward.8} parent=0 // loop_header_branch
    %22 = sbr.rel (%p20) target = $region8
  $region5: #{deep_prompt_clip_forward.8} parent=0 // loop_body
    %s24 = ssub.s32 %s19, 1
    %s25 = ssub.s32 %s19, 2
    %s26 = sadd.s32 %s19, 1
    %s27 = ssub.s32 %s19, %s26
    %p28 = scmp.eq.s32.totalorder %s27, 0
    %s30 = sadd.s32 %s29, 1
    %s31 = scalar_select %p28, %s29, %s30
    %p34 = pneg %p28
    %p35 = scmp.eq.s32.totalorder %s19, 1
    %p36 = por %p34, %p35
    %p37 = scmp.ne.s32.totalorder %s29, %s32
    %p38 = scmp.eq.s32.totalorder %s19, 0
    %p39 = por %p37, %p38
    %p40 = scmp.ne.s32.totalorder %s29, %s32
    %p41 = scmp.eq.s32.totalorder %s24, 1
    %p42 = por %p40, %p41
    %p43 = scmp.ne.s32.totalorder %s32, %s33
    %p44 = scmp.eq.s32.totalorder %s24, 0
    %p45 = por %p43, %p44
    %p46 = scmp.ne.s32.totalorder %s32, %s33
    %p47 = scmp.eq.s32.totalorder %s25, 1
    %p48 = por %p46, %p47
    %p50 = scmp.ne.s32.totalorder %s33, %s49
    %p51 = scmp.eq.s32.totalorder %s25, 0
    %p52 = por %p50, %p51
    %s54 = sadd.s32 %s53, 1
    %p57 = scmp.eq.s32.totalorder %s19, 1
    %p58 = scmp.ne.s32.totalorder %s53, %s55
    %p59 = scmp.eq.s32.totalorder %s19, 0
    %p60 = por %p58, %p59
    %p61 = scmp.ne.s32.totalorder %s53, %s55
    %p62 = scmp.eq.s32.totalorder %s24, 1
    %p63 = por %p61, %p62
    %p64 = scmp.ne.s32.totalorder %s55, %s56
    %p65 = scmp.eq.s32.totalorder %s24, 0
    %p66 = por %p64, %p65
    %p67 = scmp.ne.s32.totalorder %s55, %s56
    %p68 = scmp.eq.s32.totalorder %s25, 1
    %p69 = por %p67, %p68
    %p71 = scmp.ne.s32.totalorder %s56, %s70
    %p72 = scmp.eq.s32.totalorder %s25, 0
    %p73 = por %p71, %p72
    %s75 = sadd.s32 %s74, 1
    %p78 = scmp.eq.s32.totalorder %s19, 1
    %p79 = scmp.ne.s32.totalorder %s74, %s76
    %p80 = scmp.eq.s32.totalorder %s19, 0
    %p81 = por %p79, %p80
    %p82 = scmp.ne.s32.totalorder %s74, %s76
    %p83 = scmp.eq.s32.totalorder %s24, 1
    %p84 = por %p82, %p83
    %p85 = scmp.ne.s32.totalorder %s76, %s77
    %p86 = scmp.eq.s32.totalorder %s24, 0
    %p87 = por %p85, %p86
    %p88 = scmp.ne.s32.totalorder %s76, %s77
    %p89 = scmp.eq.s32.totalorder %s25, 1
    %p90 = por %p88, %p89
    %p92 = scmp.ne.s32.totalorder %s77, %s91
    %p93 = scmp.eq.s32.totalorder %s25, 0
    %p94 = por %p92, %p93
    %s96 = sadd.s32 %s95, 1
    %p99 = scmp.eq.s32.totalorder %s19, 1
    %p100 = scmp.ne.s32.totalorder %s95, %s97
    %p101 = scmp.eq.s32.totalorder %s19, 0
    %p102 = por %p100, %p101
    %p103 = scmp.ne.s32.totalorder %s95, %s97
    %p104 = scmp.eq.s32.totalorder %s24, 1
    %p105 = por %p103, %p104
    %p106 = scmp.ne.s32.totalorder %s97, %s98
    %p107 = scmp.eq.s32.totalorder %s24, 0
    %p108 = por %p106, %p107
    %p109 = scmp.ne.s32.totalorder %s97, %s98
    %p110 = scmp.eq.s32.totalorder %s25, 1
    %p111 = por %p109, %p110
    %p113 = scmp.ne.s32.totalorder %s98, %s112
    %p114 = scmp.eq.s32.totalorder %s25, 0
    %p115 = por %p113, %p114
    %s117 = sadd.s32 %s116, 1
    %p120 = scmp.eq.s32.totalorder %s19, 1
    %p121 = scmp.ne.s32.totalorder %s116, %s118
    %p122 = scmp.eq.s32.totalorder %s19, 0
    %p123 = por %p121, %p122
    %p124 = scmp.ne.s32.totalorder %s116, %s118
    %p125 = scmp.eq.s32.totalorder %s24, 1
    %p126 = por %p124, %p125
    %p127 = scmp.ne.s32.totalorder %s118, %s119
    %p128 = scmp.eq.s32.totalorder %s24, 0
    %p129 = por %p127, %p128
    %p130 = scmp.ne.s32.totalorder %s118, %s119
    %p131 = scmp.eq.s32.totalorder %s25, 1
    %p132 = por %p130, %p131
    %p134 = scmp.ne.s32.totalorder %s119, %s133
    %p135 = scmp.eq.s32.totalorder %s25, 0
    %p136 = por %p134, %p135
    %s138 = sadd.s32 %s137, 1
    %p141 = scmp.eq.s32.totalorder %s19, 1
    %p142 = scmp.ne.s32.totalorder %s137, %s139
    %p143 = scmp.eq.s32.totalorder %s19, 0
    %p144 = por %p142, %p143
    %p145 = scmp.ne.s32.totalorder %s137, %s139
    %p146 = scmp.eq.s32.totalorder %s24, 1
    %p147 = por %p145, %p146
    %p148 = scmp.ne.s32.totalorder %s139, %s140
    %p149 = scmp.eq.s32.totalorder %s24, 0
    %p150 = por %p148, %p149
    %p151 = scmp.ne.s32.totalorder %s139, %s140
    %p152 = scmp.eq.s32.totalorder %s25, 1
    %p153 = por %p151, %p152
    %p155 = scmp.ne.s32.totalorder %s140, %s154
    %p156 = scmp.eq.s32.totalorder %s25, 0
    %p157 = por %p155, %p156
    %s159 = sadd.s32 %s158, 1
    %p162 = scmp.eq.s32.totalorder %s19, 1
    %p163 = scmp.ne.s32.totalorder %s158, %s160
    %p164 = scmp.eq.s32.totalorder %s19, 0
    %p165 = por %p163, %p164
    %p166 = scmp.ne.s32.totalorder %s158, %s160
    %p167 = scmp.eq.s32.totalorder %s24, 1
    %p168 = por %p166, %p167
    %p169 = scmp.ne.s32.totalorder %s160, %s161
    %p170 = scmp.eq.s32.totalorder %s24, 0
    %p171 = por %p169, %p170
    %p172 = scmp.ne.s32.totalorder %s160, %s161
    %p173 = scmp.eq.s32.totalorder %s25, 1
    %p174 = por %p172, %p173
    %p176 = scmp.ne.s32.totalorder %s161, %s175
    %p177 = scmp.eq.s32.totalorder %s25, 0
    %p178 = por %p176, %p177
    %s180 = sadd.s32 %s179, 1
    %p183 = scmp.eq.s32.totalorder %s19, 1
    %p184 = scmp.ne.s32.totalorder %s179, %s181
    %p185 = scmp.eq.s32.totalorder %s19, 0
    %p186 = por %p184, %p185
    %p187 = scmp.ne.s32.totalorder %s179, %s181
    %p188 = scmp.eq.s32.totalorder %s24, 1
    %p189 = por %p187, %p188
    %p190 = scmp.ne.s32.totalorder %s181, %s182
    %p191 = scmp.eq.s32.totalorder %s24, 0
    %p192 = por %p190, %p191
    %p193 = scmp.ne.s32.totalorder %s181, %s182
    %p194 = scmp.eq.s32.totalorder %s25, 1
    %p195 = por %p193, %p194
    %p197 = scmp.ne.s32.totalorder %s182, %s196
    %p198 = scmp.eq.s32.totalorder %s25, 0
    %p199 = por %p197, %p198
    %s201 = sadd.s32 %s200, 1
    %p204 = scmp.eq.s32.totalorder %s19, 1
    %p205 = scmp.ne.s32.totalorder %s200, %s202
    %p206 = scmp.eq.s32.totalorder %s19, 0
    %p207 = por %p205, %p206
    %p208 = scmp.ne.s32.totalorder %s200, %s202
    %p209 = scmp.eq.s32.totalorder %s24, 1
    %p210 = por %p208, %p209
    %p211 = scmp.ne.s32.totalorder %s202, %s203
    %p212 = scmp.eq.s32.totalorder %s24, 0
    %p213 = por %p211, %p212
    %p214 = scmp.ne.s32.totalorder %s202, %s203
    %p215 = scmp.eq.s32.totalorder %s25, 1
    %p216 = por %p214, %p215
    %p218 = scmp.ne.s32.totalorder %s203, %s217
    %p219 = scmp.eq.s32.totalorder %s25, 0
    %p220 = por %p218, %p219
    %s222 = sadd.s32 %s221, 1
    %p225 = scmp.eq.s32.totalorder %s19, 1
    %p226 = scmp.ne.s32.totalorder %s221, %s223
    %p227 = scmp.eq.s32.totalorder %s19, 0
    %p228 = por %p226, %p227
    %p229 = scmp.ne.s32.totalorder %s221, %s223
    %p230 = scmp.eq.s32.totalorder %s24, 1
    %p231 = por %p229, %p230
    %p232 = scmp.ne.s32.totalorder %s223, %s224
    %p233 = scmp.eq.s32.totalorder %s24, 0
    %p234 = por %p232, %p233
    %p235 = scmp.ne.s32.totalorder %s223, %s224
    %p236 = scmp.eq.s32.totalorder %s25, 1
    %p237 = por %p235, %p236
    %p239 = scmp.ne.s32.totalorder %s224, %s238
    %p240 = scmp.eq.s32.totalorder %s25, 0
    %p241 = por %p239, %p240
    %s243 = sadd.s32 %s242, 1
    %p246 = scmp.eq.s32.totalorder %s19, 1
    %p247 = scmp.ne.s32.totalorder %s242, %s244
    %p248 = scmp.eq.s32.totalorder %s19, 0
    %p249 = por %p247, %p248
    %p250 = scmp.ne.s32.totalorder %s242, %s244
    %p251 = scmp.eq.s32.totalorder %s24, 1
    %p252 = por %p250, %p251
    %p253 = scmp.ne.s32.totalorder %s244, %s245
    %p254 = scmp.eq.s32.totalorder %s24, 0
    %p255 = por %p253, %p254
    %p256 = scmp.ne.s32.totalorder %s244, %s245
    %p257 = scmp.eq.s32.totalorder %s25, 1
    %p258 = por %p256, %p257
    %p260 = scmp.ne.s32.totalorder %s245, %s259
    %p261 = scmp.eq.s32.totalorder %s25, 0
    %p262 = por %p260, %p261
    %s264 = sadd.s32 %s263, 1
    %p267 = scmp.eq.s32.totalorder %s19, 1
    %p268 = scmp.ne.s32.totalorder %s263, %s265
    %p269 = scmp.eq.s32.totalorder %s19, 0
    %p270 = por %p268, %p269
    %p271 = scmp.ne.s32.totalorder %s263, %s265
    %p272 = scmp.eq.s32.totalorder %s24, 1
    %p273 = por %p271, %p272
    %p274 = scmp.ne.s32.totalorder %s265, %s266
    %p275 = scmp.eq.s32.totalorder %s24, 0
    %p276 = por %p274, %p275
    %p277 = scmp.ne.s32.totalorder %s265, %s266
    %p278 = scmp.eq.s32.totalorder %s25, 1
    %p279 = por %p277, %p278
    %p281 = scmp.ne.s32.totalorder %s266, %s280
    %p282 = scmp.eq.s32.totalorder %s25, 0
    %p283 = por %p281, %p282
    %s285 = sadd.s32 %s284, 1
    %p288 = scmp.eq.s32.totalorder %s19, 1
    %p289 = scmp.ne.s32.totalorder %s284, %s286
    %p290 = scmp.eq.s32.totalorder %s19, 0
    %p291 = por %p289, %p290
    %p292 = scmp.ne.s32.totalorder %s284, %s286
    %p293 = scmp.eq.s32.totalorder %s24, 1
    %p294 = por %p292, %p293
    %p295 = scmp.ne.s32.totalorder %s286, %s287
    %p296 = scmp.eq.s32.totalorder %s24, 0
    %p297 = por %p295, %p296
    %p298 = scmp.ne.s32.totalorder %s286, %s287
    %p299 = scmp.eq.s32.totalorder %s25, 1
    %p300 = por %p298, %p299
    %p302 = scmp.ne.s32.totalorder %s287, %s301
    %p303 = scmp.eq.s32.totalorder %s25, 0
    %p304 = por %p302, %p303
    %s305 = ssub.s32 %s19, %s26
    %p306 = scmp.eq.s32.totalorder %s305, 0
    %s308 = sadd.s32 %s307, 1
    %s309 = scalar_select %p306, %s307, %s308
    %p312 = pneg %p306
    %p313 = scmp.eq.s32.totalorder %s19, 1
    %p314 = por %p312, %p313
    %p315 = scmp.ne.s32.totalorder %s307, %s310
    %p316 = scmp.eq.s32.totalorder %s19, 0
    %p317 = por %p315, %p316
    %p318 = scmp.ne.s32.totalorder %s307, %s310
    %p319 = scmp.eq.s32.totalorder %s24, 1
    %p320 = por %p318, %p319
    %p321 = scmp.ne.s32.totalorder %s310, %s311
    %p322 = scmp.eq.s32.totalorder %s24, 0
    %p323 = por %p321, %p322
    %p324 = scmp.ne.s32.totalorder %s310, %s311
    %p325 = scmp.eq.s32.totalorder %s25, 1
    %p326 = por %p324, %p325
    %p328 = scmp.ne.s32.totalorder %s311, %s327
    %p329 = scmp.eq.s32.totalorder %s25, 0
    %p330 = por %p328, %p329
    %p331 = scmp.le.s32.totalorder 1, %s19
    %p332 = scmp.lt.s32.totalorder %s19, 3
    %p333 = pnand %p331, %p332
    %p334 = pneg %p333
    // Predicated region
    $region9: #{deep_prompt_clip_forward.8} parent=5 // pred_check
      _
    $region10: #{deep_prompt_clip_forward.8} parent=5 // pred_check_branch
      %336 = sbr.rel (%p333) target = $region12
    $region11: #{deep_prompt_clip_forward.8} parent=5 // pred_region
      %s337 = ssub.s32 %s19, 1
      // Predicated region
      $region13: #{deep_prompt_clip_forward.8} parent=11 // pred_check
        %p338 = pneg %p66
      $region14: #{deep_prompt_clip_forward.8} parent=11 // pred_check_branch
        %340 = sbr.rel (%p338) target = $region16
      $region15: #{deep_prompt_clip_forward.8} parent=11 // pred_region
        _
      $region16: #{deep_prompt_clip_forward.8} parent=11 // pred_fallthru
        _
      // Predicated region
      $region17: #{deep_prompt_clip_forward.8} parent=11 // pred_check
        %p341 = pneg %p87
      $region18: #{deep_prompt_clip_forward.8} parent=11 // pred_check_branch
        %343 = sbr.rel (%p341) target = $region20
      $region19: #{deep_prompt_clip_forward.8} parent=11 // pred_region
        _
      $region20: #{deep_prompt_clip_forward.8} parent=11 // pred_fallthru
        _
      // Predicated region
      $region21: #{deep_prompt_clip_forward.8} parent=11 // pred_check
        %p344 = pneg %p108
      $region22: #{deep_prompt_clip_forward.8} parent=11 // pred_check_branch
        %346 = sbr.rel (%p344) target = $region24
      $region23: #{deep_prompt_clip_forward.8} parent=11 // pred_region
        _
      $region24: #{deep_prompt_clip_forward.8} parent=11 // pred_fallthru
        _
      // Predicated region
      $region25: #{deep_prompt_clip_forward.8} parent=11 // pred_check
        %p347 = pneg %p129
      $region26: #{deep_prompt_clip_forward.8} parent=11 // pred_check_branch
        %349 = sbr.rel (%p347) target = $region28
      $region27: #{deep_prompt_clip_forward.8} parent=11 // pred_region
        _
      $region28: #{deep_prompt_clip_forward.8} parent=11 // pred_fallthru
        _
      // Predicated region
      $region29: #{deep_prompt_clip_forward.8} parent=11 // pred_check
        %p350 = pneg %p150
      $region30: #{deep_prompt_clip_forward.8} parent=11 // pred_check_branch
        %352 = sbr.rel (%p350) target = $region32
      $region31: #{deep_prompt_clip_forward.8} parent=11 // pred_region
        _
      $region32: #{deep_prompt_clip_forward.8} parent=11 // pred_fallthru
        _
      // Predicated region
      $region33: #{deep_prompt_clip_forward.8} parent=11 // pred_check
        %p353 = pneg %p171
      $region34: #{deep_prompt_clip_forward.8} parent=11 // pred_check_branch
        %355 = sbr.rel (%p353) target = $region36
      $region35: #{deep_prompt_clip_forward.8} parent=11 // pred_region
        _
      $region36: #{deep_prompt_clip_forward.8} parent=11 // pred_fallthru
        _
      // Predicated region
      $region37: #{deep_prompt_clip_forward.8} parent=11 // pred_check
        %p356 = pneg %p192
      $region38: #{deep_prompt_clip_forward.8} parent=11 // pred_check_branch
        %358 = sbr.rel (%p356) target = $region40
      $region39: #{deep_prompt_clip_forward.8} parent=11 // pred_region
        _
      $region40: #{deep_prompt_clip_forward.8} parent=11 // pred_fallthru
        _
      // Predicated region
      $region41: #{deep_prompt_clip_forward.8} parent=11 // pred_check
        %p359 = pneg %p213
      $region42: #{deep_prompt_clip_forward.8} parent=11 // pred_check_branch
        %361 = sbr.rel (%p359) target = $region44
      $region43: #{deep_prompt_clip_forward.8} parent=11 // pred_region
        _
      $region44: #{deep_prompt_clip_forward.8} parent=11 // pred_fallthru
        _
      // Predicated region
      $region45: #{deep_prompt_clip_forward.8} parent=11 // pred_check
        %p362 = pneg %p234
      $region46: #{deep_prompt_clip_forward.8} parent=11 // pred_check_branch
        %364 = sbr.rel (%p362) target = $region48
      $region47: #{deep_prompt_clip_forward.8} parent=11 // pred_region
        _
      $region48: #{deep_prompt_clip_forward.8} parent=11 // pred_fallthru
        _
      // Predicated region
      $region49: #{deep_prompt_clip_forward.8} parent=11 // pred_check
        %p365 = pneg %p255
      $region50: #{deep_prompt_clip_forward.8} parent=11 // pred_check_branch
        %367 = sbr.rel (%p365) target = $region52
      $region51: #{deep_prompt_clip_forward.8} parent=11 // pred_region
        _
      $region52: #{deep_prompt_clip_forward.8} parent=11 // pred_fallthru
        _
      // Predicated region
      $region53: #{deep_prompt_clip_forward.8} parent=11 // pred_check
        %p368 = pneg %p276
      $region54: #{deep_prompt_clip_forward.8} parent=11 // pred_check_branch
        %370 = sbr.rel (%p368) target = $region56
      $region55: #{deep_prompt_clip_forward.8} parent=11 // pred_region
        _
      $region56: #{deep_prompt_clip_forward.8} parent=11 // pred_fallthru
        _
      // Predicated region
      $region57: #{deep_prompt_clip_forward.8} parent=11 // pred_check
        %p371 = pneg %p297
      $region58: #{deep_prompt_clip_forward.8} parent=11 // pred_check_branch
        %373 = sbr.rel (%p371) target = $region60
      $region59: #{deep_prompt_clip_forward.8} parent=11 // pred_region
        _
      $region60: #{deep_prompt_clip_forward.8} parent=11 // pred_fallthru
        _
    $region12: #{deep_prompt_clip_forward.8} parent=5 // pred_fallthru
      _
    %p374 = scmp.lt.s32.totalorder %s19, 2
    // Predicated region
    $region61: #{deep_prompt_clip_forward.8} parent=5 // pred_check
      %p375 = pneg %p374
    $region62: #{deep_prompt_clip_forward.8} parent=5 // pred_check_branch
      %377 = sbr.rel (%p375) target = $region64
    $region63: #{deep_prompt_clip_forward.8} parent=5 // pred_region
      // Predicated region
      $region65: #{deep_prompt_clip_forward.8} parent=63 // pred_check
        %p378 = pneg %p39
      $region66: #{deep_prompt_clip_forward.8} parent=63 // pred_check_branch
        %380 = sbr.rel (%p378) target = $region68
      $region67: #{deep_prompt_clip_forward.8} parent=63 // pred_region
        %p381 = scmp.lt.s32.totalorder %s19, 1
        %s382 = scalar_select %p381, %s19, 1
        %s383 = smul.addr %s382, 8
        %s384 = scalar_lea.vmem %s0, %s383
      $region68: #{deep_prompt_clip_forward.8} parent=63 // pred_fallthru
        _
    $region64: #{deep_prompt_clip_forward.8} parent=5 // pred_fallthru
      _
    %p385 = scmp.le.s32.totalorder 1, %s19
    %p386 = scmp.lt.s32.totalorder %s19, 3
    %p387 = pnand %p385, %p386
    %p388 = pneg %p387
    // Predicated region
    $region69: #{deep_prompt_clip_forward.8} parent=5 // pred_check
      _
    $region70: #{deep_prompt_clip_forward.8} parent=5 // pred_check_branch
      %390 = sbr.rel (%p387) target = $region72
    $region71: #{deep_prompt_clip_forward.8} parent=5 // pred_region
      %s391 = ssub.s32 %s19, 1
      %p392 = scmp.lt.s32.totalorder %s24, 1
      %s393 = scalar_select %p392, %s24, 1
      %s394 = smul.addr %s393, 8
      %s395 = scalar_lea.vmem %s0, %s394
      %p396 = pneg %p45
      %p397 = pneg %p42
      %p398 = pneg %p66
      %p399 = pneg %p63
      %p400 = pneg %p87
      %p401 = pneg %p84
      %p402 = pneg %p108
      %p403 = pneg %p105
      %p404 = pneg %p129
      %p405 = pneg %p126
      %p406 = pneg %p150
      %p407 = pneg %p147
      %p408 = pneg %p171
      %p409 = pneg %p168
      %p410 = pneg %p192
      %p411 = pneg %p189
      %p412 = pneg %p213
      %p413 = pneg %p210
      %p414 = pneg %p234
      %p415 = pneg %p231
      %p416 = pneg %p255
      %p417 = pneg %p252
      %p418 = pneg %p276
      %p419 = pneg %p273
      %p420 = pneg %p297
      %p421 = pneg %p294
      %p422 = pneg %p323
      %p423 = pneg %p320
      %p424 = scmp.lt.s32.totalorder %s24, 1
      %s425 = scalar_select %p424, %s24, 1
      %s426 = smul.addr %s425, 8
      %s427 = scalar_lea.vmem %s13, %s426
      %p428 = scmp.lt.s32.totalorder %s24, 1
      %s429 = scalar_select %p428, %s24, 1
      %s430 = smul.addr %s429, 8
      %s431 = scalar_lea.vmem %s0, %s430
      %p432 = scmp.lt.s32.totalorder %s24, 1
      %s433 = scalar_select %p432, %s24, 1
      %s434 = smul.addr %s433, 8
      %s435 = scalar_lea.vmem %s13, %s434
      %v437 = vld [vmem:[%s431] sm:$0x7f]
      %v438 = vld [vmem:[%s1] sm:$0x1]
      %v439 = vld [vmem:[%s2] sm:$0x1]
      %vm440 = vcmask 260096
      %v441 = vsel %vm440, %v437, 0.0
      %442 = vadd.xlane.f32.xlu0 %v441
      %v443 = vpop.xlane.xlu0 %442
      %v444 = vrcp.pop 32.0
      %v445 = vmul.f32 %v443, %v444
      %v446 = vsub.f32 %v437, %v445
      %v447 = vmul.f32 %v446, %v446
      %v448 = vsel %vm440, %v447, 0.0
      %449 = vadd.xlane.f32.xlu0 %v448
      %v450 = vpop.xlane.xlu0 %449
      %v451 = vmul.f32 %v450, %v444
      %v452 = vadd.f32 %v451, 1e-05
      %v453 = vrsqrt.pop %v452
      %v454 = vmul.f32 %v446, %v453
      %v456 = vlaneseq
      %v457 = vshrl.u32 %v456, 7
      %v458 = vsub.s32 0, %v457
      %v459 = vrot.slane %v438, %v458
      %v461 = vmul.f32 %v454, %v459
      %v463 = vlaneseq
      %v464 = vshrl.u32 %v463, 7
      %v465 = vsub.s32 0, %v464
      %v466 = vrot.slane %v439, %v465
      %v468 = vadd.f32 %v461, %v466
      %v469 = vpack.c.bf16 %v468, %v468
      %v470 = vld [vmem:[%s3] sm:$0xf]
      %v471 = vld [vmem:[%s3 + $0x4] sm:$0xf]
      %v472 = vld [vmem:[%s3 + $0x8] sm:$0xf]
      %v473 = vld [vmem:[%s3 + $0xc] sm:$0xf]
      %v474 = vld [vmem:[%s4] sm:$0x1]
      %v476 = vlaneseq
      %v477 = vshrl.u32 %v476, 7
      %v478 = vsub.s32 0, %v477
      %v479 = vrot.slane %v474, %v478
      %v485 = vunpack.c.l.b16 %v470
      %v486 = vunpack.c.l.b16 %v471
      %v487 = vunpack.c.l.b16 %v472
      %v488 = vunpack.c.l.b16 %v473
      %v489 = vpack.c.b16 %v486, %v485
      %v490 = vpack.c.b16 %v488, %v487
      %vm493 = vcmask 261120
      %v495 = vsel %vm493, %v469, 0
      %497 = vmatprep.subr.bf16.mxu0 0
      %498 = vmatpush1.bf16.msra.mxu0 %v489
      %499 = vmatprep.subr.bf16.mxu0 0
      %500 = vmatpush1.bf16.msra.mxu0 %v490
      %501 = vmatprep.subr.bf16.mxu0 0
      %502 = vmatpush1.bf16.msra.mxu0 0
      %503 = vmatprep.subr.bf16.mxu0 0
      %504 = vmatpush1.bf16.msra.mxu0 0
      %505 = vmatprep.subr.bf16.mxu0 0
      %506 = vmatpush1.bf16.msra.mxu0 0
      %507 = vmatprep.subr.bf16.mxu0 0
      %508 = vmatpush1.bf16.msra.mxu0 0
      %509 = vmatprep.subr.bf16.mxu0 0
      %510 = vmatpush1.bf16.msra.mxu0 0
      %511 = vmatprep.subr.bf16.mxu0 0
      %512 = vmatpush1.bf16.msra.mxu0 0
      %513 = vmatprep.subr.bf16.mxu0 0
      %514 = vmatpush1.bf16.msra.mxu0 0
      %515 = vmatprep.subr.bf16.mxu0 0
      %516 = vmatpush1.bf16.msra.mxu0 0
      %517 = vmatprep.subr.bf16.mxu0 0
      %518 = vmatpush1.bf16.msra.mxu0 0
      %519 = vmatprep.subr.bf16.mxu0 0
      %520 = vmatpush1.bf16.msra.mxu0 0
      %521 = vmatprep.subr.bf16.mxu0 0
      %522 = vmatpush1.bf16.msra.mxu0 0
      %523 = vmatprep.subr.bf16.mxu0 0
      %524 = vmatpush1.bf16.msra.mxu0 0
      %525 = vmatprep.subr.bf16.mxu0 0
      %526 = vmatpush1.bf16.msra.mxu0 0
      %527 = vmatprep.subr.bf16.mxu0 0
      %528 = vmatpush1.bf16.msra.mxu0 0
      %529 = vmatprep.mubr.bf16.mxu0 0
      %530 = vmatmul.mubr.bf16.gmra.mrb[0].mxu0 %v495
      %v531 = vpop.f32.mrb[0].mxu0
      %v532 = vadd.f32 %v479, %v531
      %v533 = vpop.f32.mrb[0].mxu0
      %v534 = vpop.f32.mrb[0].mxu0
      %v535 = vpop.f32.mrb[0].mxu0
      %536 = vdwg.mxu0
      %v537 = vpack.c.bf16 %v532, %v532
      %539 = vrot.lane.b32.xlu0 %v537, 96
      %v540 = vpop.permute.xlu0 %539
      %vm541 = vcmask 64512
      %v543 = vsel %vm541, %v537, 0
      %v546 = vsel %vm541, %v540, 0
      %548 = vmatprep.subr.bf16.mxu0 0
      %549 = vmatpush1.bf16.xpose.msra.mxu0 %v546
      %550 = vmatprep.subr.bf16.mxu0 0
      %551 = vmatpush1.bf16.xpose.msra.mxu0 0
      %552 = vmatprep.subr.bf16.mxu0 0
      %553 = vmatpush1.bf16.xpose.msra.mxu0 0
      %554 = vmatprep.subr.bf16.mxu0 0
      %555 = vmatpush1.bf16.xpose.msra.mxu0 0
      %556 = vmatprep.subr.bf16.mxu0 0
      %557 = vmatpush1.bf16.xpose.msra.mxu0 0
      %558 = vmatprep.subr.bf16.mxu0 0
      %559 = vmatpush1.bf16.xpose.msra.mxu0 0
      %560 = vmatprep.subr.bf16.mxu0 0
      %561 = vmatpush1.bf16.xpose.msra.mxu0 0
      %562 = vmatprep.subr.bf16.mxu0 0
      %563 = vmatpush1.bf16.xpose.msra.mxu0 0
      %564 = vmatprep.subr.bf16.mxu0 0
      %565 = vmatpush1.bf16.xpose.msra.mxu0 0
      %566 = vmatprep.subr.bf16.mxu0 0
      %567 = vmatpush1.bf16.xpose.msra.mxu0 0
      %568 = vmatprep.subr.bf16.mxu0 0
      %569 = vmatpush1.bf16.xpose.msra.mxu0 0
      %570 = vmatprep.subr.bf16.mxu0 0
      %571 = vmatpush1.bf16.xpose.msra.mxu0 0
      %572 = vmatprep.subr.bf16.mxu0 0
      %573 = vmatpush1.bf16.xpose.msra.mxu0 0
      %574 = vmatprep.subr.bf16.mxu0 0
      %575 = vmatpush1.bf16.xpose.msra.mxu0 0
      %576 = vmatprep.subr.bf16.mxu0 0
      %577 = vmatpush1.bf16.xpose.msra.mxu0 0
      %578 = vmatprep.subr.bf16.mxu0 0
      %579 = vmatpush1.bf16.xpose.msra.mxu0 0
      %580 = vmatprep.mubr.bf16.mxu0 0
      %581 = vmatmul.mubr.bf16.gmra.mrb[0].mxu0 %v543
      %v582 = vpop.f32.mrb[0].mxu0
      %v583 = vadd.f32 0.0, %v582
      %v584 = vpop.f32.mrb[0].mxu0
      %v585 = vpop.f32.mrb[0].mxu0
      %v586 = vpop.f32.mrb[0].mxu0
      %587 = vdwg.mxu0
      %vm588 = vcmask 55296
      %v589 = vsel %vm588, %v583, -inf
      %590 = vmax.xlane.f32.xlu0 %v589
      %v591 = vpop.xlane.xlu0 %590
      %v592 = vsub.f32 %v583, %v591
      %v593 = vmul.f32 %v592, 1.442695
      %v594 = vpow.pop %v593
      %v595 = vsel %vm588, %v594, 0.0
      %596 = vadd.xlane.f32.xlu0 %v595
      %v597 = vpop.xlane.xlu0 %596
      %v598 = vrcp.pop %v597
      %v599 = vmul.f32 %v594, %v598
      %v600 = vpack.c.bf16 %v599, %v599
      %601 = vrot.lane.b32.xlu0 %v537, 64
      %v602 = vpop.permute.xlu0 %601
      %vm603 = vcmask 56320
      %v605 = vsel %vm603, %v600, 0
      %vm607 = vcmask 1042432
      %vm608 = vcmask 1043456
      %v609 = vsel %vm607, 4294967295, 65535
      %v610 = vsel %vm608, %v609, 0
      %v612 = vand.u32 %v602, %v610
      %614 = vmatprep.subr.bf16.mxu0 0
      %615 = vmatpush1.bf16.msra.mxu0 %v612
      %616 = vmatprep.subr.bf16.mxu0 0
      %617 = vmatpush1.bf16.msra.mxu0 0
      %618 = vmatprep.subr.bf16.mxu0 0
      %619 = vmatpush1.bf16.msra.mxu0 0
      %620 = vmatprep.subr.bf16.mxu0 0
      %621 = vmatpush1.bf16.msra.mxu0 0
      %622 = vmatprep.subr.bf16.mxu0 0
      %623 = vmatpush1.bf16.msra.mxu0 0
      %624 = vmatprep.subr.bf16.mxu0 0
      %625 = vmatpush1.bf16.msra.mxu0 0
      %626 = vmatprep.subr.bf16.mxu0 0
      %627 = vmatpush1.bf16.msra.mxu0 0
      %628 = vmatprep.subr.bf16.mxu0 0
      %629 = vmatpush1.bf16.msra.mxu0 0
      %630 = vmatprep.subr.bf16.mxu0 0
      %631 = vmatpush1.bf16.msra.mxu0 0
      %632 = vmatprep.subr.bf16.mxu0 0
      %633 = vmatpush1.bf16.msra.mxu0 0
      %634 = vmatprep.subr.bf16.mxu0 0
      %635 = vmatpush1.bf16.msra.mxu0 0
      %636 = vmatprep.subr.bf16.mxu0 0
      %637 = vmatpush1.bf16.msra.mxu0 0
      %638 = vmatprep.subr.bf16.mxu0 0
      %639 = vmatpush1.bf16.msra.mxu0 0
      %640 = vmatprep.subr.bf16.mxu0 0
      %641 = vmatpush1.bf16.msra.mxu0 0
      %642 = vmatprep.subr.bf16.mxu0 0
      %643 = vmatpush1.bf16.msra.mxu0 0
      %644 = vmatprep.subr.bf16.mxu0 0
      %645 = vmatpush1.bf16.msra.mxu0 0
      %646 = vmatprep.mubr.bf16.mxu0 0
      %647 = vmatmul.mubr.bf16.gmra.mrb[0].mxu0 %v605
      %v648 = vpop.f32.mrb[0].mxu0
      %v649 = vadd.f32 0.0, %v648
      %v650 = vpop.f32.mrb[0].mxu0
      %v651 = vpop.f32.mrb[0].mxu0
      %v652 = vpop.f32.mrb[0].mxu0
      %653 = vdwg.mxu0
      %654 = vrot.lane.b32.xlu0 %v537, 120
      %v655 = vpop.permute.xlu0 %654
      %656 = vrot.lane.b32.xlu0 %v537, 88
      %v657 = vpop.permute.xlu0 %656
      %v659 = vsel %vm541, %v655, 0
      %v662 = vsel %vm541, %v657, 0
      %664 = vmatprep.subr.bf16.mxu0 0
      %665 = vmatpush1.bf16.xpose.msra.mxu0 %v662
      %666 = vmatprep.subr.bf16.mxu0 0
      %667 = vmatpush1.bf16.xpose.msra.mxu0 0
      %668 = vmatprep.subr.bf16.mxu0 0
      %669 = vmatpush1.bf16.xpose.msra.mxu0 0
      %670 = vmatprep.subr.bf16.mxu0 0
      %671 = vmatpush1.bf16.xpose.msra.mxu0 0
      %672 = vmatprep.subr.bf16.mxu0 0
      %673 = vmatpush1.bf16.xpose.msra.mxu0 0
      %674 = vmatprep.subr.bf16.mxu0 0
      %675 = vmatpush1.bf16.xpose.msra.mxu0 0
      %676 = vmatprep.subr.bf16.mxu0 0
      %677 = vmatpush1.bf16.xpose.msra.mxu0 0
      %678 = vmatprep.subr.bf16.mxu0 0
      %679 = vmatpush1.bf16.xpose.msra.mxu0 0
      %680 = vmatprep.subr.bf16.mxu0 0
      %681 = vmatpush1.bf16.xpose.msra.mxu0 0
      %682 = vmatprep.subr.bf16.mxu0 0
      %683 = vmatpush1.bf16.xpose.msra.mxu0 0
      %684 = vmatprep.subr.bf16.mxu0 0
      %685 = vmatpush1.bf16.xpose.msra.mxu0 0
      %686 = vmatprep.subr.bf16.mxu0 0
      %687 = vmatpush1.bf16.xpose.msra.mxu0 0
      %688 = vmatprep.subr.bf16.mxu0 0
      %689 = vmatpush1.bf16.xpose.msra.mxu0 0
      %690 = vmatprep.subr.bf16.mxu0 0
      %691 = vmatpush1.bf16.xpose.msra.mxu0 0
      %692 = vmatprep.subr.bf16.mxu0 0
      %693 = vmatpush1.bf16.xpose.msra.mxu0 0
      %694 = vmatprep.subr.bf16.mxu0 0
      %695 = vmatpush1.bf16.xpose.msra.mxu0 0
      %696 = vmatprep.mubr.bf16.mxu0 0
      %697 = vmatmul.mubr.bf16.gmra.mrb[0].mxu0 %v659
      %v698 = vpop.f32.mrb[0].mxu0
      %v699 = vadd.f32 0.0, %v698
      %v700 = vpop.f32.mrb[0].mxu0
      %v701 = vpop.f32.mrb[0].mxu0
      %v702 = vpop.f32.mrb[0].mxu0
      %703 = vdwg.mxu0
      %v704 = vsel %vm588, %v699, -inf
      %705 = vmax.xlane.f32.xlu0 %v704
      %v706 = vpop.xlane.xlu0 %705
      %v707 = vsub.f32 %v699, %v706
      %v708 = vmul.f32 %v707, 1.442695
      %v709 = vpow.pop %v708
      %v710 = vsel %vm588, %v709, 0.0
      %711 = vadd.xlane.f32.xlu0 %v710
      %v712 = vpop.xlane.xlu0 %711
      %v713 = vrcp.pop %v712
      %v714 = vmul.f32 %v709, %v713
      %v715 = vpack.c.bf16 %v714, %v714
      %716 = vrot.lane.b32.xlu0 %v537, 56
      %v717 = vpop.permute.xlu0 %716
      %v719 = vsel %vm603, %v715, 0
      %v722 = vand.u32 %v717, %v610
      %724 = vmatprep.subr.bf16.mxu0 0
      %725 = vmatpush1.bf16.msra.mxu0 %v722
      %726 = vmatprep.subr.bf16.mxu0 0
      %727 = vmatpush1.bf16.msra.mxu0 0
      %728 = vmatprep.subr.bf16.mxu0 0
      %729 = vmatpush1.bf16.msra.mxu0 0
      %730 = vmatprep.subr.bf16.mxu0 0
      %731 = vmatpush1.bf16.msra.mxu0 0
      %732 = vmatprep.subr.bf16.mxu0 0
      %733 = vmatpush1.bf16.msra.mxu0 0
      %734 = vmatprep.subr.bf16.mxu0 0
      %735 = vmatpush1.bf16.msra.mxu0 0
      %736 = vmatprep.subr.bf16.mxu0 0
      %737 = vmatpush1.bf16.msra.mxu0 0
      %738 = vmatprep.subr.bf16.mxu0 0
      %739 = vmatpush1.bf16.msra.mxu0 0
      %740 = vmatprep.subr.bf16.mxu0 0
      %741 = vmatpush1.bf16.msra.mxu0 0
      %742 = vmatprep.subr.bf16.mxu0 0
      %743 = vmatpush1.bf16.msra.mxu0 0
      %744 = vmatprep.subr.bf16.mxu0 0
      %745 = vmatpush1.bf16.msra.mxu0 0
      %746 = vmatprep.subr.bf16.mxu0 0
      %747 = vmatpush1.bf16.msra.mxu0 0
      %748 = vmatprep.subr.bf16.mxu0 0
      %749 = vmatpush1.bf16.msra.mxu0 0
      %750 = vmatprep.subr.bf16.mxu0 0
      %751 = vmatpush1.bf16.msra.mxu0 0
      %752 = vmatprep.subr.bf16.mxu0 0
      %753 = vmatpush1.bf16.msra.mxu0 0
      %754 = vmatprep.subr.bf16.mxu0 0
      %755 = vmatpush1.bf16.msra.mxu0 0
      %756 = vmatprep.mubr.bf16.mxu0 0
      %757 = vmatmul.mubr.bf16.gmra.mrb[0].mxu0 %v719
      %v758 = vpop.f32.mrb[0].mxu0
      %v759 = vadd.f32 0.0, %v758
      %v760 = vpop.f32.mrb[0].mxu0
      %v761 = vpop.f32.mrb[0].mxu0
      %v762 = vpop.f32.mrb[0].mxu0
      %763 = vdwg.mxu0
      %764 = vrot.lane.b32.xlu0 %v537, 112
      %v765 = vpop.permute.xlu0 %764
      %766 = vrot.lane.b32.xlu0 %v537, 80
      %v767 = vpop.permute.xlu0 %766
      %v769 = vsel %vm541, %v765, 0
      %v772 = vsel %vm541, %v767, 0
      %774 = vmatprep.subr.bf16.mxu0 0
      %775 = vmatpush1.bf16.xpose.msra.mxu0 %v772
      %776 = vmatprep.subr.bf16.mxu0 0
      %777 = vmatpush1.bf16.xpose.msra.mxu0 0
      %778 = vmatprep.subr.bf16.mxu0 0
      %779 = vmatpush1.bf16.xpose.msra.mxu0 0
      %780 = vmatprep.subr.bf16.mxu0 0
      %781 = vmatpush1.bf16.xpose.msra.mxu0 0
      %782 = vmatprep.subr.bf16.mxu0 0
      %783 = vmatpush1.bf16.xpose.msra.mxu0 0
      %784 = vmatprep.subr.bf16.mxu0 0
      %785 = vmatpush1.bf16.xpose.msra.mxu0 0
      %786 = vmatprep.subr.bf16.mxu0 0
      %787 = vmatpush1.bf16.xpose.msra.mxu0 0
      %788 = vmatprep.subr.bf16.mxu0 0
      %789 = vmatpush1.bf16.xpose.msra.mxu0 0
      %790 = vmatprep.subr.bf16.mxu0 0
      %791 = vmatpush1.bf16.xpose.msra.mxu0 0
      %792 = vmatprep.subr.bf16.mxu0 0
      %793 = vmatpush1.bf16.xpose.msra.mxu0 0
      %794 = vmatprep.subr.bf16.mxu0 0
      %795 = vmatpush1.bf16.xpose.msra.mxu0 0
      %796 = vmatprep.subr.bf16.mxu0 0
      %797 = vmatpush1.bf16.xpose.msra.mxu0 0
      %798 = vmatprep.subr.bf16.mxu0 0
      %799 = vmatpush1.bf16.xpose.msra.mxu0 0
      %800 = vmatprep.subr.bf16.mxu0 0
      %801 = vmatpush1.bf16.xpose.msra.mxu0 0
      %802 = vmatprep.subr.bf16.mxu0 0
      %803 = vmatpush1.bf16.xpose.msra.mxu0 0
      %804 = vmatprep.subr.bf16.mxu0 0
      %805 = vmatpush1.bf16.xpose.msra.mxu0 0
      %806 = vmatprep.mubr.bf16.mxu0 0
      %807 = vmatmul.mubr.bf16.gmra.mrb[0].mxu0 %v769
      %v808 = vpop.f32.mrb[0].mxu0
      %v809 = vadd.f32 0.0, %v808
      %v810 = vpop.f32.mrb[0].mxu0
      %v811 = vpop.f32.mrb[0].mxu0
      %v812 = vpop.f32.mrb[0].mxu0
      %813 = vdwg.mxu0
      %v814 = vsel %vm588, %v809, -inf
      %815 = vmax.xlane.f32.xlu0 %v814
      %v816 = vpop.xlane.xlu0 %815
      %v817 = vsub.f32 %v809, %v816
      %v818 = vmul.f32 %v817, 1.442695
      %v819 = vpow.pop %v818
      %v820 = vsel %vm588, %v819, 0.0
      %821 = vadd.xlane.f32.xlu0 %v820
      %v822 = vpop.xlane.xlu0 %821
      %v823 = vrcp.pop %v822
      %v824 = vmul.f32 %v819, %v823
      %v825 = vpack.c.bf16 %v824, %v824
      %826 = vrot.lane.b32.xlu0 %v537, 48
      %v827 = vpop.permute.xlu0 %826
      %v829 = vsel %vm603, %v825, 0
      %v832 = vand.u32 %v827, %v610
      %834 = vmatprep.subr.bf16.mxu0 0
      %835 = vmatpush1.bf16.msra.mxu0 %v832
      %836 = vmatprep.subr.bf16.mxu0 0
      %837 = vmatpush1.bf16.msra.mxu0 0
      %838 = vmatprep.subr.bf16.mxu0 0
      %839 = vmatpush1.bf16.msra.mxu0 0
      %840 = vmatprep.subr.bf16.mxu0 0
      %841 = vmatpush1.bf16.msra.mxu0 0
      %842 = vmatprep.subr.bf16.mxu0 0
      %843 = vmatpush1.bf16.msra.mxu0 0
      %844 = vmatprep.subr.bf16.mxu0 0
      %845 = vmatpush1.bf16.msra.mxu0 0
      %846 = vmatprep.subr.bf16.mxu0 0
      %847 = vmatpush1.bf16.msra.mxu0 0
      %848 = vmatprep.subr.bf16.mxu0 0
      %849 = vmatpush1.bf16.msra.mxu0 0
      %850 = vmatprep.subr.bf16.mxu0 0
      %851 = vmatpush1.bf16.msra.mxu0 0
      %852 = vmatprep.subr.bf16.mxu0 0
      %853 = vmatpush1.bf16.msra.mxu0 0
      %854 = vmatprep.subr.bf16.mxu0 0
      %855 = vmatpush1.bf16.msra.mxu0 0
      %856 = vmatprep.subr.bf16.mxu0 0
      %857 = vmatpush1.bf16.msra.mxu0 0
      %858 = vmatprep.subr.bf16.mxu0 0
      %859 = vmatpush1.bf16.msra.mxu0 0
      %860 = vmatprep.subr.bf16.mxu0 0
      %861 = vmatpush1.bf16.msra.mxu0 0
      %862 = vmatprep.subr.bf16.mxu0 0
      %863 = vmatpush1.bf16.msra.mxu0 0
      %864 = vmatprep.subr.bf16.mxu0 0
      %865 = vmatpush1.bf16.msra.mxu0 0
      %866 = vmatprep.mubr.bf16.mxu0 0
      %867 = vmatmul.mubr.bf16.gmra.mrb[0].mxu0 %v829
      %v868 = vpop.f32.mrb[0].mxu0
      %v869 = vadd.f32 0.0, %v868
      %v870 = vpop.f32.mrb[0].mxu0
      %v871 = vpop.f32.mrb[0].mxu0
      %v872 = vpop.f32.mrb[0].mxu0
      %873 = vdwg.mxu0
      %874 = vrot.lane.b32.xlu0 %v537, 104
      %v875 = vpop.permute.xlu0 %874
      %876 = vrot.lane.b32.xlu0 %v537, 72
      %v877 = vpop.permute.xlu0 %876
      %v879 = vsel %vm541, %v875, 0
      %v882 = vsel %vm541, %v877, 0
      %884 = vmatprep.subr.bf16.mxu0 0
      %885 = vmatpush1.bf16.xpose.msra.mxu0 %v882
      %886 = vmatprep.subr.bf16.mxu0 0
      %887 = vmatpush1.bf16.xpose.msra.mxu0 0
      %888 = vmatprep.subr.bf16.mxu0 0
      %889 = vmatpush1.bf16.xpose.msra.mxu0 0
      %890 = vmatprep.subr.bf16.mxu0 0
      %891 = vmatpush1.bf16.xpose.msra.mxu0 0
      %892 = vmatprep.subr.bf16.mxu0 0
      %893 = vmatpush1.bf16.xpose.msra.mxu0 0
      %894 = vmatprep.subr.bf16.mxu0 0
      %895 = vmatpush1.bf16.xpose.msra.mxu0 0
      %896 = vmatprep.subr.bf16.mxu0 0
      %897 = vmatpush1.bf16.xpose.msra.mxu0 0
      %898 = vmatprep.subr.bf16.mxu0 0
      %899 = vmatpush1.bf16.xpose.msra.mxu0 0
      %900 = vmatprep.subr.bf16.mxu0 0
      %901 = vmatpush1.bf16.xpose.msra.mxu0 0
      %902 = vmatprep.subr.bf16.mxu0 0
      %903 = vmatpush1.bf16.xpose.msra.mxu0 0
      %904 = vmatprep.subr.bf16.mxu0 0
      %905 = vmatpush1.bf16.xpose.msra.mxu0 0
      %906 = vmatprep.subr.bf16.mxu0 0
      %907 = vmatpush1.bf16.xpose.msra.mxu0 0
      %908 = vmatprep.subr.bf16.mxu0 0
      %909 = vmatpush1.bf16.xpose.msra.mxu0 0
      %910 = vmatprep.subr.bf16.mxu0 0
      %911 = vmatpush1.bf16.xpose.msra.mxu0 0
      %912 = vmatprep.subr.bf16.mxu0 0
      %913 = vmatpush1.bf16.xpose.msra.mxu0 0
      %914 = vmatprep.subr.bf16.mxu0 0
      %915 = vmatpush1.bf16.xpose.msra.mxu0 0
      %916 = vmatprep.mubr.bf16.mxu0 0
      %917 = vmatmul.mubr.bf16.gmra.mrb[0].mxu0 %v879
      %v918 = vpop.f32.mrb[0].mxu0
      %v919 = vadd.f32 0.0, %v918
      %v920 = vpop.f32.mrb[0].mxu0
      %v921 = vpop.f32.mrb[0].mxu0
      %v922 = vpop.f32.mrb[0].mxu0
      %923 = vdwg.mxu0
      %v924 = vsel %vm588, %v919, -inf
      %925 = vmax.xlane.f32.xlu0 %v924
      %v926 = vpop.xlane.xlu0 %925
      %v927 = vsub.f32 %v919, %v926
      %v928 = vmul.f32 %v927, 1.442695
      %v929 = vpow.pop %v928
      %v930 = vsel %vm588, %v929, 0.0
      %931 = vadd.xlane.f32.xlu0 %v930
      %v932 = vpop.xlane.xlu0 %931
      %v933 = vrcp.pop %v932
      %v934 = vmul.f32 %v929, %v933
      %v935 = vpack.c.bf16 %v934, %v934
      %936 = vrot.lane.b32.xlu0 %v537, 40
      %v937 = vpop.permute.xlu0 %936
      %v939 = vsel %vm603, %v935, 0
      %v942 = vand.u32 %v937, %v610
      %944 = vmatprep.subr.bf16.mxu0 0
      %945 = vmatpush1.bf16.msra.mxu0 %v942
      %946 = vmatprep.subr.bf16.mxu0 0
      %947 = vmatpush1.bf16.msra.mxu0 0
      %948 = vmatprep.subr.bf16.mxu0 0
      %949 = vmatpush1.bf16.msra.mxu0 0
      %950 = vmatprep.subr.bf16.mxu0 0
      %951 = vmatpush1.bf16.msra.mxu0 0
      %952 = vmatprep.subr.bf16.mxu0 0
      %953 = vmatpush1.bf16.msra.mxu0 0
      %954 = vmatprep.subr.bf16.mxu0 0
      %955 = vmatpush1.bf16.msra.mxu0 0
      %956 = vmatprep.subr.bf16.mxu0 0
      %957 = vmatpush1.bf16.msra.mxu0 0
      %958 = vmatprep.subr.bf16.mxu0 0
      %959 = vmatpush1.bf16.msra.mxu0 0
      %960 = vmatprep.subr.bf16.mxu0 0
      %961 = vmatpush1.bf16.msra.mxu0 0
      %962 = vmatprep.subr.bf16.mxu0 0
      %963 = vmatpush1.bf16.msra.mxu0 0
      %964 = vmatprep.subr.bf16.mxu0 0
      %965 = vmatpush1.bf16.msra.mxu0 0
      %966 = vmatprep.subr.bf16.mxu0 0
      %967 = vmatpush1.bf16.msra.mxu0 0
      %968 = vmatprep.subr.bf16.mxu0 0
      %969 = vmatpush1.bf16.msra.mxu0 0
      %970 = vmatprep.subr.bf16.mxu0 0
      %971 = vmatpush1.bf16.msra.mxu0 0
      %972 = vmatprep.subr.bf16.mxu0 0
      %973 = vmatpush1.bf16.msra.mxu0 0
      %974 = vmatprep.subr.bf16.mxu0 0
      %975 = vmatpush1.bf16.msra.mxu0 0
      %976 = vmatprep.mubr.bf16.mxu0 0
      %977 = vmatmul.mubr.bf16.gmra.mrb[0].mxu0 %v939
      %v978 = vpop.f32.mrb[0].mxu0
      %v979 = vadd.f32 0.0, %v978
      %v980 = vpop.f32.mrb[0].mxu0
      %v981 = vpop.f32.mrb[0].mxu0
      %v982 = vpop.f32.mrb[0].mxu0
      %983 = vdwg.mxu0
      %985 = vrot.lane.b32.xlu0 %v759, 8
      %v986 = vpop.permute.xlu0 %985
      %989 = vrot.lane.b32.xlu0 %v869, 16
      %v990 = vpop.permute.xlu0 %989
      %993 = vrot.lane.b32.xlu0 %v979, 24
      %v994 = vpop.permute.xlu0 %993
      %v996 = vsel %vm541, %v649, %v986
      %vm997 = vcmask 130048
      %v998 = vsel %vm997, %v996, %v990
      %vm999 = vcmask 195584
      %v1000 = vsel %vm999, %v998, %v994
      %v1001 = vpack.c.bf16 %v1000, %v1000
      %v1002 = vld [vmem:[%s5] sm:$0xf]
      %v1003 = vld [vmem:[%s5 + $0x4] sm:$0xf]
      %v1004 = vld [vmem:[%s5 + $0x8] sm:$0xf]
      %v1005 = vld [vmem:[%s5 + $0xc] sm:$0xf]
      %v1010 = vunpack.c.l.b16 %v1002
      %v1011 = vunpack.c.l.b16 %v1003
      %v1012 = vunpack.c.l.b16 %v1004
      %v1013 = vunpack.c.l.b16 %v1005
      %v1014 = vpack.c.b16 %v1011, %v1010
      %v1015 = vpack.c.b16 %v1013, %v1012
      %v1019 = vsel %vm493, %v1001, 0
      %1021 = vmatprep.subr.bf16.mxu0 0
      %1022 = vmatpush1.bf16.msra.mxu0 %v1014
      %1023 = vmatprep.subr.bf16.mxu0 0
      %1024 = vmatpush1.bf16.msra.mxu0 %v1015
      %1025 = vmatprep.subr.bf16.mxu0 0
      %1026 = vmatpush1.bf16.msra.mxu0 0
      %1027 = vmatprep.subr.bf16.mxu0 0
      %1028 = vmatpush1.bf16.msra.mxu0 0
      %1029 = vmatprep.subr.bf16.mxu0 0
      %1030 = vmatpush1.bf16.msra.mxu0 0
      %1031 = vmatprep.subr.bf16.mxu0 0
      %1032 = vmatpush1.bf16.msra.mxu0 0
      %1033 = vmatprep.subr.bf16.mxu0 0
      %1034 = vmatpush1.bf16.msra.mxu0 0
      %1035 = vmatprep.subr.bf16.mxu0 0
      %1036 = vmatpush1.bf16.msra.mxu0 0
      %1037 = vmatprep.subr.bf16.mxu0 0
      %1038 = vmatpush1.bf16.msra.mxu0 0
      %1039 = vmatprep.subr.bf16.mxu0 0
      %1040 = vmatpush1.bf16.msra.mxu0 0
      %1041 = vmatprep.subr.bf16.mxu0 0
      %1042 = vmatpush1.bf16.msra.mxu0 0
      %1043 = vmatprep.subr.bf16.mxu0 0
      %1044 = vmatpush1.bf16.msra.mxu0 0
      %1045 = vmatprep.subr.bf16.mxu0 0
      %1046 = vmatpush1.bf16.msra.mxu0 0
      %1047 = vmatprep.subr.bf16.mxu0 0
      %1048 = vmatpush1.bf16.msra.mxu0 0
      %1049 = vmatprep.subr.bf16.mxu0 0
      %1050 = vmatpush1.bf16.msra.mxu0 0
      %1051 = vmatprep.subr.bf16.mxu0 0
      %1052 = vmatpush1.bf16.msra.mxu0 0
      %1053 = vmatprep.mubr.bf16.mxu0 0
      %1054 = vmatmul.mubr.bf16.gmra.mrb[0].mxu0 %v1019
      %v1055 = vpop.f32.mrb[0].mxu0
      %v1056 = vadd.f32 0.0, %v1055
      %v1057 = vpop.f32.mrb[0].mxu0
      %v1058 = vpop.f32.mrb[0].mxu0
      %v1059 = vpop.f32.mrb[0].mxu0
      %1060 = vdwg.mxu0
      %v1061 = vadd.f32 %v437, %v1056
      %v1062 = vld [vmem:[%s6] sm:$0x1]
      %v1064 = vlaneseq
      %v1065 = vshrl.u32 %v1064, 7
      %v1066 = vsub.s32 0, %v1065
      %v1067 = vrot.slane %v1062, %v1066
      %v1069 = vadd.f32 %v1061, %v1067
      %v1070 = vld [vmem:[%s7] sm:$0x1]
      %v1071 = vld [vmem:[%s8] sm:$0x1]
      %v1072 = vsel %vm440, %v1069, 0.0
      %1073 = vadd.xlane.f32.xlu0 %v1072
      %v1074 = vpop.xlane.xlu0 %1073
      %v1075 = vmul.f32 %v1074, %v444
      %v1076 = vsub.f32 %v1069, %v1075
      %v1077 = vmul.f32 %v1076, %v1076
      %v1078 = vsel %vm440, %v1077, 0.0
      %1079 = vadd.xlane.f32.xlu0 %v1078
      %v1080 = vpop.xlane.xlu0 %1079
      %v1081 = vmul.f32 %v1080, %v444
      %v1082 = vadd.f32 %v1081, 1e-05
      %v1083 = vrsqrt.pop %v1082
      %v1084 = vmul.f32 %v1076, %v1083
      %v1086 = vlaneseq
      %v1087 = vshrl.u32 %v1086, 7
      %v1088 = vsub.s32 0, %v1087
      %v1089 = vrot.slane %v1070, %v1088
      %v1091 = vmul.f32 %v1084, %v1089
      %v1093 = vlaneseq
      %v1094 = vshrl.u32 %v1093, 7
      %v1095 = vsub.s32 0, %v1094
      %v1096 = vrot.slane %v1071, %v1095
      %v1098 = vadd.f32 %v1091, %v1096
      %v1099 = vpack.c.bf16 %v1098, %v1098
      %v1100 = vld [vmem:[%s9] sm:$0xf]
      %v1101 = vld [vmem:[%s9 + $0x4] sm:$0xf]
      %v1102 = vld [vmem:[%s9 + $0x8] sm:$0xf]
      %v1103 = vld [vmem:[%s9 + $0xc] sm:$0xf]
      %v1104 = vld [vmem:[%s10] sm:$0x1]
      %v1106 = vlaneseq
      %v1107 = vshrl.u32 %v1106, 7
      %v1108 = vsub.s32 0, %v1107
      %v1109 = vrot.slane %v1104, %v1108
      %v1115 = vunpack.c.l.b16 %v1100
      %v1116 = vunpack.c.l.b16 %v1101
      %v1117 = vunpack.c.l.b16 %v1102
      %v1118 = vunpack.c.l.b16 %v1103
      %v1119 = vpack.c.b16 %v1116, %v1115
      %v1120 = vpack.c.b16 %v1118, %v1117
      %v1124 = vsel %vm493, %v1099, 0
      %1126 = vmatprep.subr.bf16.mxu0 0
      %1127 = vmatpush1.bf16.msra.mxu0 %v1119
      %1128 = vmatprep.subr.bf16.mxu0 0
      %1129 = vmatpush1.bf16.msra.mxu0 %v1120
      %1130 = vmatprep.subr.bf16.mxu0 0
      %1131 = vmatpush1.bf16.msra.mxu0 0
      %1132 = vmatprep.subr.bf16.mxu0 0
      %1133 = vmatpush1.bf16.msra.mxu0 0
      %1134 = vmatprep.subr.bf16.mxu0 0
      %1135 = vmatpush1.bf16.msra.mxu0 0
      %1136 = vmatprep.subr.bf16.mxu0 0
      %1137 = vmatpush1.bf16.msra.mxu0 0
      %1138 = vmatprep.subr.bf16.mxu0 0
      %1139 = vmatpush1.bf16.msra.mxu0 0
      %1140 = vmatprep.subr.bf16.mxu0 0
      %1141 = vmatpush1.bf16.msra.mxu0 0
      %1142 = vmatprep.subr.bf16.mxu0 0
      %1143 = vmatpush1.bf16.msra.mxu0 0
      %1144 = vmatprep.subr.bf16.mxu0 0
      %1145 = vmatpush1.bf16.msra.mxu0 0
      %1146 = vmatprep.subr.bf16.mxu0 0
      %1147 = vmatpush1.bf16.msra.mxu0 0
      %1148 = vmatprep.subr.bf16.mxu0 0
      %1149 = vmatpush1.bf16.msra.mxu0 0
      %1150 = vmatprep.subr.bf16.mxu0 0
      %1151 = vmatpush1.bf16.msra.mxu0 0
      %1152 = vmatprep.subr.bf16.mxu0 0
      %1153 = vmatpush1.bf16.msra.mxu0 0
      %1154 = vmatprep.subr.bf16.mxu0 0
      %1155 = vmatpush1.bf16.msra.mxu0 0
      %1156 = vmatprep.subr.bf16.mxu0 0
      %1157 = vmatpush1.bf16.msra.mxu0 0
      %1158 = vmatprep.mubr.bf16.mxu0 0
      %1159 = vmatmul.mubr.bf16.gmra.mrb[0].mxu0 %v1124
      %v1160 = vpop.f32.mrb[0].mxu0
      %v1161 = vadd.f32 %v1109, %v1160
      %v1162 = vpop.f32.mrb[0].mxu0
      %v1163 = vpop.f32.mrb[0].mxu0
      %v1164 = vpop.f32.mrb[0].mxu0
      %1165 = vdwg.mxu0
      %v1166 = vmul.f32 %v1161, 1.702
      %v1167 = vxor.u32 %v1166, 2147483648
      %v1168 = vmul.f32 %v1167, 1.442695
      %v1169 = vpow.pop %v1168
      %v1170 = vadd.f32 %v1169, 1.0
      %v1171 = vrcp.pop %v1170
      %v1172 = vmul.f32 1.0, %v1171
      %v1173 = vmul.f32 %v1161, %v1172
      %v1174 = vpack.c.bf16 %v1173, %v1173
      %v1175 = vld [vmem:[%s11] sm:$0xf]
      %v1176 = vld [vmem:[%s11 + $0x4] sm:$0xf]
      %v1177 = vld [vmem:[%s11 + $0x8] sm:$0xf]
      %v1178 = vld [vmem:[%s11 + $0xc] sm:$0xf]
      %v1179 = vld [vmem:[%s11 + $0x10] sm:$0xf]
      %v1180 = vld [vmem:[%s11 + $0x14] sm:$0xf]
      %v1181 = vld [vmem:[%s11 + $0x18] sm:$0xf]
      %v1182 = vld [vmem:[%s11 + $0x1c] sm:$0xf]
      %v1183 = vld [vmem:[%s11 + $0x20] sm:$0xf]
      %v1184 = vld [vmem:[%s11 + $0x24] sm:$0xf]
      %v1185 = vld [vmem:[%s11 + $0x28] sm:$0xf]
      %v1186 = vld [vmem:[%s11 + $0x2c] sm:$0xf]
      %v1187 = vld [vmem:[%s11 + $0x30] sm:$0xf]
      %v1188 = vld [vmem:[%s11 + $0x34] sm:$0xf]
      %v1189 = vld [vmem:[%s11 + $0x38] sm:$0xf]
      %v1190 = vld [vmem:[%s11 + $0x3c] sm:$0xf]
      %v1191 = vld [vmem:[%s12] sm:$0x1]
      %v1193 = vlaneseq
      %v1194 = vshrl.u32 %v1193, 7
      %v1195 = vsub.s32 0, %v1194
      %v1196 = vrot.slane %v1191, %v1195
      %v1214 = vunpack.c.l.b16 %v1175
      %v1215 = vunpack.c.l.b16 %v1176
      %v1216 = vunpack.c.l.b16 %v1177
      %v1217 = vunpack.c.l.b16 %v1178
      %v1218 = vunpack.c.l.b16 %v1179
      %v1219 = vunpack.c.l.b16 %v1180
      %v1220 = vunpack.c.l.b16 %v1181
      %v1221 = vunpack.c.l.b16 %v1182
      %v1222 = vunpack.c.l.b16 %v1183
      %v1223 = vunpack.c.l.b16 %v1184
      %v1224 = vunpack.c.l.b16 %v1185
      %v1225 = vunpack.c.l.b16 %v1186
      %v1226 = vunpack.c.l.b16 %v1187
      %v1227 = vunpack.c.l.b16 %v1188
      %v1228 = vunpack.c.l.b16 %v1189
      %v1229 = vunpack.c.l.b16 %v1190
      %v1230 = vpack.c.b16 %v1215, %v1214
      %v1231 = vpack.c.b16 %v1217, %v1216
      %v1232 = vpack.c.b16 %v1219, %v1218
      %v1233 = vpack.c.b16 %v1221, %v1220
      %v1234 = vpack.c.b16 %v1223, %v1222
      %v1235 = vpack.c.b16 %v1225, %v1224
      %v1236 = vpack.c.b16 %v1227, %v1226
      %v1237 = vpack.c.b16 %v1229, %v1228
      %1246 = vmatprep.subr.bf16.mxu0 0
      %1247 = vmatpush1.bf16.msra.mxu0 %v1230
      %1248 = vmatprep.subr.bf16.mxu0 0
      %1249 = vmatpush1.bf16.msra.mxu0 %v1231
      %1250 = vmatprep.subr.bf16.mxu0 0
      %1251 = vmatpush1.bf16.msra.mxu0 %v1232
      %1252 = vmatprep.subr.bf16.mxu0 0
      %1253 = vmatpush1.bf16.msra.mxu0 %v1233
      %1254 = vmatprep.subr.bf16.mxu0 0
      %1255 = vmatpush1.bf16.msra.mxu0 %v1234
      %1256 = vmatprep.subr.bf16.mxu0 0
      %1257 = vmatpush1.bf16.msra.mxu0 %v1235
      %1258 = vmatprep.subr.bf16.mxu0 0
      %1259 = vmatpush1.bf16.msra.mxu0 %v1236
      %1260 = vmatprep.subr.bf16.mxu0 0
      %1261 = vmatpush1.bf16.msra.mxu0 %v1237
      %1262 = vmatprep.subr.bf16.mxu0 0
      %1263 = vmatpush1.bf16.msra.mxu0 0
      %1264 = vmatprep.subr.bf16.mxu0 0
      %1265 = vmatpush1.bf16.msra.mxu0 0
      %1266 = vmatprep.subr.bf16.mxu0 0
      %1267 = vmatpush1.bf16.msra.mxu0 0
      %1268 = vmatprep.subr.bf16.mxu0 0
      %1269 = vmatpush1.bf16.msra.mxu0 0
      %1270 = vmatprep.subr.bf16.mxu0 0
      %1271 = vmatpush1.bf16.msra.mxu0 0
      %1272 = vmatprep.subr.bf16.mxu0 0
      %1273 = vmatpush1.bf16.msra.mxu0 0
      %1274 = vmatprep.subr.bf16.mxu0 0
      %1275 = vmatpush1.bf16.msra.mxu0 0
      %1276 = vmatprep.subr.bf16.mxu0 0
      %1277 = vmatpush1.bf16.msra.mxu0 0
      %1278 = vmatprep.mubr.bf16.mxu0 0
      %1279 = vmatmul.mubr.bf16.gmra.mrb[0].mxu0 %v1174
      %v1280 = vpop.f32.mrb[0].mxu0
      %v1281 = vadd.f32 %v1196, %v1280
      %v1282 = vpop.f32.mrb[0].mxu0
      %v1283 = vpop.f32.mrb[0].mxu0
      %v1284 = vpop.f32.mrb[0].mxu0
      %1285 = vdwg.mxu0
      %v1286 = vadd.f32 %v1069, %v1281
      %1287 = vst.msk [vmem:[%s435] sm:$0x7f] %vm440, %v1286
      %p1288 = scmp.lt.s32.totalorder %s24, 1
      %s1289 = scalar_select %p1288, %s24, 1
      %s1290 = smul.addr %s1289, 8
      %s1291 = scalar_lea.vmem %s13, %s1290
      // Predicated region
      $region73: #{deep_prompt_clip_forward.8} parent=71 // pred_check
        %p1292 = pneg %p320
      $region74: #{deep_prompt_clip_forward.8} parent=71 // pred_check_branch
        %1294 = sbr.rel (%p1292) target = $region76
      $region75: #{deep_prompt_clip_forward.8} parent=71 // pred_region
        _
      $region76: #{deep_prompt_clip_forward.8} parent=71 // pred_fallthru
        _
    $region72: #{deep_prompt_clip_forward.8} parent=5 // pred_fallthru
      _
    %p1295 = scmp.le.s32.totalorder 2, %s19
    // Predicated region
    $region77: #{deep_prompt_clip_forward.8} parent=5 // pred_check
      %p1296 = pneg %p1295
    $region78: #{deep_prompt_clip_forward.8} parent=5 // pred_check_branch
      %1298 = sbr.rel (%p1296) target = $region80
    $region79: #{deep_prompt_clip_forward.8} parent=5 // pred_region
      %s1299 = ssub.s32 %s19, 2
      // Predicated region
      $region81: #{deep_prompt_clip_forward.8} parent=79 // pred_check
        %p1300 = pneg %p326
      $region82: #{deep_prompt_clip_forward.8} parent=79 // pred_check_branch
        %1302 = sbr.rel (%p1300) target = $region84
      $region83: #{deep_prompt_clip_forward.8} parent=79 // pred_region
        %p1303 = scmp.lt.s32.totalorder %s25, 1
        %s1304 = scalar_select %p1303, %s25, 1
        %s1305 = smul.addr %s1304, 8
        %s1306 = scalar_lea.vmem %s13, %s1305
      $region84: #{deep_prompt_clip_forward.8} parent=79 // pred_fallthru
        _
    $region80: #{deep_prompt_clip_forward.8} parent=5 // pred_fallthru
      _
  $region6: #{deep_prompt_clip_forward.8} parent=0 // loop_footer
    %s23 = sadd.s32 1, %s19
  $region7: #{deep_prompt_clip_forward.8} parent=0 // loop_footer_branch
    %18 = sbr.rel target = $region3
  $region8: #{deep_prompt_clip_forward.8} parent=0 // loop_exit
    _

</llo_original>
